<compile_context>
chip_gen: v5e
topology: v5e:2x2
jax: 0.10.0
libtpu: 0.0.40
codegen_flags: <defaults>
</compile_context>

<pallas_src>
import functools
import math

import jax
import jax.numpy as jnp
from jax import lax
from jax.experimental import pallas as pl
from jax.experimental.pallas import tpu as pltpu


def _round_up(x, m):
    return ((x + m - 1) // m) * m


# ----------------------------- GRU layer kernel -----------------------------
# Gate order / formulas follow PyTorch nn.GRU:
#   r = sigmoid(gi_r + gh_r); z = sigmoid(gi_z + gh_z)
#   n = tanh(gi_n + r * (gh_n + bhh_n));  h' = (1-z)*n + z*h
# (bih for all gates and bhh_r, bhh_z are pre-folded into the gi bias.)
def _gru_layer_kernel(*refs, seq_len, time_block, fuse_fc):
    if fuse_fc:
        (x_ref, wih_ref, whh_ref, bih_ref, bhhn_ref, fcw_ref, fcb_ref,
         out_ref, h_ref, gi_ref) = refs
    else:
        (x_ref, wih_ref, whh_ref, bih_ref, bhhn_ref,
         out_ref, h_ref, gi_ref) = refs

    tb = pl.program_id(1)                # time-block index (sequential axis)
    n_tb = pl.num_programs(1)

    @pl.when(tb == 0)
    def _():
        h_ref[...] = jnp.zeros_like(h_ref)          # h0 = zeros (GRUModel.forward)

    Tc, Bc, D = x_ref.shape
    Hp = whh_ref.shape[0]

    # (1) Hoisted input-side projection for the whole time block: one fused
    #     [r|z|n] matmul, bf16 operands, f32 accumulate, biases folded in.
    x_flat = x_ref[...].reshape(Tc * Bc, D).astype(jnp.bfloat16)
    gi_blk = (
        jnp.dot(x_flat, wih_ref[...], preferred_element_type=jnp.float32)
        + bih_ref[...]
    )
    gi_ref[...] = gi_blk.reshape(Tc, Bc, 3 * Hp)

    whh = whh_ref[...]                                          # bf16 (Hp, 3Hp)
    bhh_n = jnp.broadcast_to(bhhn_ref[...], (Bc, Hp))           # f32, hoisted

    # (2) Serial recurrence: a single (Bc, Hp) @ (Hp, 3Hp) bf16 matmul per step.
    def step(t, h):
        gi = gi_ref[t]                                          # (Bc, 3Hp) aligned
        gh = jnp.dot(h.astype(jnp.bfloat16), whh,
                     preferred_element_type=jnp.float32)
        r = jax.nn.sigmoid(gi[:, :Hp] + gh[:, :Hp])
        z = jax.nn.sigmoid(gi[:, Hp:2 * Hp] + gh[:, Hp:2 * Hp])
        n = jnp.tanh(gi[:, 2 * Hp:] + r * (gh[:, 2 * Hp:] + bhh_n))
        h_new = (1.0 - z) * n + z * h
        if not fuse_fc:
            out_ref[t] = h_new.astype(out_ref.dtype)   # hidden seq -> next layer (bf16)
        return h_new

    full_unroll = True if time_block <= 16 else 8
    tail = seq_len % time_block

    if tail == 0:
        # Every block is a full, static-trip, unrolled loop.
        h_ref[...] = lax.fori_loop(0, time_block, step, h_ref[...],
                                   unroll=full_unroll)
    else:
        @pl.when(tb < n_tb - 1)
        def _():
            h_ref[...] = lax.fori_loop(0, time_block, step, h_ref[...],
                                       unroll=full_unroll)

        @pl.when(tb == n_tb - 1)
        def _():
            h_ref[...] = lax.fori_loop(0, tail, step, h_ref[...],
                                       unroll=True if tail <= 16 else 8)

    if fuse_fc:
        # Last layer: only out[:, -1, :] is consumed -> emit just the final hidden
        # state, fused with the fc Linear (no (T,B,H) writeback, no extra launch).
        @pl.when(tb == n_tb - 1)
        def _():
            h_fin = h_ref[...].astype(jnp.bfloat16)
            out_ref[...] = (
                jnp.dot(h_fin, fcw_ref[...], preferred_element_type=jnp.float32)
                + fcb_ref[...]
            )


def _gru_layer(x, wih, whh, bih, bhh_n, *, fc_w=None, fc_b=None,
               time_block, batch_block, hidden_out_dtype=jnp.bfloat16):
    """x: (T, Bp, D); wih: (D, 3Hp) bf16; whh: (Hp, 3Hp) bf16; bih: (1, 3Hp) f32
    (with bhh_r, bhh_z folded in); bhh_n: (1, Hp) f32.

    Returns the hidden sequence (T, Bp, Hp) in bf16, or — if fc_w/fc_b are given
    (last layer) — the fused final Linear output (Bp, Op) in f32."""
    T, Bp, D = x.shape
    Hp = whh.shape[0]
    fuse_fc = fc_w is not None

    n_bb = pl.cdiv(Bp, batch_block)
    n_tb = pl.cdiv(T, time_block)

    kernel = functools.partial(_gru_layer_kernel, seq_len=T,
                               time_block=time_block, fuse_fc=fuse_fc)

    # Time-invariant operands: fully resident in VMEM (no per-step double buffering).
    weight_spec = pl.BlockSpec(memory_space=pltpu.MemorySpace.VMEM)

    in_specs = [
        pl.BlockSpec((time_block, batch_block, D), lambda b, t: (t, b, 0)),
        weight_spec,   # wih  (D, 3Hp)  bf16
        weight_spec,   # whh  (Hp, 3Hp) bf16
        weight_spec,   # bih  (1, 3Hp)  f32 (bhh_r/z folded)
        weight_spec,   # bhh_n (1, Hp)  f32
    ]
    inputs = [x, wih, whh, bih, bhh_n]

    if fuse_fc:
        in_specs += [weight_spec, weight_spec]     # fc_w (Hp, Op) bf16, fc_b (1, Op) f32
        inputs += [fc_w, fc_b]
        Op = fc_w.shape[-1]
        out_shape = jax.ShapeDtypeStruct((Bp, Op), jnp.float32)
        out_specs = pl.BlockSpec((batch_block, Op), lambda b, t: (b, 0))
    else:
        out_shape = jax.ShapeDtypeStruct((T, Bp, Hp), hidden_out_dtype)
        out_specs = pl.BlockSpec((time_block, batch_block, Hp),
                                 lambda b, t: (t, b, 0))

    # ---- explicit VMEM budget: resident weights + scratch + double-buffered blocks
    def _nbytes(a):
        return a.size * a.dtype.itemsize

    est = sum(_nbytes(a) for a in inputs[1:])                       # resident weights
    est += time_block * batch_block * 3 * Hp * 4                    # gi scratch (f32)
    est += batch_block * Hp * 4                                     # h carry (f32)
    est += 2 * time_block * batch_block * D * x.dtype.itemsize      # x double-buffer
    if fuse_fc:
        est += 2 * batch_block * fc_w.shape[-1] * 4
    else:
        est += 2 * time_block * batch_block * Hp * jnp.dtype(hidden_out_dtype).itemsize
    vmem_limit = int(min(max(est + (4 << 20), 16 << 20), 100 << 20))

    return pl.pallas_call(
        kernel,
        out_shape=out_shape,
        grid_spec=pltpu.PrefetchScalarGridSpec(
            num_scalar_prefetch=0,
            grid=(n_bb, n_tb),
            in_specs=in_specs,
            out_specs=out_specs,
            scratch_shapes=[
                pltpu.VMEM((batch_block, Hp), jnp.float32),                   # h carry
                pltpu.VMEM((time_block, batch_block, 3 * Hp), jnp.float32),   # GI block
            ],
        ),
        compiler_params=pltpu.CompilerParams(
            dimension_semantics=("parallel", "arbitrary"),
            vmem_limit_bytes=vmem_limit),
    )(*inputs)


# --------------------------- Parameter preparation ---------------------------
def init_params(key, input_dim, hidden_dim, layer_dim, output_dim):
    """PyTorch-style U(-1/sqrt(H), 1/sqrt(H)) init, per-gate (r, z, n) layout."""
    k = 1.0 / math.sqrt(hidden_dim)
    params = {"gru_layers": []}
    for layer in range(layer_dim):
        d_in = input_dim if layer == 0 else hidden_dim
        key, k1, k2, k3, k4 = jax.random.split(key, 5)
        params["gru_layers"].append({
            "wih": jax.random.uniform(k1, (3, d_in, hidden_dim), jnp.float32, -k, k),
            "whh": jax.random.uniform(k2, (3, hidden_dim, hidden_dim), jnp.float32, -k, k),
            "bih": jax.random.uniform(k3, (3, 1, hidden_dim), jnp.float32, -k, k),
            "bhh": jax.random.uniform(k4, (3, 1, hidden_dim), jnp.float32, -k, k),
        })
    key, k1, k2 = jax.random.split(key, 3)
    params["fc_w"] = jax.random.uniform(k1, (hidden_dim, output_dim), jnp.float32, -k, k)
    params["fc_b"] = jax.random.uniform(k2, (1, output_dim), jnp.float32, -k, k)
    return params


def _fuse_pad_gates(w3, rows_pad, hp):
    """(3, d_in, H) -> (rows_pad, 3*hp) with gate columns ordered [r | z | n]."""
    _, d_in, h = w3.shape
    out = jnp.zeros((rows_pad, 3 * hp), jnp.float32)
    for g in range(3):
        out = out.at[:d_in, g * hp:g * hp + h].set(w3[g])
    return out


def _fuse_pad_bias(b3, hp):
    """(3, 1, H) -> (1, 3*hp)."""
    _, _, h = b3.shape
    out = jnp.zeros((1, 3 * hp), jnp.float32)
    for g in range(3):
        out = out.at[:, g * hp:g * hp + h].set(b3[g])
    return out


def prepare_kernel_params(params):
    """Fuse per-gate weights into lane-concatenated [r|z|n] blocks, pad the hidden
    dim to a multiple of 128, cast MXU operands to bf16, fold bhh_r / bhh_z into
    the input-side bias, and pad the fc output dim to 128 lanes.
    Zero padding is exact: padded rows/columns contribute nothing to real outputs."""
    H = params["gru_layers"][0]["whh"].shape[-1]
    Hp = _round_up(H, 128)
    layers = []
    for i, layer in enumerate(params["gru_layers"]):
        d_in = layer["wih"].shape[1]
        rows = d_in if i == 0 else Hp        # layers >= 1 consume the padded hidden
        bih = _fuse_pad_bias(layer["bih"], Hp)
        bhh = _fuse_pad_bias(layer["bhh"], Hp)
        layers.append({
            "wih": _fuse_pad_gates(layer["wih"], rows, Hp).astype(jnp.bfloat16),
            "whh": _fuse_pad_gates(layer["whh"], Hp, Hp).astype(jnp.bfloat16),
            # bih for all gates + bhh_r, bhh_z folded (only bhh_n must stay separate)
            "bih": bih.at[:, :2 * Hp].add(bhh[:, :2 * Hp]),
            "bhh_n": bhh[:, 2 * Hp:],
        })
    O = params["fc_w"].shape[-1]
    Op = _round_up(O, 128)                   # lane-dense fc output (unmasked stores)
    fc_w = (jnp.zeros((Hp, Op), jnp.float32)
            .at[:H, :O].set(params["fc_w"]).astype(jnp.bfloat16))
    fc_b = jnp.zeros((1, Op), jnp.float32).at[:, :O].set(params["fc_b"])
    return {"layers": layers, "fc_w": fc_w, "fc_b": fc_b}


# ------------------------------ Model wrapper -------------------------------
def _choose_blocks(B, T, Hp):
    """VMEM-budget-aware tiling: >=2 batch blocks for megacore when Bp >= 16,
    batch_block capped at 128, gi scratch kept within ~16 MiB, and a time_block
    that divides T preferred (so every block takes the fully-unrolled path)."""
    Bp = _round_up(B, 8)
    if Bp >= 16:
        batch_block = min(128, _round_up(-(-Bp // 2), 8))   # guarantees >= 2 blocks
    else:
        batch_block = Bp
    gi_budget = 16 << 20                                     # gi scratch cap (bytes)
    max_tb = max(1, gi_budget // (batch_block * 3 * Hp * 4))
    time_block = max(1, min(T, 64, max_tb))
    for cand in range(time_block, max(0, time_block // 2), -1):
        if T % cand == 0:
            time_block = cand
            break
    return Bp, batch_block, time_block


@functools.partial(jax.jit, static_argnames=("out_dim",))
def gru_model_forward(x, kparams, out_dim):
    """x: (B, T, input_dim) -> (B, out_dim), like GRUModel.forward (inference)."""
    B, T, _ = x.shape
    layers = kparams["layers"]
    Hp = layers[0]["whh"].shape[0]

    Bp, batch_block, time_block = _choose_blocks(B, T, Hp)

    x_t = jnp.transpose(x, (1, 0, 2)).astype(jnp.float32)   # (T, B, D) time-major
    x_t = jnp.pad(x_t, ((0, 0), (0, Bp - B), (0, 0)))       # (T, Bp, D)

    h_seq = x_t
    n_layers = len(layers)
    logits = None
    for i, lp in enumerate(layers):
        if i < n_layers - 1:
            # Intermediate layers emit bf16 hidden sequences (halves HBM traffic).
            h_seq = _gru_layer(h_seq, lp["wih"], lp["whh"], lp["bih"], lp["bhh_n"],
                               time_block=time_block, batch_block=batch_block)
        else:   # last layer: emit only final hidden state, fused with fc Linear
            logits = _gru_layer(h_seq, lp["wih"], lp["whh"], lp["bih"], lp["bhh_n"],
                                fc_w=kparams["fc_w"], fc_b=kparams["fc_b"],
                                time_block=time_block, batch_block=batch_block)
    return logits[:B, :out_dim]


# --------------------------- Pure-JAX reference ------------------------------
def gru_model_reference(x, params):
    x_t = jnp.transpose(x, (1, 0, 2)).astype(jnp.float32)
    h_seq = x_t
    for layer in params["gru_layers"]:
        wih, whh, bih, bhh = layer["wih"], layer["whh"], layer["bih"], layer["bhh"]
        B = h_seq.shape[1]
        H = wih.shape[-1]

        def step(h, x):
            gi = jnp.einsum("bd,kdh->kbh", x, wih) + bih
            gh = jnp.einsum("bh,khj->kbj", h, whh) + bhh
            r = jax.nn.sigmoid(gi[0] + gh[0])
            z = jax.nn.sigmoid(gi[1] + gh[1])
            n = jnp.tanh(gi[2] + r * gh[2])
            h_new = (1.0 - z) * n + z * h
            return h_new, h_new

        _, h_seq = jax.lax.scan(step, jnp.zeros((B, H), jnp.float32), h_seq)
    return h_seq[-1] @ params["fc_w"] + params["fc_b"]


if __name__ == "__main__":
    # Small shapes consistent with GRUModel.forward: x is (batch, seq_len, input_dim)
    B, T, input_dim = 2, 8, 4
    hidden_dim, layer_dim, output_dim = 32, 2, 3

    key = jax.random.PRNGKey(0)
    key, kx = jax.random.split(key)
    x = jax.random.normal(kx, (B, T, input_dim), dtype=jnp.float32)

    params = init_params(key, input_dim, hidden_dim, layer_dim, output_dim)
    kparams = prepare_kernel_params(params)

    out = jax.block_until_ready(gru_model_forward(x, kparams, out_dim=output_dim))
    ref = gru_model_reference(x, params)

    assert out.shape == (B, output_dim), out.shape
    # Tolerance loosened vs the f32 reference because MXU operands are bf16.
    assert jnp.allclose(out, ref, rtol=5e-2, atol=5e-2), (out, ref)

    print("KERNEL_OK")
</pallas_src>

<mosaic_0001>
module attributes {stable_mosaic.version = 11 : i64} {
  func.func @_gru_layer_kernel(%arg0: i32, %arg1: i32, %arg2: memref<8x8x128xbf16, #tpu.memory_space<vmem>>, %arg3: memref<128x384xbf16, #tpu.memory_space<vmem>>, %arg4: memref<128x384xbf16, #tpu.memory_space<vmem>>, %arg5: memref<1x384xf32, #tpu.memory_space<vmem>>, %arg6: memref<1x128xf32, #tpu.memory_space<vmem>>, %arg7: memref<128x128xbf16, #tpu.memory_space<vmem>>, %arg8: memref<1x128xf32, #tpu.memory_space<vmem>>, %arg9: memref<8x128xf32, #tpu.memory_space<vmem>>, %arg10: memref<8x128xf32, #tpu.memory_space<vmem>>, %arg11: memref<8x8x384xf32, #tpu.memory_space<vmem>>) attributes {dimension_semantics = [#tpu.dimension_semantics<parallel>, #tpu.dimension_semantics<arbitrary>], iteration_bounds = array<i64: 1, 1>, scalar_prefetch = 0 : i64, scratch_operands = 2 : i64, tpu.core_type = #tpu.core_type<tc>, window_params = [{transform_indices = @transform_0, window_bounds = array<i64: 8, 8, 128>}, {pipeline_mode = #tpu.pipeline_mode<synchronous>, transform_indices = @transform_1, window_bounds = array<i64: 128, 384>}, {pipeline_mode = #tpu.pipeline_mode<synchronous>, transform_indices = @transform_2, window_bounds = array<i64: 128, 384>}, {pipeline_mode = #tpu.pipeline_mode<synchronous>, transform_indices = @transform_3, window_bounds = array<i64: 1, 384>}, {pipeline_mode = #tpu.pipeline_mode<synchronous>, transform_indices = @transform_4, window_bounds = array<i64: 1, 128>}, {pipeline_mode = #tpu.pipeline_mode<synchronous>, transform_indices = @transform_5, window_bounds = array<i64: 128, 128>}, {pipeline_mode = #tpu.pipeline_mode<synchronous>, transform_indices = @transform_6, window_bounds = array<i64: 1, 128>}, {transform_indices = @transform_7, window_bounds = array<i64: 8, 128>}]} {
    %c0_i32 = arith.constant 0 : i32
    %0 = arith.cmpi eq, %arg1, %c0_i32 : i32
    %1 = arith.extui %0 : i1 to i32
    %c0_i32_0 = arith.constant 0 : i32
    %2 = arith.cmpi ne, %1, %c0_i32_0 : i32
    scf.if %2 {
      %cst_69 = arith.constant 0.000000e+00 : f32
      %277 = vector.broadcast %cst_69 : f32 to vector<8x128xf32>
      %c0_70 = arith.constant 0 : index
      %c0_71 = arith.constant 0 : index
      %278 = vector.load %arg10[%c0_70, %c0_71] : memref<8x128xf32, #tpu.memory_space<vmem>>, vector<8x128xf32>
      tpu.vector_store %arg10[%c0_70, %c0_71], %277 {strides = array<i32>} : memref<8x128xf32, #tpu.memory_space<vmem>>, vector<8x128xf32>,
    } else {
    }
    %c0 = arith.constant 0 : index
    %c0_1 = arith.constant 0 : index
    %c0_2 = arith.constant 0 : index
    %3 = vector.load %arg2[%c0, %c0_1, %c0_2] : memref<8x8x128xbf16, #tpu.memory_space<vmem>>, vector<8x8x128xbf16>
    %4 = vector.shape_cast %3 : vector<8x8x128xbf16> to vector<64x128xbf16>
    %c0_3 = arith.constant 0 : index
    %c0_4 = arith.constant 0 : index
    %5 = vector.load %arg3[%c0_3, %c0_4] : memref<128x384xbf16, #tpu.memory_space<vmem>>, vector<128x384xbf16>
    %cst = arith.constant dense<0.000000e+00> : vector<64x384xf32>
    %6 = tpu.matmul %4, %5, %cst {dimension_numbers = #tpu.dot_dimension_numbers<[1], [0], [0], [1], [0, 0, 1, 1], [], []>} : vector<64x128xbf16>, vector<128x384xbf16>, vector<64x384xf32> -> vector<64x384xf32>
    %c0_5 = arith.constant 0 : index
    %c0_6 = arith.constant 0 : index
    %7 = vector.load %arg5[%c0_5, %c0_6] : memref<1x384xf32, #tpu.memory_space<vmem>>, vector<1x384xf32>
    %8 = vector.broadcast %7 : vector<1x384xf32> to vector<64x384xf32>
    %9 = arith.addf %6, %8 : vector<64x384xf32>
    %10 = vector.shape_cast %9 : vector<64x384xf32> to vector<8x8x384xf32>
    %c0_7 = arith.constant 0 : index
    %c0_8 = arith.constant 0 : index
    %c0_9 = arith.constant 0 : index
    %11 = vector.load %arg11[%c0_7, %c0_8, %c0_9] : memref<8x8x384xf32, #tpu.memory_space<vmem>>, vector<8x8x384xf32>
    tpu.vector_store %arg11[%c0_7, %c0_8, %c0_9], %10 {strides = array<i32>} : memref<8x8x384xf32, #tpu.memory_space<vmem>>, vector<8x8x384xf32>,
    %c0_10 = arith.constant 0 : index
    %c0_11 = arith.constant 0 : index
    %12 = vector.load %arg4[%c0_10, %c0_11] : memref<128x384xbf16, #tpu.memory_space<vmem>>, vector<128x384xbf16>
    %c0_12 = arith.constant 0 : index
    %c0_13 = arith.constant 0 : index
    %13 = vector.load %arg6[%c0_12, %c0_13] : memref<1x128xf32, #tpu.memory_space<vmem>>, vector<1x128xf32>
    %14 = vector.shape_cast %13 : vector<1x128xf32> to vector<1x128xf32>
    %15 = vector.broadcast %14 : vector<1x128xf32> to vector<8x128xf32>
    %c0_14 = arith.constant 0 : index
    %c0_15 = arith.constant 0 : index
    %16 = vector.load %arg10[%c0_14, %c0_15] : memref<8x128xf32, #tpu.memory_space<vmem>>, vector<8x128xf32>
    %c0_i32_16 = arith.constant 0 : i32
    %17 = arith.index_cast %c0_i32_16 : i32 to index
    %c0_17 = arith.constant 0 : index
    %c0_18 = arith.constant 0 : index
    %18 = vector.load %arg11[%17, %c0_17, %c0_18] : memref<8x8x384xf32, #tpu.memory_space<vmem>>, vector<1x8x384xf32>
    %19 = vector.shape_cast %18 : vector<1x8x384xf32> to vector<8x384xf32>
    %20 = arith.truncf %16 : vector<8x128xf32> to vector<8x128xbf16>
    %cst_19 = arith.constant dense<0.000000e+00> : vector<8x384xf32>
    %21 = tpu.matmul %20, %12, %cst_19 {dimension_numbers = #tpu.dot_dimension_numbers<[1], [0], [0], [1], [0, 0, 1, 1], [], []>} : vector<8x128xbf16>, vector<128x384xbf16>, vector<8x384xf32> -> vector<8x384xf32>
    %22 = vector.extract_strided_slice %19 {offsets = [0, 0], sizes = [8, 128], strides = [1, 1]} : vector<8x384xf32> to vector<8x128xf32>
    %23 = vector.extract_strided_slice %21 {offsets = [0, 0], sizes = [8, 128], strides = [1, 1]} : vector<8x384xf32> to vector<8x128xf32>
    %24 = arith.addf %22, %23 : vector<8x128xf32>
    %25 = arith.negf %24 : vector<8x128xf32>
    %26 = math.exp %25 : vector<8x128xf32>
    %cst_20 = arith.constant 1.000000e+00 : f32
    %27 = vector.broadcast %cst_20 : f32 to vector<8x128xf32>
    %28 = arith.addf %27, %26 : vector<8x128xf32>
    %29 = arith.divf %27, %28 : vector<8x128xf32>
    %30 = vector.extract_strided_slice %19 {offsets = [0, 128], sizes = [8, 128], strides = [1, 1]} : vector<8x384xf32> to vector<8x128xf32>
    %31 = vector.extract_strided_slice %21 {offsets = [0, 128], sizes = [8, 128], strides = [1, 1]} : vector<8x384xf32> to vector<8x128xf32>
    %32 = arith.addf %30, %31 : vector<8x128xf32>
    %33 = arith.negf %32 : vector<8x128xf32>
    %34 = math.exp %33 : vector<8x128xf32>
    %cst_21 = arith.constant 1.000000e+00 : f32
    %35 = vector.broadcast %cst_21 : f32 to vector<8x128xf32>
    %36 = arith.addf %35, %34 : vector<8x128xf32>
    %37 = arith.divf %35, %36 : vector<8x128xf32>
    %38 = vector.extract_strided_slice %19 {offsets = [0, 256], sizes = [8, 128], strides = [1, 1]} : vector<8x384xf32> to vector<8x128xf32>
    %39 = vector.extract_strided_slice %21 {offsets = [0, 256], sizes = [8, 128], strides = [1, 1]} : vector<8x384xf32> to vector<8x128xf32>
    %40 = arith.addf %39, %15 : vector<8x128xf32>
    %41 = arith.mulf %29, %40 : vector<8x128xf32>
    %42 = arith.addf %38, %41 : vector<8x128xf32>
    %43 = math.tanh %42 : vector<8x128xf32>
    %cst_22 = arith.constant 1.000000e+00 : f32
    %44 = vector.broadcast %cst_22 : f32 to vector<8x128xf32>
    %45 = arith.subf %44, %37 : vector<8x128xf32>
    %46 = arith.mulf %45, %43 : vector<8x128xf32>
    %47 = arith.mulf %37, %16 : vector<8x128xf32>
    %48 = arith.addf %46, %47 : vector<8x128xf32>
    %c1_i32 = arith.constant 1 : i32
    %49 = arith.index_cast %c1_i32 : i32 to index
    %c0_23 = arith.constant 0 : index
    %c0_24 = arith.constant 0 : index
    %50 = vector.load %arg11[%49, %c0_23, %c0_24] : memref<8x8x384xf32, #tpu.memory_space<vmem>>, vector<1x8x384xf32>
    %51 = vector.shape_cast %50 : vector<1x8x384xf32> to vector<8x384xf32>
    %52 = arith.truncf %48 : vector<8x128xf32> to vector<8x128xbf16>
    %cst_25 = arith.constant dense<0.000000e+00> : vector<8x384xf32>
    %53 = tpu.matmul %52, %12, %cst_25 {dimension_numbers = #tpu.dot_dimension_numbers<[1], [0], [0], [1], [0, 0, 1, 1], [], []>} : vector<8x128xbf16>, vector<128x384xbf16>, vector<8x384xf32> -> vector<8x384xf32>
    %54 = vector.extract_strided_slice %51 {offsets = [0, 0], sizes = [8, 128], strides = [1, 1]} : vector<8x384xf32> to vector<8x128xf32>
    %55 = vector.extract_strided_slice %53 {offsets = [0, 0], sizes = [8, 128], strides = [1, 1]} : vector<8x384xf32> to vector<8x128xf32>
    %56 = arith.addf %54, %55 : vector<8x128xf32>
    %57 = arith.negf %56 : vector<8x128xf32>
    %58 = math.exp %57 : vector<8x128xf32>
    %cst_26 = arith.constant 1.000000e+00 : f32
    %59 = vector.broadcast %cst_26 : f32 to vector<8x128xf32>
    %60 = arith.addf %59, %58 : vector<8x128xf32>
    %61 = arith.divf %59, %60 : vector<8x128xf32>
    %62 = vector.extract_strided_slice %51 {offsets = [0, 128], sizes = [8, 128], strides = [1, 1]} : vector<8x384xf32> to vector<8x128xf32>
    %63 = vector.extract_strided_slice %53 {offsets = [0, 128], sizes = [8, 128], strides = [1, 1]} : vector<8x384xf32> to vector<8x128xf32>
    %64 = arith.addf %62, %63 : vector<8x128xf32>
    %65 = arith.negf %64 : vector<8x128xf32>
    %66 = math.exp %65 : vector<8x128xf32>
    %cst_27 = arith.constant 1.000000e+00 : f32
    %67 = vector.broadcast %cst_27 : f32 to vector<8x128xf32>
    %68 = arith.addf %67, %66 : vector<8x128xf32>
    %69 = arith.divf %67, %68 : vector<8x128xf32>
    %70 = vector.extract_strided_slice %51 {offsets = [0, 256], sizes = [8, 128], strides = [1, 1]} : vector<8x384xf32> to vector<8x128xf32>
    %71 = vector.extract_strided_slice %53 {offsets = [0, 256], sizes = [8, 128], strides = [1, 1]} : vector<8x384xf32> to vector<8x128xf32>
    %72 = arith.addf %71, %15 : vector<8x128xf32>
    %73 = arith.mulf %61, %72 : vector<8x128xf32>
    %74 = arith.addf %70, %73 : vector<8x128xf32>
    %75 = math.tanh %74 : vector<8x128xf32>
    %cst_28 = arith.constant 1.000000e+00 : f32
    %76 = vector.broadcast %cst_28 : f32 to vector<8x128xf32>
    %77 = arith.subf %76, %69 : vector<8x128xf32>
    %78 = arith.mulf %77, %75 : vector<8x128xf32>
    %79 = arith.mulf %69, %48 : vector<8x128xf32>
    %80 = arith.addf %78, %79 : vector<8x128xf32>
    %c2_i32 = arith.constant 2 : i32
    %81 = arith.index_cast %c2_i32 : i32 to index
    %c0_29 = arith.constant 0 : index
    %c0_30 = arith.constant 0 : index
    %82 = vector.load %arg11[%81, %c0_29, %c0_30] : memref<8x8x384xf32, #tpu.memory_space<vmem>>, vector<1x8x384xf32>
    %83 = vector.shape_cast %82 : vector<1x8x384xf32> to vector<8x384xf32>
    %84 = arith.truncf %80 : vector<8x128xf32> to vector<8x128xbf16>
    %cst_31 = arith.constant dense<0.000000e+00> : vector<8x384xf32>
    %85 = tpu.matmul %84, %12, %cst_31 {dimension_numbers = #tpu.dot_dimension_numbers<[1], [0], [0], [1], [0, 0, 1, 1], [], []>} : vector<8x128xbf16>, vector<128x384xbf16>, vector<8x384xf32> -> vector<8x384xf32>
    %86 = vector.extract_strided_slice %83 {offsets = [0, 0], sizes = [8, 128], strides = [1, 1]} : vector<8x384xf32> to vector<8x128xf32>
    %87 = vector.extract_strided_slice %85 {offsets = [0, 0], sizes = [8, 128], strides = [1, 1]} : vector<8x384xf32> to vector<8x128xf32>
    %88 = arith.addf %86, %87 : vector<8x128xf32>
    %89 = arith.negf %88 : vector<8x128xf32>
    %90 = math.exp %89 : vector<8x128xf32>
    %cst_32 = arith.constant 1.000000e+00 : f32
    %91 = vector.broadcast %cst_32 : f32 to vector<8x128xf32>
    %92 = arith.addf %91, %90 : vector<8x128xf32>
    %93 = arith.divf %91, %92 : vector<8x128xf32>
    %94 = vector.extract_strided_slice %83 {offsets = [0, 128], sizes = [8, 128], strides = [1, 1]} : vector<8x384xf32> to vector<8x128xf32>
    %95 = vector.extract_strided_slice %85 {offsets = [0, 128], sizes = [8, 128], strides = [1, 1]} : vector<8x384xf32> to vector<8x128xf32>
    %96 = arith.addf %94, %95 : vector<8x128xf32>
    %97 = arith.negf %96 : vector<8x128xf32>
    %98 = math.exp %97 : vector<8x128xf32>
    %cst_33 = arith.constant 1.000000e+00 : f32
    %99 = vector.broadcast %cst_33 : f32 to vector<8x128xf32>
    %100 = arith.addf %99, %98 : vector<8x128xf32>
    %101 = arith.divf %99, %100 : vector<8x128xf32>
    %102 = vector.extract_strided_slice %83 {offsets = [0, 256], sizes = [8, 128], strides = [1, 1]} : vector<8x384xf32> to vector<8x128xf32>
    %103 = vector.extract_strided_slice %85 {offsets = [0, 256], sizes = [8, 128], strides = [1, 1]} : vector<8x384xf32> to vector<8x128xf32>
    %104 = arith.addf %103, %15 : vector<8x128xf32>
    %105 = arith.mulf %93, %104 : vector<8x128xf32>
    %106 = arith.addf %102, %105 : vector<8x128xf32>
    %107 = math.tanh %106 : vector<8x128xf32>
    %cst_34 = arith.constant 1.000000e+00 : f32
    %108 = vector.broadcast %cst_34 : f32 to vector<8x128xf32>
    %109 = arith.subf %108, %101 : vector<8x128xf32>
    %110 = arith.mulf %109, %107 : vector<8x128xf32>
    %111 = arith.mulf %101, %80 : vector<8x128xf32>
    %112 = arith.addf %110, %111 : vector<8x128xf32>
    %c3_i32 = arith.constant 3 : i32
    %113 = arith.index_cast %c3_i32 : i32 to index
    %c0_35 = arith.constant 0 : index
    %c0_36 = arith.constant 0 : index
    %114 = vector.load %arg11[%113, %c0_35, %c0_36] : memref<8x8x384xf32, #tpu.memory_space<vmem>>, vector<1x8x384xf32>
    %115 = vector.shape_cast %114 : vector<1x8x384xf32> to vector<8x384xf32>
    %116 = arith.truncf %112 : vector<8x128xf32> to vector<8x128xbf16>
    %cst_37 = arith.constant dense<0.000000e+00> : vector<8x384xf32>
    %117 = tpu.matmul %116, %12, %cst_37 {dimension_numbers = #tpu.dot_dimension_numbers<[1], [0], [0], [1], [0, 0, 1, 1], [], []>} : vector<8x128xbf16>, vector<128x384xbf16>, vector<8x384xf32> -> vector<8x384xf32>
    %118 = vector.extract_strided_slice %115 {offsets = [0, 0], sizes = [8, 128], strides = [1, 1]} : vector<8x384xf32> to vector<8x128xf32>
    %119 = vector.extract_strided_slice %117 {offsets = [0, 0], sizes = [8, 128], strides = [1, 1]} : vector<8x384xf32> to vector<8x128xf32>
    %120 = arith.addf %118, %119 : vector<8x128xf32>
    %121 = arith.negf %120 : vector<8x128xf32>
    %122 = math.exp %121 : vector<8x128xf32>
    %cst_38 = arith.constant 1.000000e+00 : f32
    %123 = vector.broadcast %cst_38 : f32 to vector<8x128xf32>
    %124 = arith.addf %123, %122 : vector<8x128xf32>
    %125 = arith.divf %123, %124 : vector<8x128xf32>
    %126 = vector.extract_strided_slice %115 {offsets = [0, 128], sizes = [8, 128], strides = [1, 1]} : vector<8x384xf32> to vector<8x128xf32>
    %127 = vector.extract_strided_slice %117 {offsets = [0, 128], sizes = [8, 128], strides = [1, 1]} : vector<8x384xf32> to vector<8x128xf32>
    %128 = arith.addf %126, %127 : vector<8x128xf32>
    %129 = arith.negf %128 : vector<8x128xf32>
    %130 = math.exp %129 : vector<8x128xf32>
    %cst_39 = arith.constant 1.000000e+00 : f32
    %131 = vector.broadcast %cst_39 : f32 to vector<8x128xf32>
    %132 = arith.addf %131, %130 : vector<8x128xf32>
    %133 = arith.divf %131, %132 : vector<8x128xf32>
    %134 = vector.extract_strided_slice %115 {offsets = [0, 256], sizes = [8, 128], strides = [1, 1]} : vector<8x384xf32> to vector<8x128xf32>
    %135 = vector.extract_strided_slice %117 {offsets = [0, 256], sizes = [8, 128], strides = [1, 1]} : vector<8x384xf32> to vector<8x128xf32>
    %136 = arith.addf %135, %15 : vector<8x128xf32>
    %137 = arith.mulf %125, %136 : vector<8x128xf32>
    %138 = arith.addf %134, %137 : vector<8x128xf32>
    %139 = math.tanh %138 : vector<8x128xf32>
    %cst_40 = arith.constant 1.000000e+00 : f32
    %140 = vector.broadcast %cst_40 : f32 to vector<8x128xf32>
    %141 = arith.subf %140, %133 : vector<8x128xf32>
    %142 = arith.mulf %141, %139 : vector<8x128xf32>
    %143 = arith.mulf %133, %112 : vector<8x128xf32>
    %144 = arith.addf %142, %143 : vector<8x128xf32>
    %c4_i32 = arith.constant 4 : i32
    %145 = arith.index_cast %c4_i32 : i32 to index
    %c0_41 = arith.constant 0 : index
    %c0_42 = arith.constant 0 : index
    %146 = vector.load %arg11[%145, %c0_41, %c0_42] : memref<8x8x384xf32, #tpu.memory_space<vmem>>, vector<1x8x384xf32>
    %147 = vector.shape_cast %146 : vector<1x8x384xf32> to vector<8x384xf32>
    %148 = arith.truncf %144 : vector<8x128xf32> to vector<8x128xbf16>
    %cst_43 = arith.constant dense<0.000000e+00> : vector<8x384xf32>
    %149 = tpu.matmul %148, %12, %cst_43 {dimension_numbers = #tpu.dot_dimension_numbers<[1], [0], [0], [1], [0, 0, 1, 1], [], []>} : vector<8x128xbf16>, vector<128x384xbf16>, vector<8x384xf32> -> vector<8x384xf32>
    %150 = vector.extract_strided_slice %147 {offsets = [0, 0], sizes = [8, 128], strides = [1, 1]} : vector<8x384xf32> to vector<8x128xf32>
    %151 = vector.extract_strided_slice %149 {offsets = [0, 0], sizes = [8, 128], strides = [1, 1]} : vector<8x384xf32> to vector<8x128xf32>
    %152 = arith.addf %150, %151 : vector<8x128xf32>
    %153 = arith.negf %152 : vector<8x128xf32>
    %154 = math.exp %153 : vector<8x128xf32>
    %cst_44 = arith.constant 1.000000e+00 : f32
    %155 = vector.broadcast %cst_44 : f32 to vector<8x128xf32>
    %156 = arith.addf %155, %154 : vector<8x128xf32>
    %157 = arith.divf %155, %156 : vector<8x128xf32>
    %158 = vector.extract_strided_slice %147 {offsets = [0, 128], sizes = [8, 128], strides = [1, 1]} : vector<8x384xf32> to vector<8x128xf32>
    %159 = vector.extract_strided_slice %149 {offsets = [0, 128], sizes = [8, 128], strides = [1, 1]} : vector<8x384xf32> to vector<8x128xf32>
    %160 = arith.addf %158, %159 : vector<8x128xf32>
    %161 = arith.negf %160 : vector<8x128xf32>
    %162 = math.exp %161 : vector<8x128xf32>
    %cst_45 = arith.constant 1.000000e+00 : f32
    %163 = vector.broadcast %cst_45 : f32 to vector<8x128xf32>
    %164 = arith.addf %163, %162 : vector<8x128xf32>
    %165 = arith.divf %163, %164 : vector<8x128xf32>
    %166 = vector.extract_strided_slice %147 {offsets = [0, 256], sizes = [8, 128], strides = [1, 1]} : vector<8x384xf32> to vector<8x128xf32>
    %167 = vector.extract_strided_slice %149 {offsets = [0, 256], sizes = [8, 128], strides = [1, 1]} : vector<8x384xf32> to vector<8x128xf32>
    %168 = arith.addf %167, %15 : vector<8x128xf32>
    %169 = arith.mulf %157, %168 : vector<8x128xf32>
    %170 = arith.addf %166, %169 : vector<8x128xf32>
    %171 = math.tanh %170 : vector<8x128xf32>
    %cst_46 = arith.constant 1.000000e+00 : f32
    %172 = vector.broadcast %cst_46 : f32 to vector<8x128xf32>
    %173 = arith.subf %172, %165 : vector<8x128xf32>
    %174 = arith.mulf %173, %171 : vector<8x128xf32>
    %175 = arith.mulf %165, %144 : vector<8x128xf32>
    %176 = arith.addf %174, %175 : vector<8x128xf32>
    %c5_i32 = arith.constant 5 : i32
    %177 = arith.index_cast %c5_i32 : i32 to index
    %c0_47 = arith.constant 0 : index
    %c0_48 = arith.constant 0 : index
    %178 = vector.load %arg11[%177, %c0_47, %c0_48] : memref<8x8x384xf32, #tpu.memory_space<vmem>>, vector<1x8x384xf32>
    %179 = vector.shape_cast %178 : vector<1x8x384xf32> to vector<8x384xf32>
    %180 = arith.truncf %176 : vector<8x128xf32> to vector<8x128xbf16>
    %cst_49 = arith.constant dense<0.000000e+00> : vector<8x384xf32>
    %181 = tpu.matmul %180, %12, %cst_49 {dimension_numbers = #tpu.dot_dimension_numbers<[1], [0], [0], [1], [0, 0, 1, 1], [], []>} : vector<8x128xbf16>, vector<128x384xbf16>, vector<8x384xf32> -> vector<8x384xf32>
    %182 = vector.extract_strided_slice %179 {offsets = [0, 0], sizes = [8, 128], strides = [1, 1]} : vector<8x384xf32> to vector<8x128xf32>
    %183 = vector.extract_strided_slice %181 {offsets = [0, 0], sizes = [8, 128], strides = [1, 1]} : vector<8x384xf32> to vector<8x128xf32>
    %184 = arith.addf %182, %183 : vector<8x128xf32>
    %185 = arith.negf %184 : vector<8x128xf32>
    %186 = math.exp %185 : vector<8x128xf32>
    %cst_50 = arith.constant 1.000000e+00 : f32
    %187 = vector.broadcast %cst_50 : f32 to vector<8x128xf32>
    %188 = arith.addf %187, %186 : vector<8x128xf32>
    %189 = arith.divf %187, %188 : vector<8x128xf32>
    %190 = vector.extract_strided_slice %179 {offsets = [0, 128], sizes = [8, 128], strides = [1, 1]} : vector<8x384xf32> to vector<8x128xf32>
    %191 = vector.extract_strided_slice %181 {offsets = [0, 128], sizes = [8, 128], strides = [1, 1]} : vector<8x384xf32> to vector<8x128xf32>
    %192 = arith.addf %190, %191 : vector<8x128xf32>
    %193 = arith.negf %192 : vector<8x128xf32>
    %194 = math.exp %193 : vector<8x128xf32>
    %cst_51 = arith.constant 1.000000e+00 : f32
    %195 = vector.broadcast %cst_51 : f32 to vector<8x128xf32>
    %196 = arith.addf %195, %194 : vector<8x128xf32>
    %197 = arith.divf %195, %196 : vector<8x128xf32>
    %198 = vector.extract_strided_slice %179 {offsets = [0, 256], sizes = [8, 128], strides = [1, 1]} : vector<8x384xf32> to vector<8x128xf32>
    %199 = vector.extract_strided_slice %181 {offsets = [0, 256], sizes = [8, 128], strides = [1, 1]} : vector<8x384xf32> to vector<8x128xf32>
    %200 = arith.addf %199, %15 : vector<8x128xf32>
    %201 = arith.mulf %189, %200 : vector<8x128xf32>
    %202 = arith.addf %198, %201 : vector<8x128xf32>
    %203 = math.tanh %202 : vector<8x128xf32>
    %cst_52 = arith.constant 1.000000e+00 : f32
    %204 = vector.broadcast %cst_52 : f32 to vector<8x128xf32>
    %205 = arith.subf %204, %197 : vector<8x128xf32>
    %206 = arith.mulf %205, %203 : vector<8x128xf32>
    %207 = arith.mulf %197, %176 : vector<8x128xf32>
    %208 = arith.addf %206, %207 : vector<8x128xf32>
    %c6_i32 = arith.constant 6 : i32
    %209 = arith.index_cast %c6_i32 : i32 to index
    %c0_53 = arith.constant 0 : index
    %c0_54 = arith.constant 0 : index
    %210 = vector.load %arg11[%209, %c0_53, %c0_54] : memref<8x8x384xf32, #tpu.memory_space<vmem>>, vector<1x8x384xf32>
    %211 = vector.shape_cast %210 : vector<1x8x384xf32> to vector<8x384xf32>
    %212 = arith.truncf %208 : vector<8x128xf32> to vector<8x128xbf16>
    %cst_55 = arith.constant dense<0.000000e+00> : vector<8x384xf32>
    %213 = tpu.matmul %212, %12, %cst_55 {dimension_numbers = #tpu.dot_dimension_numbers<[1], [0], [0], [1], [0, 0, 1, 1], [], []>} : vector<8x128xbf16>, vector<128x384xbf16>, vector<8x384xf32> -> vector<8x384xf32>
    %214 = vector.extract_strided_slice %211 {offsets = [0, 0], sizes = [8, 128], strides = [1, 1]} : vector<8x384xf32> to vector<8x128xf32>
    %215 = vector.extract_strided_slice %213 {offsets = [0, 0], sizes = [8, 128], strides = [1, 1]} : vector<8x384xf32> to vector<8x128xf32>
    %216 = arith.addf %214, %215 : vector<8x128xf32>
    %217 = arith.negf %216 : vector<8x128xf32>
    %218 = math.exp %217 : vector<8x128xf32>
    %cst_56 = arith.constant 1.000000e+00 : f32
    %219 = vector.broadcast %cst_56 : f32 to vector<8x128xf32>
    %220 = arith.addf %219, %218 : vector<8x128xf32>
    %221 = arith.divf %219, %220 : vector<8x128xf32>
    %222 = vector.extract_strided_slice %211 {offsets = [0, 128], sizes = [8, 128], strides = [1, 1]} : vector<8x384xf32> to vector<8x128xf32>
    %223 = vector.extract_strided_slice %213 {offsets = [0, 128], sizes = [8, 128], strides = [1, 1]} : vector<8x384xf32> to vector<8x128xf32>
    %224 = arith.addf %222, %223 : vector<8x128xf32>
    %225 = arith.negf %224 : vector<8x128xf32>
    %226 = math.exp %225 : vector<8x128xf32>
    %cst_57 = arith.constant 1.000000e+00 : f32
    %227 = vector.broadcast %cst_57 : f32 to vector<8x128xf32>
    %228 = arith.addf %227, %226 : vector<8x128xf32>
    %229 = arith.divf %227, %228 : vector<8x128xf32>
    %230 = vector.extract_strided_slice %211 {offsets = [0, 256], sizes = [8, 128], strides = [1, 1]} : vector<8x384xf32> to vector<8x128xf32>
    %231 = vector.extract_strided_slice %213 {offsets = [0, 256], sizes = [8, 128], strides = [1, 1]} : vector<8x384xf32> to vector<8x128xf32>
    %232 = arith.addf %231, %15 : vector<8x128xf32>
    %233 = arith.mulf %221, %232 : vector<8x128xf32>
    %234 = arith.addf %230, %233 : vector<8x128xf32>
    %235 = math.tanh %234 : vector<8x128xf32>
    %cst_58 = arith.constant 1.000000e+00 : f32
    %236 = vector.broadcast %cst_58 : f32 to vector<8x128xf32>
    %237 = arith.subf %236, %229 : vector<8x128xf32>
    %238 = arith.mulf %237, %235 : vector<8x128xf32>
    %239 = arith.mulf %229, %208 : vector<8x128xf32>
    %240 = arith.addf %238, %239 : vector<8x128xf32>
    %c7_i32 = arith.constant 7 : i32
    %241 = arith.index_cast %c7_i32 : i32 to index
    %c0_59 = arith.constant 0 : index
    %c0_60 = arith.constant 0 : index
    %242 = vector.load %arg11[%241, %c0_59, %c0_60] : memref<8x8x384xf32, #tpu.memory_space<vmem>>, vector<1x8x384xf32>
    %243 = vector.shape_cast %242 : vector<1x8x384xf32> to vector<8x384xf32>
    %244 = arith.truncf %240 : vector<8x128xf32> to vector<8x128xbf16>
    %cst_61 = arith.constant dense<0.000000e+00> : vector<8x384xf32>
    %245 = tpu.matmul %244, %12, %cst_61 {dimension_numbers = #tpu.dot_dimension_numbers<[1], [0], [0], [1], [0, 0, 1, 1], [], []>} : vector<8x128xbf16>, vector<128x384xbf16>, vector<8x384xf32> -> vector<8x384xf32>
    %246 = vector.extract_strided_slice %243 {offsets = [0, 0], sizes = [8, 128], strides = [1, 1]} : vector<8x384xf32> to vector<8x128xf32>
    %247 = vector.extract_strided_slice %245 {offsets = [0, 0], sizes = [8, 128], strides = [1, 1]} : vector<8x384xf32> to vector<8x128xf32>
    %248 = arith.addf %246, %247 : vector<8x128xf32>
    %249 = arith.negf %248 : vector<8x128xf32>
    %250 = math.exp %249 : vector<8x128xf32>
    %cst_62 = arith.constant 1.000000e+00 : f32
    %251 = vector.broadcast %cst_62 : f32 to vector<8x128xf32>
    %252 = arith.addf %251, %250 : vector<8x128xf32>
    %253 = arith.divf %251, %252 : vector<8x128xf32>
    %254 = vector.extract_strided_slice %243 {offsets = [0, 128], sizes = [8, 128], strides = [1, 1]} : vector<8x384xf32> to vector<8x128xf32>
    %255 = vector.extract_strided_slice %245 {offsets = [0, 128], sizes = [8, 128], strides = [1, 1]} : vector<8x384xf32> to vector<8x128xf32>
    %256 = arith.addf %254, %255 : vector<8x128xf32>
    %257 = arith.negf %256 : vector<8x128xf32>
    %258 = math.exp %257 : vector<8x128xf32>
    %cst_63 = arith.constant 1.000000e+00 : f32
    %259 = vector.broadcast %cst_63 : f32 to vector<8x128xf32>
    %260 = arith.addf %259, %258 : vector<8x128xf32>
    %261 = arith.divf %259, %260 : vector<8x128xf32>
    %262 = vector.extract_strided_slice %243 {offsets = [0, 256], sizes = [8, 128], strides = [1, 1]} : vector<8x384xf32> to vector<8x128xf32>
    %263 = vector.extract_strided_slice %245 {offsets = [0, 256], sizes = [8, 128], strides = [1, 1]} : vector<8x384xf32> to vector<8x128xf32>
    %264 = arith.addf %263, %15 : vector<8x128xf32>
    %265 = arith.mulf %253, %264 : vector<8x128xf32>
    %266 = arith.addf %262, %265 : vector<8x128xf32>
    %267 = math.tanh %266 : vector<8x128xf32>
    %cst_64 = arith.constant 1.000000e+00 : f32
    %268 = vector.broadcast %cst_64 : f32 to vector<8x128xf32>
    %269 = arith.subf %268, %261 : vector<8x128xf32>
    %270 = arith.mulf %269, %267 : vector<8x128xf32>
    %271 = arith.mulf %261, %240 : vector<8x128xf32>
    %272 = arith.addf %270, %271 : vector<8x128xf32>
    %c8_i32 = arith.constant 8 : i32
    %c0_65 = arith.constant 0 : index
    %c0_66 = arith.constant 0 : index
    %273 = vector.load %arg10[%c0_65, %c0_66] : memref<8x128xf32, #tpu.memory_space<vmem>>, vector<8x128xf32>
    tpu.vector_store %arg10[%c0_65, %c0_66], %272 {strides = array<i32>} : memref<8x128xf32, #tpu.memory_space<vmem>>, vector<8x128xf32>,
    %c0_i32_67 = arith.constant 0 : i32
    %274 = arith.cmpi eq, %arg1, %c0_i32_67 : i32
    %275 = arith.extui %274 : i1 to i32
    %c0_i32_68 = arith.constant 0 : i32
    %276 = arith.cmpi ne, %275, %c0_i32_68 : i32
    scf.if %276 {
      %c0_69 = arith.constant 0 : index
      %c0_70 = arith.constant 0 : index
      %277 = vector.load %arg10[%c0_69, %c0_70] : memref<8x128xf32, #tpu.memory_space<vmem>>, vector<8x128xf32>
      %278 = arith.truncf %277 : vector<8x128xf32> to vector<8x128xbf16>
      %c0_71 = arith.constant 0 : index
      %c0_72 = arith.constant 0 : index
      %279 = vector.load %arg7[%c0_71, %c0_72] : memref<128x128xbf16, #tpu.memory_space<vmem>>, vector<128x128xbf16>
      %cst_73 = arith.constant dense<0.000000e+00> : vector<8x128xf32>
      %280 = tpu.matmul %278, %279, %cst_73 {dimension_numbers = #tpu.dot_dimension_numbers<[1], [0], [0], [1], [0, 0, 1, 1], [], []>} : vector<8x128xbf16>, vector<128x128xbf16>, vector<8x128xf32> -> vector<8x128xf32>
      %c0_74 = arith.constant 0 : index
      %c0_75 = arith.constant 0 : index
      %281 = vector.load %arg8[%c0_74, %c0_75] : memref<1x128xf32, #tpu.memory_space<vmem>>, vector<1x128xf32>
      %282 = vector.broadcast %281 : vector<1x128xf32> to vector<8x128xf32>
      %283 = arith.addf %280, %282 : vector<8x128xf32>
      %c0_76 = arith.constant 0 : index
      %c0_77 = arith.constant 0 : index
      %284 = vector.load %arg9[%c0_76, %c0_77] : memref<8x128xf32, #tpu.memory_space<vmem>>, vector<8x128xf32>
      tpu.vector_store %arg9[%c0_76, %c0_77], %283 {strides = array<i32>} : memref<8x128xf32, #tpu.memory_space<vmem>>, vector<8x128xf32>,
    } else {
    }
    return
  }
  func.func @transform_0(%arg0: i32, %arg1: i32) -> (i32, i32, i32) {
    %c0_i32 = arith.constant 0 : i32
    %c0_i32_0 = arith.constant 0 : i32
    return %arg1, %arg0, %c0_i32 : i32, i32, i32
  }
  func.func @transform_1(%arg0: i32, %arg1: i32) -> (i32, i32) {
    %c0_i32 = arith.constant 0 : i32
    %c0_i32_0 = arith.constant 0 : i32
    %c0_i32_1 = arith.constant 0 : i32
    return %c0_i32, %c0_i32_0 : i32, i32
  }
  func.func @transform_2(%arg0: i32, %arg1: i32) -> (i32, i32) {
    %c0_i32 = arith.constant 0 : i32
    %c0_i32_0 = arith.constant 0 : i32
    %c0_i32_1 = arith.constant 0 : i32
    return %c0_i32, %c0_i32_0 : i32, i32
  }
  func.func @transform_3(%arg0: i32, %arg1: i32) -> (i32, i32) {
    %c0_i32 = arith.constant 0 : i32
    %c0_i32_0 = arith.constant 0 : i32
    %c0_i32_1 = arith.constant 0 : i32
    return %c0_i32, %c0_i32_0 : i32, i32
  }
  func.func @transform_4(%arg0: i32, %arg1: i32) -> (i32, i32) {
    %c0_i32 = arith.constant 0 : i32
    %c0_i32_0 = arith.constant 0 : i32
    %c0_i32_1 = arith.constant 0 : i32
    return %c0_i32, %c0_i32_0 : i32, i32
  }
  func.func @transform_5(%arg0: i32, %arg1: i32) -> (i32, i32) {
    %c0_i32 = arith.constant 0 : i32
    %c0_i32_0 = arith.constant 0 : i32
    %c0_i32_1 = arith.constant 0 : i32
    return %c0_i32, %c0_i32_0 : i32, i32
  }
  func.func @transform_6(%arg0: i32, %arg1: i32) -> (i32, i32) {
    %c0_i32 = arith.constant 0 : i32
    %c0_i32_0 = arith.constant 0 : i32
    %c0_i32_1 = arith.constant 0 : i32
    return %c0_i32, %c0_i32_0 : i32, i32
  }
  func.func @transform_7(%arg0: i32, %arg1: i32) -> (i32, i32) {
    %c0_i32 = arith.constant 0 : i32
    %c0_i32_0 = arith.constant 0 : i32
    return %arg0, %c0_i32 : i32, i32
  }
}

module attributes {stable_mosaic.version = 11 : i64} {
  func.func @_gru_layer_kernel(%arg0: i32, %arg1: i32, %arg2: memref<8x8x4xf32, #tpu.memory_space<vmem>>, %arg3: memref<4x384xbf16, #tpu.memory_space<vmem>>, %arg4: memref<128x384xbf16, #tpu.memory_space<vmem>>, %arg5: memref<1x384xf32, #tpu.memory_space<vmem>>, %arg6: memref<1x128xf32, #tpu.memory_space<vmem>>, %arg7: memref<8x8x128xbf16, #tpu.memory_space<vmem>>, %arg8: memref<8x128xf32, #tpu.memory_space<vmem>>, %arg9: memref<8x8x384xf32, #tpu.memory_space<vmem>>) attributes {dimension_semantics = [#tpu.dimension_semantics<parallel>, #tpu.dimension_semantics<arbitrary>], iteration_bounds = array<i64: 1, 1>, scalar_prefetch = 0 : i64, scratch_operands = 2 : i64, tpu.core_type = #tpu.core_type<tc>, window_params = [{transform_indices = @transform_0, window_bounds = array<i64: 8, 8, 4>}, {pipeline_mode = #tpu.pipeline_mode<synchronous>, transform_indices = @transform_1, window_bounds = array<i64: 4, 384>}, {pipeline_mode = #tpu.pipeline_mode<synchronous>, transform_indices = @transform_2, window_bounds = array<i64: 128, 384>}, {pipeline_mode = #tpu.pipeline_mode<synchronous>, transform_indices = @transform_3, window_bounds = array<i64: 1, 384>}, {pipeline_mode = #tpu.pipeline_mode<synchronous>, transform_indices = @transform_4, window_bounds = array<i64: 1, 128>}, {transform_indices = @transform_5, window_bounds = array<i64: 8, 8, 128>}]} {
    %c0_i32 = arith.constant 0 : i32
    %0 = arith.cmpi eq, %arg1, %c0_i32 : i32
    %1 = arith.extui %0 : i1 to i32
    %c0_i32_0 = arith.constant 0 : i32
    %2 = arith.cmpi ne, %1, %c0_i32_0 : i32
    scf.if %2 {
      %cst_83 = arith.constant 0.000000e+00 : f32
      %315 = vector.broadcast %cst_83 : f32 to vector<8x128xf32>
      %c0_84 = arith.constant 0 : index
      %c0_85 = arith.constant 0 : index
      %316 = vector.load %arg8[%c0_84, %c0_85] : memref<8x128xf32, #tpu.memory_space<vmem>>, vector<8x128xf32>
      tpu.vector_store %arg8[%c0_84, %c0_85], %315 {strides = array<i32>} : memref<8x128xf32, #tpu.memory_space<vmem>>, vector<8x128xf32>,
    } else {
    }
    %c0 = arith.constant 0 : index
    %c0_1 = arith.constant 0 : index
    %c0_2 = arith.constant 0 : index
    %3 = vector.load %arg2[%c0, %c0_1, %c0_2] : memref<8x8x4xf32, #tpu.memory_space<vmem>>, vector<8x8x4xf32>
    %4 = vector.shape_cast %3 : vector<8x8x4xf32> to vector<64x4xf32>
    %5 = arith.truncf %4 : vector<64x4xf32> to vector<64x4xbf16>
    %c0_3 = arith.constant 0 : index
    %c0_4 = arith.constant 0 : index
    %6 = vector.load %arg3[%c0_3, %c0_4] : memref<4x384xbf16, #tpu.memory_space<vmem>>, vector<4x384xbf16>
    %cst = arith.constant dense<0.000000e+00> : vector<64x384xf32>
    %7 = tpu.matmul %5, %6, %cst {dimension_numbers = #tpu.dot_dimension_numbers<[1], [0], [0], [1], [0, 0, 1, 1], [], []>} : vector<64x4xbf16>, vector<4x384xbf16>, vector<64x384xf32> -> vector<64x384xf32>
    %c0_5 = arith.constant 0 : index
    %c0_6 = arith.constant 0 : index
    %8 = vector.load %arg5[%c0_5, %c0_6] : memref<1x384xf32, #tpu.memory_space<vmem>>, vector<1x384xf32>
    %9 = vector.broadcast %8 : vector<1x384xf32> to vector<64x384xf32>
    %10 = arith.addf %7, %9 : vector<64x384xf32>
    %11 = vector.shape_cast %10 : vector<64x384xf32> to vector<8x8x384xf32>
    %c0_7 = arith.constant 0 : index
    %c0_8 = arith.constant 0 : index
    %c0_9 = arith.constant 0 : index
    %12 = vector.load %arg9[%c0_7, %c0_8, %c0_9] : memref<8x8x384xf32, #tpu.memory_space<vmem>>, vector<8x8x384xf32>
    tpu.vector_store %arg9[%c0_7, %c0_8, %c0_9], %11 {strides = array<i32>} : memref<8x8x384xf32, #tpu.memory_space<vmem>>, vector<8x8x384xf32>,
    %c0_10 = arith.constant 0 : index
    %c0_11 = arith.constant 0 : index
    %13 = vector.load %arg4[%c0_10, %c0_11] : memref<128x384xbf16, #tpu.memory_space<vmem>>, vector<128x384xbf16>
    %c0_12 = arith.constant 0 : index
    %c0_13 = arith.constant 0 : index
    %14 = vector.load %arg6[%c0_12, %c0_13] : memref<1x128xf32, #tpu.memory_space<vmem>>, vector<1x128xf32>
    %15 = vector.shape_cast %14 : vector<1x128xf32> to vector<1x128xf32>
    %16 = vector.broadcast %15 : vector<1x128xf32> to vector<8x128xf32>
    %c0_14 = arith.constant 0 : index
    %c0_15 = arith.constant 0 : index
    %17 = vector.load %arg8[%c0_14, %c0_15] : memref<8x128xf32, #tpu.memory_space<vmem>>, vector<8x128xf32>
    %c0_i32_16 = arith.constant 0 : i32
    %18 = arith.index_cast %c0_i32_16 : i32 to index
    %c0_17 = arith.constant 0 : index
    %c0_18 = arith.constant 0 : index
    %19 = vector.load %arg9[%18, %c0_17, %c0_18] : memref<8x8x384xf32, #tpu.memory_space<vmem>>, vector<1x8x384xf32>
    %20 = vector.shape_cast %19 : vector<1x8x384xf32> to vector<8x384xf32>
    %21 = arith.truncf %17 : vector<8x128xf32> to vector<8x128xbf16>
    %cst_19 = arith.constant dense<0.000000e+00> : vector<8x384xf32>
    %22 = tpu.matmul %21, %13, %cst_19 {dimension_numbers = #tpu.dot_dimension_numbers<[1], [0], [0], [1], [0, 0, 1, 1], [], []>} : vector<8x128xbf16>, vector<128x384xbf16>, vector<8x384xf32> -> vector<8x384xf32>
    %23 = vector.extract_strided_slice %20 {offsets = [0, 0], sizes = [8, 128], strides = [1, 1]} : vector<8x384xf32> to vector<8x128xf32>
    %24 = vector.extract_strided_slice %22 {offsets = [0, 0], sizes = [8, 128], strides = [1, 1]} : vector<8x384xf32> to vector<8x128xf32>
    %25 = arith.addf %23, %24 : vector<8x128xf32>
    %26 = arith.negf %25 : vector<8x128xf32>
    %27 = math.exp %26 : vector<8x128xf32>
    %cst_20 = arith.constant 1.000000e+00 : f32
    %28 = vector.broadcast %cst_20 : f32 to vector<8x128xf32>
    %29 = arith.addf %28, %27 : vector<8x128xf32>
    %30 = arith.divf %28, %29 : vector<8x128xf32>
    %31 = vector.extract_strided_slice %20 {offsets = [0, 128], sizes = [8, 128], strides = [1, 1]} : vector<8x384xf32> to vector<8x128xf32>
    %32 = vector.extract_strided_slice %22 {offsets = [0, 128], sizes = [8, 128], strides = [1, 1]} : vector<8x384xf32> to vector<8x128xf32>
    %33 = arith.addf %31, %32 : vector<8x128xf32>
    %34 = arith.negf %33 : vector<8x128xf32>
    %35 = math.exp %34 : vector<8x128xf32>
    %cst_21 = arith.constant 1.000000e+00 : f32
    %36 = vector.broadcast %cst_21 : f32 to vector<8x128xf32>
    %37 = arith.addf %36, %35 : vector<8x128xf32>
    %38 = arith.divf %36, %37 : vector<8x128xf32>
    %39 = vector.extract_strided_slice %20 {offsets = [0, 256], sizes = [8, 128], strides = [1, 1]} : vector<8x384xf32> to vector<8x128xf32>
    %40 = vector.extract_strided_slice %22 {offsets = [0, 256], sizes = [8, 128], strides = [1, 1]} : vector<8x384xf32> to vector<8x128xf32>
    %41 = arith.addf %40, %16 : vector<8x128xf32>
    %42 = arith.mulf %30, %41 : vector<8x128xf32>
    %43 = arith.addf %39, %42 : vector<8x128xf32>
    %44 = math.tanh %43 : vector<8x128xf32>
    %cst_22 = arith.constant 1.000000e+00 : f32
    %45 = vector.broadcast %cst_22 : f32 to vector<8x128xf32>
    %46 = arith.subf %45, %38 : vector<8x128xf32>
    %47 = arith.mulf %46, %44 : vector<8x128xf32>
    %48 = arith.mulf %38, %17 : vector<8x128xf32>
    %49 = arith.addf %47, %48 : vector<8x128xf32>
    %50 = arith.truncf %49 : vector<8x128xf32> to vector<8x128xbf16>
    %51 = arith.index_cast %c0_i32_16 : i32 to index
    %c0_23 = arith.constant 0 : index
    %c0_24 = arith.constant 0 : index
    %52 = vector.load %arg7[%51, %c0_23, %c0_24] : memref<8x8x128xbf16, #tpu.memory_space<vmem>>, vector<1x8x128xbf16>
    %53 = vector.shape_cast %52 : vector<1x8x128xbf16> to vector<8x128xbf16>
    %54 = vector.shape_cast %50 : vector<8x128xbf16> to vector<1x8x128xbf16>
    tpu.vector_store %arg7[%51, %c0_23, %c0_24], %54 {strides = array<i32>} : memref<8x8x128xbf16, #tpu.memory_space<vmem>>, vector<1x8x128xbf16>,
    %c1_i32 = arith.constant 1 : i32
    %55 = arith.index_cast %c1_i32 : i32 to index
    %c0_25 = arith.constant 0 : index
    %c0_26 = arith.constant 0 : index
    %56 = vector.load %arg9[%55, %c0_25, %c0_26] : memref<8x8x384xf32, #tpu.memory_space<vmem>>, vector<1x8x384xf32>
    %57 = vector.shape_cast %56 : vector<1x8x384xf32> to vector<8x384xf32>
    %58 = arith.truncf %49 : vector<8x128xf32> to vector<8x128xbf16>
    %cst_27 = arith.constant dense<0.000000e+00> : vector<8x384xf32>
    %59 = tpu.matmul %58, %13, %cst_27 {dimension_numbers = #tpu.dot_dimension_numbers<[1], [0], [0], [1], [0, 0, 1, 1], [], []>} : vector<8x128xbf16>, vector<128x384xbf16>, vector<8x384xf32> -> vector<8x384xf32>
    %60 = vector.extract_strided_slice %57 {offsets = [0, 0], sizes = [8, 128], strides = [1, 1]} : vector<8x384xf32> to vector<8x128xf32>
    %61 = vector.extract_strided_slice %59 {offsets = [0, 0], sizes = [8, 128], strides = [1, 1]} : vector<8x384xf32> to vector<8x128xf32>
    %62 = arith.addf %60, %61 : vector<8x128xf32>
    %63 = arith.negf %62 : vector<8x128xf32>
    %64 = math.exp %63 : vector<8x128xf32>
    %cst_28 = arith.constant 1.000000e+00 : f32
    %65 = vector.broadcast %cst_28 : f32 to vector<8x128xf32>
    %66 = arith.addf %65, %64 : vector<8x128xf32>
    %67 = arith.divf %65, %66 : vector<8x128xf32>
    %68 = vector.extract_strided_slice %57 {offsets = [0, 128], sizes = [8, 128], strides = [1, 1]} : vector<8x384xf32> to vector<8x128xf32>
    %69 = vector.extract_strided_slice %59 {offsets = [0, 128], sizes = [8, 128], strides = [1, 1]} : vector<8x384xf32> to vector<8x128xf32>
    %70 = arith.addf %68, %69 : vector<8x128xf32>
    %71 = arith.negf %70 : vector<8x128xf32>
    %72 = math.exp %71 : vector<8x128xf32>
    %cst_29 = arith.constant 1.000000e+00 : f32
    %73 = vector.broadcast %cst_29 : f32 to vector<8x128xf32>
    %74 = arith.addf %73, %72 : vector<8x128xf32>
    %75 = arith.divf %73, %74 : vector<8x128xf32>
    %76 = vector.extract_strided_slice %57 {offsets = [0, 256], sizes = [8, 128], strides = [1, 1]} : vector<8x384xf32> to vector<8x128xf32>
    %77 = vector.extract_strided_slice %59 {offsets = [0, 256], sizes = [8, 128], strides = [1, 1]} : vector<8x384xf32> to vector<8x128xf32>
    %78 = arith.addf %77, %16 : vector<8x128xf32>
    %79 = arith.mulf %67, %78 : vector<8x128xf32>
    %80 = arith.addf %76, %79 : vector<8x128xf32>
    %81 = math.tanh %80 : vector<8x128xf32>
    %cst_30 = arith.constant 1.000000e+00 : f32
    %82 = vector.broadcast %cst_30 : f32 to vector<8x128xf32>
    %83 = arith.subf %82, %75 : vector<8x128xf32>
    %84 = arith.mulf %83, %81 : vector<8x128xf32>
    %85 = arith.mulf %75, %49 : vector<8x128xf32>
    %86 = arith.addf %84, %85 : vector<8x128xf32>
    %87 = arith.truncf %86 : vector<8x128xf32> to vector<8x128xbf16>
    %88 = arith.index_cast %c1_i32 : i32 to index
    %c0_31 = arith.constant 0 : index
    %c0_32 = arith.constant 0 : index
    %89 = vector.load %arg7[%88, %c0_31, %c0_32] : memref<8x8x128xbf16, #tpu.memory_space<vmem>>, vector<1x8x128xbf16>
    %90 = vector.shape_cast %89 : vector<1x8x128xbf16> to vector<8x128xbf16>
    %91 = vector.shape_cast %87 : vector<8x128xbf16> to vector<1x8x128xbf16>
    tpu.vector_store %arg7[%88, %c0_31, %c0_32], %91 {strides = array<i32>} : memref<8x8x128xbf16, #tpu.memory_space<vmem>>, vector<1x8x128xbf16>,
    %c2_i32 = arith.constant 2 : i32
    %92 = arith.index_cast %c2_i32 : i32 to index
    %c0_33 = arith.constant 0 : index
    %c0_34 = arith.constant 0 : index
    %93 = vector.load %arg9[%92, %c0_33, %c0_34] : memref<8x8x384xf32, #tpu.memory_space<vmem>>, vector<1x8x384xf32>
    %94 = vector.shape_cast %93 : vector<1x8x384xf32> to vector<8x384xf32>
    %95 = arith.truncf %86 : vector<8x128xf32> to vector<8x128xbf16>
    %cst_35 = arith.constant dense<0.000000e+00> : vector<8x384xf32>
    %96 = tpu.matmul %95, %13, %cst_35 {dimension_numbers = #tpu.dot_dimension_numbers<[1], [0], [0], [1], [0, 0, 1, 1], [], []>} : vector<8x128xbf16>, vector<128x384xbf16>, vector<8x384xf32> -> vector<8x384xf32>
    %97 = vector.extract_strided_slice %94 {offsets = [0, 0], sizes = [8, 128], strides = [1, 1]} : vector<8x384xf32> to vector<8x128xf32>
    %98 = vector.extract_strided_slice %96 {offsets = [0, 0], sizes = [8, 128], strides = [1, 1]} : vector<8x384xf32> to vector<8x128xf32>
    %99 = arith.addf %97, %98 : vector<8x128xf32>
    %100 = arith.negf %99 : vector<8x128xf32>
    %101 = math.exp %100 : vector<8x128xf32>
    %cst_36 = arith.constant 1.000000e+00 : f32
    %102 = vector.broadcast %cst_36 : f32 to vector<8x128xf32>
    %103 = arith.addf %102, %101 : vector<8x128xf32>
    %104 = arith.divf %102, %103 : vector<8x128xf32>
    %105 = vector.extract_strided_slice %94 {offsets = [0, 128], sizes = [8, 128], strides = [1, 1]} : vector<8x384xf32> to vector<8x128xf32>
    %106 = vector.extract_strided_slice %96 {offsets = [0, 128], sizes = [8, 128], strides = [1, 1]} : vector<8x384xf32> to vector<8x128xf32>
    %107 = arith.addf %105, %106 : vector<8x128xf32>
    %108 = arith.negf %107 : vector<8x128xf32>
    %109 = math.exp %108 : vector<8x128xf32>
    %cst_37 = arith.constant 1.000000e+00 : f32
    %110 = vector.broadcast %cst_37 : f32 to vector<8x128xf32>
    %111 = arith.addf %110, %109 : vector<8x128xf32>
    %112 = arith.divf %110, %111 : vector<8x128xf32>
    %113 = vector.extract_strided_slice %94 {offsets = [0, 256], sizes = [8, 128], strides = [1, 1]} : vector<8x384xf32> to vector<8x128xf32>
    %114 = vector.extract_strided_slice %96 {offsets = [0, 256], sizes = [8, 128], strides = [1, 1]} : vector<8x384xf32> to vector<8x128xf32>
    %115 = arith.addf %114, %16 : vector<8x128xf32>
    %116 = arith.mulf %104, %115 : vector<8x128xf32>
    %117 = arith.addf %113, %116 : vector<8x128xf32>
    %118 = math.tanh %117 : vector<8x128xf32>
    %cst_38 = arith.constant 1.000000e+00 : f32
    %119 = vector.broadcast %cst_38 : f32 to vector<8x128xf32>
    %120 = arith.subf %119, %112 : vector<8x128xf32>
    %121 = arith.mulf %120, %118 : vector<8x128xf32>
    %122 = arith.mulf %112, %86 : vector<8x128xf32>
    %123 = arith.addf %121, %122 : vector<8x128xf32>
    %124 = arith.truncf %123 : vector<8x128xf32> to vector<8x128xbf16>
    %125 = arith.index_cast %c2_i32 : i32 to index
    %c0_39 = arith.constant 0 : index
    %c0_40 = arith.constant 0 : index
    %126 = vector.load %arg7[%125, %c0_39, %c0_40] : memref<8x8x128xbf16, #tpu.memory_space<vmem>>, vector<1x8x128xbf16>
    %127 = vector.shape_cast %126 : vector<1x8x128xbf16> to vector<8x128xbf16>
    %128 = vector.shape_cast %124 : vector<8x128xbf16> to vector<1x8x128xbf16>
    tpu.vector_store %arg7[%125, %c0_39, %c0_40], %128 {strides = array<i32>} : memref<8x8x128xbf16, #tpu.memory_space<vmem>>, vector<1x8x128xbf16>,
    %c3_i32 = arith.constant 3 : i32
    %129 = arith.index_cast %c3_i32 : i32 to index
    %c0_41 = arith.constant 0 : index
    %c0_42 = arith.constant 0 : index
    %130 = vector.load %arg9[%129, %c0_41, %c0_42] : memref<8x8x384xf32, #tpu.memory_space<vmem>>, vector<1x8x384xf32>
    %131 = vector.shape_cast %130 : vector<1x8x384xf32> to vector<8x384xf32>
    %132 = arith.truncf %123 : vector<8x128xf32> to vector<8x128xbf16>
    %cst_43 = arith.constant dense<0.000000e+00> : vector<8x384xf32>
    %133 = tpu.matmul %132, %13, %cst_43 {dimension_numbers = #tpu.dot_dimension_numbers<[1], [0], [0], [1], [0, 0, 1, 1], [], []>} : vector<8x128xbf16>, vector<128x384xbf16>, vector<8x384xf32> -> vector<8x384xf32>
    %134 = vector.extract_strided_slice %131 {offsets = [0, 0], sizes = [8, 128], strides = [1, 1]} : vector<8x384xf32> to vector<8x128xf32>
    %135 = vector.extract_strided_slice %133 {offsets = [0, 0], sizes = [8, 128], strides = [1, 1]} : vector<8x384xf32> to vector<8x128xf32>
    %136 = arith.addf %134, %135 : vector<8x128xf32>
    %137 = arith.negf %136 : vector<8x128xf32>
    %138 = math.exp %137 : vector<8x128xf32>
    %cst_44 = arith.constant 1.000000e+00 : f32
    %139 = vector.broadcast %cst_44 : f32 to vector<8x128xf32>
    %140 = arith.addf %139, %138 : vector<8x128xf32>
    %141 = arith.divf %139, %140 : vector<8x128xf32>
    %142 = vector.extract_strided_slice %131 {offsets = [0, 128], sizes = [8, 128], strides = [1, 1]} : vector<8x384xf32> to vector<8x128xf32>
    %143 = vector.extract_strided_slice %133 {offsets = [0, 128], sizes = [8, 128], strides = [1, 1]} : vector<8x384xf32> to vector<8x128xf32>
    %144 = arith.addf %142, %143 : vector<8x128xf32>
    %145 = arith.negf %144 : vector<8x128xf32>
    %146 = math.exp %145 : vector<8x128xf32>
    %cst_45 = arith.constant 1.000000e+00 : f32
    %147 = vector.broadcast %cst_45 : f32 to vector<8x128xf32>
    %148 = arith.addf %147, %146 : vector<8x128xf32>
    %149 = arith.divf %147, %148 : vector<8x128xf32>
    %150 = vector.extract_strided_slice %131 {offsets = [0, 256], sizes = [8, 128], strides = [1, 1]} : vector<8x384xf32> to vector<8x128xf32>
    %151 = vector.extract_strided_slice %133 {offsets = [0, 256], sizes = [8, 128], strides = [1, 1]} : vector<8x384xf32> to vector<8x128xf32>
    %152 = arith.addf %151, %16 : vector<8x128xf32>
    %153 = arith.mulf %141, %152 : vector<8x128xf32>
    %154 = arith.addf %150, %153 : vector<8x128xf32>
    %155 = math.tanh %154 : vector<8x128xf32>
    %cst_46 = arith.constant 1.000000e+00 : f32
    %156 = vector.broadcast %cst_46 : f32 to vector<8x128xf32>
    %157 = arith.subf %156, %149 : vector<8x128xf32>
    %158 = arith.mulf %157, %155 : vector<8x128xf32>
    %159 = arith.mulf %149, %123 : vector<8x128xf32>
    %160 = arith.addf %158, %159 : vector<8x128xf32>
    %161 = arith.truncf %160 : vector<8x128xf32> to vector<8x128xbf16>
    %162 = arith.index_cast %c3_i32 : i32 to index
    %c0_47 = arith.constant 0 : index
    %c0_48 = arith.constant 0 : index
    %163 = vector.load %arg7[%162, %c0_47, %c0_48] : memref<8x8x128xbf16, #tpu.memory_space<vmem>>, vector<1x8x128xbf16>
    %164 = vector.shape_cast %163 : vector<1x8x128xbf16> to vector<8x128xbf16>
    %165 = vector.shape_cast %161 : vector<8x128xbf16> to vector<1x8x128xbf16>
    tpu.vector_store %arg7[%162, %c0_47, %c0_48], %165 {strides = array<i32>} : memref<8x8x128xbf16, #tpu.memory_space<vmem>>, vector<1x8x128xbf16>,
    %c4_i32 = arith.constant 4 : i32
    %166 = arith.index_cast %c4_i32 : i32 to index
    %c0_49 = arith.constant 0 : index
    %c0_50 = arith.constant 0 : index
    %167 = vector.load %arg9[%166, %c0_49, %c0_50] : memref<8x8x384xf32, #tpu.memory_space<vmem>>, vector<1x8x384xf32>
    %168 = vector.shape_cast %167 : vector<1x8x384xf32> to vector<8x384xf32>
    %169 = arith.truncf %160 : vector<8x128xf32> to vector<8x128xbf16>
    %cst_51 = arith.constant dense<0.000000e+00> : vector<8x384xf32>
    %170 = tpu.matmul %169, %13, %cst_51 {dimension_numbers = #tpu.dot_dimension_numbers<[1], [0], [0], [1], [0, 0, 1, 1], [], []>} : vector<8x128xbf16>, vector<128x384xbf16>, vector<8x384xf32> -> vector<8x384xf32>
    %171 = vector.extract_strided_slice %168 {offsets = [0, 0], sizes = [8, 128], strides = [1, 1]} : vector<8x384xf32> to vector<8x128xf32>
    %172 = vector.extract_strided_slice %170 {offsets = [0, 0], sizes = [8, 128], strides = [1, 1]} : vector<8x384xf32> to vector<8x128xf32>
    %173 = arith.addf %171, %172 : vector<8x128xf32>
    %174 = arith.negf %173 : vector<8x128xf32>
    %175 = math.exp %174 : vector<8x128xf32>
    %cst_52 = arith.constant 1.000000e+00 : f32
    %176 = vector.broadcast %cst_52 : f32 to vector<8x128xf32>
    %177 = arith.addf %176, %175 : vector<8x128xf32>
    %178 = arith.divf %176, %177 : vector<8x128xf32>
    %179 = vector.extract_strided_slice %168 {offsets = [0, 128], sizes = [8, 128], strides = [1, 1]} : vector<8x384xf32> to vector<8x128xf32>
    %180 = vector.extract_strided_slice %170 {offsets = [0, 128], sizes = [8, 128], strides = [1, 1]} : vector<8x384xf32> to vector<8x128xf32>
    %181 = arith.addf %179, %180 : vector<8x128xf32>
    %182 = arith.negf %181 : vector<8x128xf32>
    %183 = math.exp %182 : vector<8x128xf32>
    %cst_53 = arith.constant 1.000000e+00 : f32
    %184 = vector.broadcast %cst_53 : f32 to vector<8x128xf32>
    %185 = arith.addf %184, %183 : vector<8x128xf32>
    %186 = arith.divf %184, %185 : vector<8x128xf32>
    %187 = vector.extract_strided_slice %168 {offsets = [0, 256], sizes = [8, 128], strides = [1, 1]} : vector<8x384xf32> to vector<8x128xf32>
    %188 = vector.extract_strided_slice %170 {offsets = [0, 256], sizes = [8, 128], strides = [1, 1]} : vector<8x384xf32> to vector<8x128xf32>
    %189 = arith.addf %188, %16 : vector<8x128xf32>
    %190 = arith.mulf %178, %189 : vector<8x128xf32>
    %191 = arith.addf %187, %190 : vector<8x128xf32>
    %192 = math.tanh %191 : vector<8x128xf32>
    %cst_54 = arith.constant 1.000000e+00 : f32
    %193 = vector.broadcast %cst_54 : f32 to vector<8x128xf32>
    %194 = arith.subf %193, %186 : vector<8x128xf32>
    %195 = arith.mulf %194, %192 : vector<8x128xf32>
    %196 = arith.mulf %186, %160 : vector<8x128xf32>
    %197 = arith.addf %195, %196 : vector<8x128xf32>
    %198 = arith.truncf %197 : vector<8x128xf32> to vector<8x128xbf16>
    %199 = arith.index_cast %c4_i32 : i32 to index
    %c0_55 = arith.constant 0 : index
    %c0_56 = arith.constant 0 : index
    %200 = vector.load %arg7[%199, %c0_55, %c0_56] : memref<8x8x128xbf16, #tpu.memory_space<vmem>>, vector<1x8x128xbf16>
    %201 = vector.shape_cast %200 : vector<1x8x128xbf16> to vector<8x128xbf16>
    %202 = vector.shape_cast %198 : vector<8x128xbf16> to vector<1x8x128xbf16>
    tpu.vector_store %arg7[%199, %c0_55, %c0_56], %202 {strides = array<i32>} : memref<8x8x128xbf16, #tpu.memory_space<vmem>>, vector<1x8x128xbf16>,
    %c5_i32 = arith.constant 5 : i32
    %203 = arith.index_cast %c5_i32 : i32 to index
    %c0_57 = arith.constant 0 : index
    %c0_58 = arith.constant 0 : index
    %204 = vector.load %arg9[%203, %c0_57, %c0_58] : memref<8x8x384xf32, #tpu.memory_space<vmem>>, vector<1x8x384xf32>
    %205 = vector.shape_cast %204 : vector<1x8x384xf32> to vector<8x384xf32>
    %206 = arith.truncf %197 : vector<8x128xf32> to vector<8x128xbf16>
    %cst_59 = arith.constant dense<0.000000e+00> : vector<8x384xf32>
    %207 = tpu.matmul %206, %13, %cst_59 {dimension_numbers = #tpu.dot_dimension_numbers<[1], [0], [0], [1], [0, 0, 1, 1], [], []>} : vector<8x128xbf16>, vector<128x384xbf16>, vector<8x384xf32> -> vector<8x384xf32>
    %208 = vector.extract_strided_slice %205 {offsets = [0, 0], sizes = [8, 128], strides = [1, 1]} : vector<8x384xf32> to vector<8x128xf32>
    %209 = vector.extract_strided_slice %207 {offsets = [0, 0], sizes = [8, 128], strides = [1, 1]} : vector<8x384xf32> to vector<8x128xf32>
    %210 = arith.addf %208, %209 : vector<8x128xf32>
    %211 = arith.negf %210 : vector<8x128xf32>
    %212 = math.exp %211 : vector<8x128xf32>
    %cst_60 = arith.constant 1.000000e+00 : f32
    %213 = vector.broadcast %cst_60 : f32 to vector<8x128xf32>
    %214 = arith.addf %213, %212 : vector<8x128xf32>
    %215 = arith.divf %213, %214 : vector<8x128xf32>
    %216 = vector.extract_strided_slice %205 {offsets = [0, 128], sizes = [8, 128], strides = [1, 1]} : vector<8x384xf32> to vector<8x128xf32>
    %217 = vector.extract_strided_slice %207 {offsets = [0, 128], sizes = [8, 128], strides = [1, 1]} : vector<8x384xf32> to vector<8x128xf32>
    %218 = arith.addf %216, %217 : vector<8x128xf32>
    %219 = arith.negf %218 : vector<8x128xf32>
    %220 = math.exp %219 : vector<8x128xf32>
    %cst_61 = arith.constant 1.000000e+00 : f32
    %221 = vector.broadcast %cst_61 : f32 to vector<8x128xf32>
    %222 = arith.addf %221, %220 : vector<8x128xf32>
    %223 = arith.divf %221, %222 : vector<8x128xf32>
    %224 = vector.extract_strided_slice %205 {offsets = [0, 256], sizes = [8, 128], strides = [1, 1]} : vector<8x384xf32> to vector<8x128xf32>
    %225 = vector.extract_strided_slice %207 {offsets = [0, 256], sizes = [8, 128], strides = [1, 1]} : vector<8x384xf32> to vector<8x128xf32>
    %226 = arith.addf %225, %16 : vector<8x128xf32>
    %227 = arith.mulf %215, %226 : vector<8x128xf32>
    %228 = arith.addf %224, %227 : vector<8x128xf32>
    %229 = math.tanh %228 : vector<8x128xf32>
    %cst_62 = arith.constant 1.000000e+00 : f32
    %230 = vector.broadcast %cst_62 : f32 to vector<8x128xf32>
    %231 = arith.subf %230, %223 : vector<8x128xf32>
    %232 = arith.mulf %231, %229 : vector<8x128xf32>
    %233 = arith.mulf %223, %197 : vector<8x128xf32>
    %234 = arith.addf %232, %233 : vector<8x128xf32>
    %235 = arith.truncf %234 : vector<8x128xf32> to vector<8x128xbf16>
    %236 = arith.index_cast %c5_i32 : i32 to index
    %c0_63 = arith.constant 0 : index
    %c0_64 = arith.constant 0 : index
    %237 = vector.load %arg7[%236, %c0_63, %c0_64] : memref<8x8x128xbf16, #tpu.memory_space<vmem>>, vector<1x8x128xbf16>
    %238 = vector.shape_cast %237 : vector<1x8x128xbf16> to vector<8x128xbf16>
    %239 = vector.shape_cast %235 : vector<8x128xbf16> to vector<1x8x128xbf16>
    tpu.vector_store %arg7[%236, %c0_63, %c0_64], %239 {strides = array<i32>} : memref<8x8x128xbf16, #tpu.memory_space<vmem>>, vector<1x8x128xbf16>,
    %c6_i32 = arith.constant 6 : i32
    %240 = arith.index_cast %c6_i32 : i32 to index
    %c0_65 = arith.constant 0 : index
    %c0_66 = arith.constant 0 : index
    %241 = vector.load %arg9[%240, %c0_65, %c0_66] : memref<8x8x384xf32, #tpu.memory_space<vmem>>, vector<1x8x384xf32>
    %242 = vector.shape_cast %241 : vector<1x8x384xf32> to vector<8x384xf32>
    %243 = arith.truncf %234 : vector<8x128xf32> to vector<8x128xbf16>
    %cst_67 = arith.constant dense<0.000000e+00> : vector<8x384xf32>
    %244 = tpu.matmul %243, %13, %cst_67 {dimension_numbers = #tpu.dot_dimension_numbers<[1], [0], [0], [1], [0, 0, 1, 1], [], []>} : vector<8x128xbf16>, vector<128x384xbf16>, vector<8x384xf32> -> vector<8x384xf32>
    %245 = vector.extract_strided_slice %242 {offsets = [0, 0], sizes = [8, 128], strides = [1, 1]} : vector<8x384xf32> to vector<8x128xf32>
    %246 = vector.extract_strided_slice %244 {offsets = [0, 0], sizes = [8, 128], strides = [1, 1]} : vector<8x384xf32> to vector<8x128xf32>
    %247 = arith.addf %245, %246 : vector<8x128xf32>
    %248 = arith.negf %247 : vector<8x128xf32>
    %249 = math.exp %248 : vector<8x128xf32>
    %cst_68 = arith.constant 1.000000e+00 : f32
    %250 = vector.broadcast %cst_68 : f32 to vector<8x128xf32>
    %251 = arith.addf %250, %249 : vector<8x128xf32>
    %252 = arith.divf %250, %251 : vector<8x128xf32>
    %253 = vector.extract_strided_slice %242 {offsets = [0, 128], sizes = [8, 128], strides = [1, 1]} : vector<8x384xf32> to vector<8x128xf32>
    %254 = vector.extract_strided_slice %244 {offsets = [0, 128], sizes = [8, 128], strides = [1, 1]} : vector<8x384xf32> to vector<8x128xf32>
    %255 = arith.addf %253, %254 : vector<8x128xf32>
    %256 = arith.negf %255 : vector<8x128xf32>
    %257 = math.exp %256 : vector<8x128xf32>
    %cst_69 = arith.constant 1.000000e+00 : f32
    %258 = vector.broadcast %cst_69 : f32 to vector<8x128xf32>
    %259 = arith.addf %258, %257 : vector<8x128xf32>
    %260 = arith.divf %258, %259 : vector<8x128xf32>
    %261 = vector.extract_strided_slice %242 {offsets = [0, 256], sizes = [8, 128], strides = [1, 1]} : vector<8x384xf32> to vector<8x128xf32>
    %262 = vector.extract_strided_slice %244 {offsets = [0, 256], sizes = [8, 128], strides = [1, 1]} : vector<8x384xf32> to vector<8x128xf32>
    %263 = arith.addf %262, %16 : vector<8x128xf32>
    %264 = arith.mulf %252, %263 : vector<8x128xf32>
    %265 = arith.addf %261, %264 : vector<8x128xf32>
    %266 = math.tanh %265 : vector<8x128xf32>
    %cst_70 = arith.constant 1.000000e+00 : f32
    %267 = vector.broadcast %cst_70 : f32 to vector<8x128xf32>
    %268 = arith.subf %267, %260 : vector<8x128xf32>
    %269 = arith.mulf %268, %266 : vector<8x128xf32>
    %270 = arith.mulf %260, %234 : vector<8x128xf32>
    %271 = arith.addf %269, %270 : vector<8x128xf32>
    %272 = arith.truncf %271 : vector<8x128xf32> to vector<8x128xbf16>
    %273 = arith.index_cast %c6_i32 : i32 to index
    %c0_71 = arith.constant 0 : index
    %c0_72 = arith.constant 0 : index
    %274 = vector.load %arg7[%273, %c0_71, %c0_72] : memref<8x8x128xbf16, #tpu.memory_space<vmem>>, vector<1x8x128xbf16>
    %275 = vector.shape_cast %274 : vector<1x8x128xbf16> to vector<8x128xbf16>
    %276 = vector.shape_cast %272 : vector<8x128xbf16> to vector<1x8x128xbf16>
    tpu.vector_store %arg7[%273, %c0_71, %c0_72], %276 {strides = array<i32>} : memref<8x8x128xbf16, #tpu.memory_space<vmem>>, vector<1x8x128xbf16>,
    %c7_i32 = arith.constant 7 : i32
    %277 = arith.index_cast %c7_i32 : i32 to index
    %c0_73 = arith.constant 0 : index
    %c0_74 = arith.constant 0 : index
    %278 = vector.load %arg9[%277, %c0_73, %c0_74] : memref<8x8x384xf32, #tpu.memory_space<vmem>>, vector<1x8x384xf32>
    %279 = vector.shape_cast %278 : vector<1x8x384xf32> to vector<8x384xf32>
    %280 = arith.truncf %271 : vector<8x128xf32> to vector<8x128xbf16>
    %cst_75 = arith.constant dense<0.000000e+00> : vector<8x384xf32>
    %281 = tpu.matmul %280, %13, %cst_75 {dimension_numbers = #tpu.dot_dimension_numbers<[1], [0], [0], [1], [0, 0, 1, 1], [], []>} : vector<8x128xbf16>, vector<128x384xbf16>, vector<8x384xf32> -> vector<8x384xf32>
    %282 = vector.extract_strided_slice %279 {offsets = [0, 0], sizes = [8, 128], strides = [1, 1]} : vector<8x384xf32> to vector<8x128xf32>
    %283 = vector.extract_strided_slice %281 {offsets = [0, 0], sizes = [8, 128], strides = [1, 1]} : vector<8x384xf32> to vector<8x128xf32>
    %284 = arith.addf %282, %283 : vector<8x128xf32>
    %285 = arith.negf %284 : vector<8x128xf32>
    %286 = math.exp %285 : vector<8x128xf32>
    %cst_76 = arith.constant 1.000000e+00 : f32
    %287 = vector.broadcast %cst_76 : f32 to vector<8x128xf32>
    %288 = arith.addf %287, %286 : vector<8x128xf32>
    %289 = arith.divf %287, %288 : vector<8x128xf32>
    %290 = vector.extract_strided_slice %279 {offsets = [0, 128], sizes = [8, 128], strides = [1, 1]} : vector<8x384xf32> to vector<8x128xf32>
    %291 = vector.extract_strided_slice %281 {offsets = [0, 128], sizes = [8, 128], strides = [1, 1]} : vector<8x384xf32> to vector<8x128xf32>
    %292 = arith.addf %290, %291 : vector<8x128xf32>
    %293 = arith.negf %292 : vector<8x128xf32>
    %294 = math.exp %293 : vector<8x128xf32>
    %cst_77 = arith.constant 1.000000e+00 : f32
    %295 = vector.broadcast %cst_77 : f32 to vector<8x128xf32>
    %296 = arith.addf %295, %294 : vector<8x128xf32>
    %297 = arith.divf %295, %296 : vector<8x128xf32>
    %298 = vector.extract_strided_slice %279 {offsets = [0, 256], sizes = [8, 128], strides = [1, 1]} : vector<8x384xf32> to vector<8x128xf32>
    %299 = vector.extract_strided_slice %281 {offsets = [0, 256], sizes = [8, 128], strides = [1, 1]} : vector<8x384xf32> to vector<8x128xf32>
    %300 = arith.addf %299, %16 : vector<8x128xf32>
    %301 = arith.mulf %289, %300 : vector<8x128xf32>
    %302 = arith.addf %298, %301 : vector<8x128xf32>
    %303 = math.tanh %302 : vector<8x128xf32>
    %cst_78 = arith.constant 1.000000e+00 : f32
    %304 = vector.broadcast %cst_78 : f32 to vector<8x128xf32>
    %305 = arith.subf %304, %297 : vector<8x128xf32>
    %306 = arith.mulf %305, %303 : vector<8x128xf32>
    %307 = arith.mulf %297, %271 : vector<8x128xf32>
    %308 = arith.addf %306, %307 : vector<8x128xf32>
    %309 = arith.truncf %308 : vector<8x128xf32> to vector<8x128xbf16>
    %310 = arith.index_cast %c7_i32 : i32 to index
    %c0_79 = arith.constant 0 : index
    %c0_80 = arith.constant 0 : index
    %311 = vector.load %arg7[%310, %c0_79, %c0_80] : memref<8x8x128xbf16, #tpu.memory_space<vmem>>, vector<1x8x128xbf16>
    %312 = vector.shape_cast %311 : vector<1x8x128xbf16> to vector<8x128xbf16>
    %313 = vector.shape_cast %309 : vector<8x128xbf16> to vector<1x8x128xbf16>
    tpu.vector_store %arg7[%310, %c0_79, %c0_80], %313 {strides = array<i32>} : memref<8x8x128xbf16, #tpu.memory_space<vmem>>, vector<1x8x128xbf16>,
    %c8_i32 = arith.constant 8 : i32
    %c0_81 = arith.constant 0 : index
    %c0_82 = arith.constant 0 : index
    %314 = vector.load %arg8[%c0_81, %c0_82] : memref<8x128xf32, #tpu.memory_space<vmem>>, vector<8x128xf32>
    tpu.vector_store %arg8[%c0_81, %c0_82], %308 {strides = array<i32>} : memref<8x128xf32, #tpu.memory_space<vmem>>, vector<8x128xf32>,
    return
  }
  func.func @transform_0(%arg0: i32, %arg1: i32) -> (i32, i32, i32) {
    %c0_i32 = arith.constant 0 : i32
    %c0_i32_0 = arith.constant 0 : i32
    return %arg1, %arg0, %c0_i32 : i32, i32, i32
  }
  func.func @transform_1(%arg0: i32, %arg1: i32) -> (i32, i32) {
    %c0_i32 = arith.constant 0 : i32
    %c0_i32_0 = arith.constant 0 : i32
    %c0_i32_1 = arith.constant 0 : i32
    return %c0_i32, %c0_i32_0 : i32, i32
  }
  func.func @transform_2(%arg0: i32, %arg1: i32) -> (i32, i32) {
    %c0_i32 = arith.constant 0 : i32
    %c0_i32_0 = arith.constant 0 : i32
    %c0_i32_1 = arith.constant 0 : i32
    return %c0_i32, %c0_i32_0 : i32, i32
  }
  func.func @transform_3(%arg0: i32, %arg1: i32) -> (i32, i32) {
    %c0_i32 = arith.constant 0 : i32
    %c0_i32_0 = arith.constant 0 : i32
    %c0_i32_1 = arith.constant 0 : i32
    return %c0_i32, %c0_i32_0 : i32, i32
  }
  func.func @transform_4(%arg0: i32, %arg1: i32) -> (i32, i32) {
    %c0_i32 = arith.constant 0 : i32
    %c0_i32_0 = arith.constant 0 : i32
    %c0_i32_1 = arith.constant 0 : i32
    return %c0_i32, %c0_i32_0 : i32, i32
  }
  func.func @transform_5(%arg0: i32, %arg1: i32) -> (i32, i32, i32) {
    %c0_i32 = arith.constant 0 : i32
    %c0_i32_0 = arith.constant 0 : i32
    return %arg1, %arg0, %c0_i32 : i32, i32, i32
  }
}

</mosaic_0001>

<llo_original>
// kernel: gru_model_forward.2
$region0: #{gru_model_forward.2}
  #allocation0 [shape = 'u32[]', space=smem, size = 0x4, offset = 0x4, fixed_abs, tag = 'smem constant byte address 0x4 - core index']
  #allocation1 [shape = 'u32[72,128]{1,0:T(1,128)}', space=vmem, size = 0x9000, scoped, tag = 'internal scratch']
  #allocation2 [shape = 'f32[8,128]{1,0:T(8,128)}', space=vmem, size = 0x1000, scoped, tag = 'scratch operand']
  #allocation3 [shape = 'f32[8,8,384]{2,1,0:T(8,128)}', space=vmem, size = 0x18000, scoped, tag = 'scratch operand']
  %s0 = inlined_call_operand.vmem [shape: f32[8,8,4], index: 0, kind: input, shape index: {}]
  %s1 = inlined_call_operand.vmem [shape: bf16[4,384], index: 1, kind: input, shape index: {}]
  %s2 = inlined_call_operand.hbm [shape: bf16[128,384], index: 2, kind: input, shape index: {}]
  %s3 = inlined_call_operand.vmem [shape: f32[1,384], index: 3, kind: input, shape index: {}]
  %s4 = inlined_call_operand.vmem [shape: f32[1,128], index: 4, kind: input, shape index: {}]
  %s5 = inlined_call_operand.vmem [shape: bf16[8,8,128], index: 5, kind: output, shape index: {}]
  %s6 = sld [smem:[#allocation0]]
  $region38: #{gru_model_forward.2} parent=0
    _
  %s8 = ssub.s32 1, %s6
  %s9 = scalar_select 0, %s8, %s6
  $region1: #{gru_model_forward.2} parent=0
    #allocation4 [shape = 'u8[98304]{0}', space=vmem, size = 0x18000, scoped, tag = 'input window, operand 2, single buffered']
    #allocation5 [shape = 's32[1]{0}', space=sflag, size = 0x4, scoped, tag = 'scoped memory for gru_model_forward.2']
    %10 = vsyncpa [#allocation5], 0
    // Predicated region
    $region2: #{gru_model_forward.2} parent=1 // pred_check
      _
    $region3: #{gru_model_forward.2} parent=1 // pred_check_branch
      %12 = sbr.rel (0) target = $region5
    $region4: #{gru_model_forward.2} parent=1 // pred_region
      _
    $region5: #{gru_model_forward.2} parent=1 // pred_fallthru
      _
    // Predicated region
    $region6: #{gru_model_forward.2} parent=1 // pred_check
      _
    $region7: #{gru_model_forward.2} parent=1 // pred_check_branch
      %14 = sbr.rel (0) target = $region9
    $region8: #{gru_model_forward.2} parent=1 // pred_region
      _
    $region9: #{gru_model_forward.2} parent=1 // pred_fallthru
      _
    // Predicated region
    $region10: #{gru_model_forward.2} parent=1 // pred_check
      _
    $region11: #{gru_model_forward.2} parent=1 // pred_check_branch
      %16 = sbr.rel (0) target = $region13
    $region12: #{gru_model_forward.2} parent=1 // pred_region
      %18 = vsyncadd [#allocation5], 0
      %s19 = sshll.u32 %s2, 4
      %s20 = int_to_ptr.hbm [resolvable:$true] %s19
      %s21 = sshll.u32 [#allocation4], 4
      %s22 = int_to_ptr.vmem [resolvable:$true] %s21
      %27 = dma.hbm_to_vmem [thread:$0]  %s20, 3072, %s22, [#allocation5], 192, 192, 12
    $region13: #{gru_model_forward.2} parent=1 // pred_fallthru
      _
    // Predicated region
    $region14: #{gru_model_forward.2} parent=1 // pred_check
      _
    $region15: #{gru_model_forward.2} parent=1 // pred_check_branch
      %29 = sbr.rel (0) target = $region17
    $region16: #{gru_model_forward.2} parent=1 // pred_region
      _
    $region17: #{gru_model_forward.2} parent=1 // pred_fallthru
      _
    // Predicated region
    $region18: #{gru_model_forward.2} parent=1 // pred_check
      _
    $region19: #{gru_model_forward.2} parent=1 // pred_check_branch
      %31 = sbr.rel (0) target = $region21
    $region20: #{gru_model_forward.2} parent=1 // pred_region
      _
    $region21: #{gru_model_forward.2} parent=1 // pred_fallthru
      _
    // Predicated region
    $region22: #{gru_model_forward.2} parent=1 // pred_check
      _
    $region23: #{gru_model_forward.2} parent=1 // pred_check_branch
      %33 = sbr.rel (0) target = $region25
    $region24: #{gru_model_forward.2} parent=1 // pred_region
      %35 = dma.done [#allocation5], 3072
    $region25: #{gru_model_forward.2} parent=1 // pred_fallthru
      _
    %p37 = scmp.eq.s32.totalorder 0, 0
    // Predicated region
    $region26: #{gru_model_forward.2} parent=1 // pred_check
      %p38 = pneg %p37
    $region27: #{gru_model_forward.2} parent=1 // pred_check_branch
      %40 = sbr.rel (%p38) target = $region29
    $region28: #{gru_model_forward.2} parent=1 // pred_region
      %41 = vst [vmem:[#allocation2] sm:$0xff] 0.0
    $region29: #{gru_model_forward.2} parent=1 // pred_fallthru
      _
    %v42 = vld [vmem:[%s0] sm:$0xff]
    %v43 = vld [vmem:[%s0 + $0x8] sm:$0xff]
    %v44 = vld [vmem:[%s0 + $0x10] sm:$0xff]
    %v45 = vld [vmem:[%s0 + $0x18] sm:$0xff]
    %v46 = vld [vmem:[%s0 + $0x20] sm:$0xff]
    %v47 = vld [vmem:[%s0 + $0x28] sm:$0xff]
    %v48 = vld [vmem:[%s0 + $0x30] sm:$0xff]
    %v49 = vld [vmem:[%s0 + $0x38] sm:$0xff]
    %v50 = vpack.c.bf16 %v43, %v42
    %v51 = vpack.c.bf16 %v45, %v44
    %v52 = vpack.c.bf16 %v47, %v46
    %v53 = vpack.c.bf16 %v49, %v48
    %v54 = vld [vmem:[%s1] sm:$0x3f]
    %v55 = vld [vmem:[%s3] sm:$0x7]
    %v57 = vperm.slane %v55, 0
    %v58 = vperm.slane %v55, 1
    %v59 = vperm.slane %v55, 2
    %64 = vst [vmem:[#allocation1] ss:$4 sm:$0xff] %v54
    %v65 = vld.sshfl [vmem:[#allocation1] sm:$0xff pattern:$0x73625140]
    %v66 = vld.sshfl [vmem:[#allocation1 + $0x8] sm:$0xff pattern:$0x73625140]
    %v67 = vld.sshfl [vmem:[#allocation1 + $0x10] sm:$0xff pattern:$0x73625140]
    %vm68 = vcmask 31744
    %v70 = vsel %vm68, %v50, 0
    %v73 = vsel %vm68, %v51, 0
    %v76 = vsel %vm68, %v52, 0
    %v79 = vsel %vm68, %v53, 0
    %vm81 = vcmask 1041408
    %v82 = vsel %vm81, %v65, 0
    %v84 = vsel %vm81, %v66, 0
    %v86 = vsel %vm81, %v67, 0
    %88 = vmatpush.bf16.msra.mxu0 0
    %89 = vmatpush.bf16.msra.mxu0 0
    %90 = vmatpush.bf16.msra.mxu0 0
    %91 = vmatpush.bf16.msra.mxu0 0
    %92 = vmatpush.bf16.msra.mxu0 0
    %93 = vmatpush.bf16.msra.mxu0 0
    %94 = vmatpush.bf16.msra.mxu0 0
    %95 = vmatpush.bf16.msra.mxu0 %v82
    %96 = vmatmul.bf16.gmra.mxu0 %v70
    %v97 = vpop.f32.mrf.mxu0
    %v98 = vadd.f32 %v57, %v97
    %v99 = vpop.f32.mrf.mxu0
    %v100 = vadd.f32 %v57, %v99
    %101 = vmatmul.bf16.gmra.mxu0 %v73
    %v102 = vpop.f32.mrf.mxu0
    %v103 = vadd.f32 %v57, %v102
    %v104 = vpop.f32.mrf.mxu0
    %v105 = vadd.f32 %v57, %v104
    %106 = vmatmul.bf16.gmra.mxu0 %v76
    %v107 = vpop.f32.mrf.mxu0
    %v108 = vadd.f32 %v57, %v107
    %v109 = vpop.f32.mrf.mxu0
    %v110 = vadd.f32 %v57, %v109
    %111 = vmatmul.bf16.gmra.mxu0 %v79
    %v112 = vpop.f32.mrf.mxu0
    %v113 = vadd.f32 %v57, %v112
    %v114 = vpop.f32.mrf.mxu0
    %v115 = vadd.f32 %v57, %v114
    %116 = vdwg.mxu0
    %117 = vmatpush.bf16.msra.mxu0 0
    %118 = vmatpush.bf16.msra.mxu0 0
    %119 = vmatpush.bf16.msra.mxu0 0
    %120 = vmatpush.bf16.msra.mxu0 0
    %121 = vmatpush.bf16.msra.mxu0 0
    %122 = vmatpush.bf16.msra.mxu0 0
    %123 = vmatpush.bf16.msra.mxu0 0
    %124 = vmatpush.bf16.msra.mxu0 %v84
    %125 = vmatmul.bf16.gmra.mxu0 %v70
    %v126 = vpop.f32.mrf.mxu0
    %v127 = vadd.f32 %v58, %v126
    %v128 = vpop.f32.mrf.mxu0
    %v129 = vadd.f32 %v58, %v128
    %130 = vmatmul.bf16.gmra.mxu0 %v73
    %v131 = vpop.f32.mrf.mxu0
    %v132 = vadd.f32 %v58, %v131
    %v133 = vpop.f32.mrf.mxu0
    %v134 = vadd.f32 %v58, %v133
    %135 = vmatmul.bf16.gmra.mxu0 %v76
    %v136 = vpop.f32.mrf.mxu0
    %v137 = vadd.f32 %v58, %v136
    %v138 = vpop.f32.mrf.mxu0
    %v139 = vadd.f32 %v58, %v138
    %140 = vmatmul.bf16.gmra.mxu0 %v79
    %v141 = vpop.f32.mrf.mxu0
    %v142 = vadd.f32 %v58, %v141
    %v143 = vpop.f32.mrf.mxu0
    %v144 = vadd.f32 %v58, %v143
    %145 = vdwg.mxu0
    %146 = vmatpush.bf16.msra.mxu0 0
    %147 = vmatpush.bf16.msra.mxu0 0
    %148 = vmatpush.bf16.msra.mxu0 0
    %149 = vmatpush.bf16.msra.mxu0 0
    %150 = vmatpush.bf16.msra.mxu0 0
    %151 = vmatpush.bf16.msra.mxu0 0
    %152 = vmatpush.bf16.msra.mxu0 0
    %153 = vmatpush.bf16.msra.mxu0 %v86
    %154 = vmatmul.bf16.gmra.mxu0 %v70
    %v155 = vpop.f32.mrf.mxu0
    %v156 = vadd.f32 %v59, %v155
    %v157 = vpop.f32.mrf.mxu0
    %v158 = vadd.f32 %v59, %v157
    %159 = vmatmul.bf16.gmra.mxu0 %v73
    %v160 = vpop.f32.mrf.mxu0
    %v161 = vadd.f32 %v59, %v160
    %v162 = vpop.f32.mrf.mxu0
    %v163 = vadd.f32 %v59, %v162
    %164 = vmatmul.bf16.gmra.mxu0 %v76
    %v165 = vpop.f32.mrf.mxu0
    %v166 = vadd.f32 %v59, %v165
    %v167 = vpop.f32.mrf.mxu0
    %v168 = vadd.f32 %v59, %v167
    %169 = vmatmul.bf16.gmra.mxu0 %v79
    %v170 = vpop.f32.mrf.mxu0
    %v171 = vadd.f32 %v59, %v170
    %v172 = vpop.f32.mrf.mxu0
    %v173 = vadd.f32 %v59, %v172
    %174 = vdwg.mxu0
    %175 = vst [vmem:[#allocation3] sm:$0xff] %v98
    %176 = vst [vmem:[#allocation3 + $0x8] sm:$0xff] %v127
    %177 = vst [vmem:[#allocation3 + $0x10] sm:$0xff] %v156
    %178 = vst [vmem:[#allocation3 + $0x18] sm:$0xff] %v100
    %179 = vst [vmem:[#allocation3 + $0x20] sm:$0xff] %v129
    %180 = vst [vmem:[#allocation3 + $0x28] sm:$0xff] %v158
    %181 = vst [vmem:[#allocation3 + $0x30] sm:$0xff] %v103
    %182 = vst [vmem:[#allocation3 + $0x38] sm:$0xff] %v132
    %183 = vst [vmem:[#allocation3 + $0x40] sm:$0xff] %v161
    %184 = vst [vmem:[#allocation3 + $0x48] sm:$0xff] %v105
    %185 = vst [vmem:[#allocation3 + $0x50] sm:$0xff] %v134
    %186 = vst [vmem:[#allocation3 + $0x58] sm:$0xff] %v163
    %187 = vst [vmem:[#allocation3 + $0x60] sm:$0xff] %v108
    %188 = vst [vmem:[#allocation3 + $0x68] sm:$0xff] %v137
    %189 = vst [vmem:[#allocation3 + $0x70] sm:$0xff] %v166
    %190 = vst [vmem:[#allocation3 + $0x78] sm:$0xff] %v110
    %191 = vst [vmem:[#allocation3 + $0x80] sm:$0xff] %v139
    %192 = vst [vmem:[#allocation3 + $0x88] sm:$0xff] %v168
    %193 = vst [vmem:[#allocation3 + $0x90] sm:$0xff] %v113
    %194 = vst [vmem:[#allocation3 + $0x98] sm:$0xff] %v142
    %195 = vst [vmem:[#allocation3 + $0xa0] sm:$0xff] %v171
    %196 = vst [vmem:[#allocation3 + $0xa8] sm:$0xff] %v115
    %197 = vst [vmem:[#allocation3 + $0xb0] sm:$0xff] %v144
    %198 = vst [vmem:[#allocation3 + $0xb8] sm:$0xff] %v173
    %v199 = vld [vmem:[#allocation4] sm:$0xff]
    %v200 = vld [vmem:[#allocation4 + $0x8] sm:$0xf]
    %v201 = vld [vmem:[#allocation4 + $0xc] sm:$0xff]
    %v202 = vld [vmem:[#allocation4 + $0x14] sm:$0xf]
    %v203 = vld [vmem:[#allocation4 + $0x18] sm:$0xff]
    %v204 = vld [vmem:[#allocation4 + $0x20] sm:$0xf]
    %v205 = vld [vmem:[#allocation4 + $0x24] sm:$0xff]
    %v206 = vld [vmem:[#allocation4 + $0x2c] sm:$0xf]
    %v207 = vld [vmem:[#allocation4 + $0x30] sm:$0xff]
    %v208 = vld [vmem:[#allocation4 + $0x38] sm:$0xf]
    %v209 = vld [vmem:[#allocation4 + $0x3c] sm:$0xff]
    %v210 = vld [vmem:[#allocation4 + $0x44] sm:$0xf]
    %v211 = vld [vmem:[#allocation4 + $0x48] sm:$0xff]
    %v212 = vld [vmem:[#allocation4 + $0x50] sm:$0xf]
    %v213 = vld [vmem:[#allocation4 + $0x54] sm:$0xff]
    %v214 = vld [vmem:[#allocation4 + $0x5c] sm:$0xf]
    %v215 = vld [vmem:[#allocation4 + $0x60] sm:$0xff]
    %v216 = vld [vmem:[#allocation4 + $0x68] sm:$0xf]
    %v217 = vld [vmem:[#allocation4 + $0x6c] sm:$0xff]
    %v218 = vld [vmem:[#allocation4 + $0x74] sm:$0xf]
    %v219 = vld [vmem:[#allocation4 + $0x78] sm:$0xff]
    %v220 = vld [vmem:[#allocation4 + $0x80] sm:$0xf]
    %v221 = vld [vmem:[#allocation4 + $0x84] sm:$0xff]
    %v222 = vld [vmem:[#allocation4 + $0x8c] sm:$0xf]
    %v223 = vld [vmem:[#allocation4 + $0x90] sm:$0xff]
    %v224 = vld [vmem:[#allocation4 + $0x98] sm:$0xf]
    %v225 = vld [vmem:[#allocation4 + $0x9c] sm:$0xff]
    %v226 = vld [vmem:[#allocation4 + $0xa4] sm:$0xf]
    %v227 = vld [vmem:[#allocation4 + $0xa8] sm:$0xff]
    %v228 = vld [vmem:[#allocation4 + $0xb0] sm:$0xf]
    %v229 = vld [vmem:[#allocation4 + $0xb4] sm:$0xff]
    %v230 = vld [vmem:[#allocation4 + $0xbc] sm:$0xf]
    %v231 = vld [vmem:[%s4] sm:$0x1]
    %v233 = vperm.slane %v231, 0
    %v235 = vld [vmem:[#allocation2] sm:$0xff]
    %v236 = vld [vmem:[#allocation3] sm:$0xff]
    %v237 = vld [vmem:[#allocation3 + $0x8] sm:$0xff]
    %v238 = vld [vmem:[#allocation3 + $0x10] sm:$0xff]
    %v239 = vpack.c.bf16 %v235, %v235
    %v272 = vunpack.c.l.b16 %v199
    %v273 = vunpack.c.h.b16 %v199
    %v274 = vunpack.c.l.b16 %v200
    %v275 = vunpack.c.l.b16 %v201
    %v276 = vunpack.c.h.b16 %v201
    %v277 = vunpack.c.l.b16 %v202
    %v278 = vunpack.c.l.b16 %v203
    %v279 = vunpack.c.h.b16 %v203
    %v280 = vunpack.c.l.b16 %v204
    %v281 = vunpack.c.l.b16 %v205
    %v282 = vunpack.c.h.b16 %v205
    %v283 = vunpack.c.l.b16 %v206
    %v284 = vunpack.c.l.b16 %v207
    %v285 = vunpack.c.h.b16 %v207
    %v286 = vunpack.c.l.b16 %v208
    %v287 = vunpack.c.l.b16 %v209
    %v288 = vunpack.c.h.b16 %v209
    %v289 = vunpack.c.l.b16 %v210
    %v290 = vunpack.c.l.b16 %v211
    %v291 = vunpack.c.h.b16 %v211
    %v292 = vunpack.c.l.b16 %v212
    %v293 = vunpack.c.l.b16 %v213
    %v294 = vunpack.c.h.b16 %v213
    %v295 = vunpack.c.l.b16 %v214
    %v296 = vunpack.c.l.b16 %v215
    %v297 = vunpack.c.h.b16 %v215
    %v298 = vunpack.c.l.b16 %v216
    %v299 = vunpack.c.l.b16 %v217
    %v300 = vunpack.c.h.b16 %v217
    %v301 = vunpack.c.l.b16 %v218
    %v302 = vunpack.c.l.b16 %v219
    %v303 = vunpack.c.h.b16 %v219
    %v304 = vunpack.c.l.b16 %v220
    %v305 = vunpack.c.l.b16 %v221
    %v306 = vunpack.c.h.b16 %v221
    %v307 = vunpack.c.l.b16 %v222
    %v308 = vunpack.c.l.b16 %v223
    %v309 = vunpack.c.h.b16 %v223
    %v310 = vunpack.c.l.b16 %v224
    %v311 = vunpack.c.l.b16 %v225
    %v312 = vunpack.c.h.b16 %v225
    %v313 = vunpack.c.l.b16 %v226
    %v314 = vunpack.c.l.b16 %v227
    %v315 = vunpack.c.h.b16 %v227
    %v316 = vunpack.c.l.b16 %v228
    %v317 = vunpack.c.l.b16 %v229
    %v318 = vunpack.c.h.b16 %v229
    %v319 = vunpack.c.l.b16 %v230
    %v320 = vpack.c.b16 %v275, %v272
    %v321 = vpack.c.b16 %v276, %v273
    %v322 = vpack.c.b16 %v277, %v274
    %v323 = vpack.c.b16 %v281, %v278
    %v324 = vpack.c.b16 %v282, %v279
    %v325 = vpack.c.b16 %v283, %v280
    %v326 = vpack.c.b16 %v287, %v284
    %v327 = vpack.c.b16 %v288, %v285
    %v328 = vpack.c.b16 %v289, %v286
    %v329 = vpack.c.b16 %v293, %v290
    %v330 = vpack.c.b16 %v294, %v291
    %v331 = vpack.c.b16 %v295, %v292
    %v332 = vpack.c.b16 %v299, %v296
    %v333 = vpack.c.b16 %v300, %v297
    %v334 = vpack.c.b16 %v301, %v298
    %v335 = vpack.c.b16 %v305, %v302
    %v336 = vpack.c.b16 %v306, %v303
    %v337 = vpack.c.b16 %v307, %v304
    %v338 = vpack.c.b16 %v311, %v308
    %v339 = vpack.c.b16 %v312, %v309
    %v340 = vpack.c.b16 %v313, %v310
    %v341 = vpack.c.b16 %v317, %v314
    %v342 = vpack.c.b16 %v318, %v315
    %v343 = vpack.c.b16 %v319, %v316
    %368 = vmatpush.bf16.msra.mxu0 %v341
    %369 = vmatpush.bf16.msra.mxu0 %v338
    %370 = vmatpush.bf16.msra.mxu0 %v335
    %371 = vmatpush.bf16.msra.mxu0 %v332
    %372 = vmatpush.bf16.msra.mxu0 %v329
    %373 = vmatpush.bf16.msra.mxu0 %v326
    %374 = vmatpush.bf16.msra.mxu0 %v323
    %375 = vmatpush.bf16.msra.mxu0 %v320
    %376 = vmatmul.bf16.gmra.mxu0 %v239
    %v377 = vpop.f32.mrf.mxu0
    %v378 = vadd.f32 0.0, %v377
    %v379 = vpop.f32.mrf.mxu0
    %380 = vdwg.mxu0
    %381 = vmatpush.bf16.msra.mxu0 %v342
    %382 = vmatpush.bf16.msra.mxu0 %v339
    %383 = vmatpush.bf16.msra.mxu0 %v336
    %384 = vmatpush.bf16.msra.mxu0 %v333
    %385 = vmatpush.bf16.msra.mxu0 %v330
    %386 = vmatpush.bf16.msra.mxu0 %v327
    %387 = vmatpush.bf16.msra.mxu0 %v324
    %388 = vmatpush.bf16.msra.mxu0 %v321
    %389 = vmatmul.bf16.gmra.mxu0 %v239
    %v390 = vpop.f32.mrf.mxu0
    %v391 = vadd.f32 0.0, %v390
    %v392 = vpop.f32.mrf.mxu0
    %393 = vdwg.mxu0
    %394 = vmatpush.bf16.msra.mxu0 %v343
    %395 = vmatpush.bf16.msra.mxu0 %v340
    %396 = vmatpush.bf16.msra.mxu0 %v337
    %397 = vmatpush.bf16.msra.mxu0 %v334
    %398 = vmatpush.bf16.msra.mxu0 %v331
    %399 = vmatpush.bf16.msra.mxu0 %v328
    %400 = vmatpush.bf16.msra.mxu0 %v325
    %401 = vmatpush.bf16.msra.mxu0 %v322
    %402 = vmatmul.bf16.gmra.mxu0 %v239
    %v403 = vpop.f32.mrf.mxu0
    %v404 = vadd.f32 0.0, %v403
    %v405 = vpop.f32.mrf.mxu0
    %406 = vdwg.mxu0
    %v407 = vadd.f32 %v236, %v378
    %v408 = vxor.u32 %v407, 2147483648
    %v409 = vmul.f32 %v408, 1.442695
    %v410 = vpow.pop %v409
    %v411 = vadd.f32 %v410, 1.0
    %v412 = vrcp.pop %v411
    %v413 = vmul.f32 %v411, %v412
    %v414 = vsub.f32 1.0, %v413
    %v415 = vmul.f32 %v412, %v414
    %v416 = vadd.f32 %v412, %v415
    %vm417 = vweird.f32 %v411
    %vm418 = vweird.f32 %v412
    %vm419 = vmor %vm417, %vm418
    %v420 = vsel %vm419, %v412, %v416
    %v421 = vand.u32 2147483647, %v411
    %vm422 = vcmp.eq.f32.partialorder %v421, 8.507059e+37
    %v423 = vand.u32 %v411, 2147483648
    %v424 = vor.u32 1.1754944e-38, %v423
    %v425 = vsel %vm422, %v424, %v420
    %v426 = vmul.f32 1.0, %v425
    %v427 = vadd.f32 %v237, %v391
    %v428 = vxor.u32 %v427, 2147483648
    %v429 = vmul.f32 %v428, 1.442695
    %v430 = vpow.pop %v429
    %v431 = vadd.f32 %v430, 1.0
    %v432 = vrcp.pop %v431
    %v433 = vmul.f32 %v431, %v432
    %v434 = vsub.f32 1.0, %v433
    %v435 = vmul.f32 %v432, %v434
    %v436 = vadd.f32 %v432, %v435
    %vm437 = vweird.f32 %v431
    %vm438 = vweird.f32 %v432
    %vm439 = vmor %vm437, %vm438
    %v440 = vsel %vm439, %v432, %v436
    %v441 = vand.u32 2147483647, %v431
    %vm442 = vcmp.eq.f32.partialorder %v441, 8.507059e+37
    %v443 = vand.u32 %v431, 2147483648
    %v444 = vor.u32 1.1754944e-38, %v443
    %v445 = vsel %vm442, %v444, %v440
    %v446 = vmul.f32 1.0, %v445
    %v447 = vadd.f32 %v404, %v233
    %v448 = vmul.f32 %v426, %v447
    %v449 = vadd.f32 %v238, %v448
    %v450 = vtanh.pop %v449
    %v451 = vsub.f32 1.0, %v446
    %v452 = vmul.f32 %v451, %v450
    %v453 = vmul.f32 %v446, %v235
    %v454 = vadd.f32 %v452, %v453
    %v455 = vpack.c.bf16 %v454, %v454
    %456 = vst [vmem:[%s5] sm:$0xf] %v455
    %s457 = scalar_lea.vmem [#allocation3], 24
    %v458 = vld [vmem:[%s457] sm:$0xff]
    %v459 = vld [vmem:[%s457 + $0x8] sm:$0xff]
    %v460 = vld [vmem:[%s457 + $0x10] sm:$0xff]
    %461 = vmatpush.bf16.msra.mxu0 %v341
    %462 = vmatpush.bf16.msra.mxu0 %v338
    %463 = vmatpush.bf16.msra.mxu0 %v335
    %464 = vmatpush.bf16.msra.mxu0 %v332
    %465 = vmatpush.bf16.msra.mxu0 %v329
    %466 = vmatpush.bf16.msra.mxu0 %v326
    %467 = vmatpush.bf16.msra.mxu0 %v323
    %468 = vmatpush.bf16.msra.mxu0 %v320
    %469 = vmatmul.bf16.gmra.mxu0 %v455
    %v470 = vpop.f32.mrf.mxu0
    %v471 = vadd.f32 0.0, %v470
    %v472 = vpop.f32.mrf.mxu0
    %473 = vdwg.mxu0
    %474 = vmatpush.bf16.msra.mxu0 %v342
    %475 = vmatpush.bf16.msra.mxu0 %v339
    %476 = vmatpush.bf16.msra.mxu0 %v336
    %477 = vmatpush.bf16.msra.mxu0 %v333
    %478 = vmatpush.bf16.msra.mxu0 %v330
    %479 = vmatpush.bf16.msra.mxu0 %v327
    %480 = vmatpush.bf16.msra.mxu0 %v324
    %481 = vmatpush.bf16.msra.mxu0 %v321
    %482 = vmatmul.bf16.gmra.mxu0 %v455
    %v483 = vpop.f32.mrf.mxu0
    %v484 = vadd.f32 0.0, %v483
    %v485 = vpop.f32.mrf.mxu0
    %486 = vdwg.mxu0
    %487 = vmatpush.bf16.msra.mxu0 %v343
    %488 = vmatpush.bf16.msra.mxu0 %v340
    %489 = vmatpush.bf16.msra.mxu0 %v337
    %490 = vmatpush.bf16.msra.mxu0 %v334
    %491 = vmatpush.bf16.msra.mxu0 %v331
    %492 = vmatpush.bf16.msra.mxu0 %v328
    %493 = vmatpush.bf16.msra.mxu0 %v325
    %494 = vmatpush.bf16.msra.mxu0 %v322
    %495 = vmatmul.bf16.gmra.mxu0 %v455
    %v496 = vpop.f32.mrf.mxu0
    %v497 = vadd.f32 0.0, %v496
    %v498 = vpop.f32.mrf.mxu0
    %499 = vdwg.mxu0
    %v500 = vadd.f32 %v458, %v471
    %v501 = vxor.u32 %v500, 2147483648
    %v502 = vmul.f32 %v501, 1.442695
    %v503 = vpow.pop %v502
    %v504 = vadd.f32 %v503, 1.0
    %v505 = vrcp.pop %v504
    %v506 = vmul.f32 %v504, %v505
    %v507 = vsub.f32 1.0, %v506
    %v508 = vmul.f32 %v505, %v507
    %v509 = vadd.f32 %v505, %v508
    %vm510 = vweird.f32 %v504
    %vm511 = vweird.f32 %v505
    %vm512 = vmor %vm510, %vm511
    %v513 = vsel %vm512, %v505, %v509
    %v514 = vand.u32 2147483647, %v504
    %vm515 = vcmp.eq.f32.partialorder %v514, 8.507059e+37
    %v516 = vand.u32 %v504, 2147483648
    %v517 = vor.u32 1.1754944e-38, %v516
    %v518 = vsel %vm515, %v517, %v513
    %v519 = vmul.f32 1.0, %v518
    %v520 = vadd.f32 %v459, %v484
    %v521 = vxor.u32 %v520, 2147483648
    %v522 = vmul.f32 %v521, 1.442695
    %v523 = vpow.pop %v522
    %v524 = vadd.f32 %v523, 1.0
    %v525 = vrcp.pop %v524
    %v526 = vmul.f32 %v524, %v525
    %v527 = vsub.f32 1.0, %v526
    %v528 = vmul.f32 %v525, %v527
    %v529 = vadd.f32 %v525, %v528
    %vm530 = vweird.f32 %v524
    %vm531 = vweird.f32 %v525
    %vm532 = vmor %vm530, %vm531
    %v533 = vsel %vm532, %v525, %v529
    %v534 = vand.u32 2147483647, %v524
    %vm535 = vcmp.eq.f32.partialorder %v534, 8.507059e+37
    %v536 = vand.u32 %v524, 2147483648
    %v537 = vor.u32 1.1754944e-38, %v536
    %v538 = vsel %vm535, %v537, %v533
    %v539 = vmul.f32 1.0, %v538
    %v540 = vadd.f32 %v497, %v233
    %v541 = vmul.f32 %v519, %v540
    %v542 = vadd.f32 %v460, %v541
    %v543 = vtanh.pop %v542
    %v544 = vsub.f32 1.0, %v539
    %v545 = vmul.f32 %v544, %v543
    %v546 = vmul.f32 %v539, %v454
    %v547 = vadd.f32 %v545, %v546
    %v548 = vpack.c.bf16 %v547, %v547
    %s549 = scalar_lea.vmem %s5, 4
    %550 = vst [vmem:[%s549] sm:$0xf] %v548
    %s551 = scalar_lea.vmem [#allocation3], 48
    %v552 = vld [vmem:[%s551] sm:$0xff]
    %v553 = vld [vmem:[%s551 + $0x8] sm:$0xff]
    %v554 = vld [vmem:[%s551 + $0x10] sm:$0xff]
    %555 = vmatpush.bf16.msra.mxu0 %v341
    %556 = vmatpush.bf16.msra.mxu0 %v338
    %557 = vmatpush.bf16.msra.mxu0 %v335
    %558 = vmatpush.bf16.msra.mxu0 %v332
    %559 = vmatpush.bf16.msra.mxu0 %v329
    %560 = vmatpush.bf16.msra.mxu0 %v326
    %561 = vmatpush.bf16.msra.mxu0 %v323
    %562 = vmatpush.bf16.msra.mxu0 %v320
    %563 = vmatmul.bf16.gmra.mxu0 %v548
    %v564 = vpop.f32.mrf.mxu0
    %v565 = vadd.f32 0.0, %v564
    %v566 = vpop.f32.mrf.mxu0
    %567 = vdwg.mxu0
    %568 = vmatpush.bf16.msra.mxu0 %v342
    %569 = vmatpush.bf16.msra.mxu0 %v339
    %570 = vmatpush.bf16.msra.mxu0 %v336
    %571 = vmatpush.bf16.msra.mxu0 %v333
    %572 = vmatpush.bf16.msra.mxu0 %v330
    %573 = vmatpush.bf16.msra.mxu0 %v327
    %574 = vmatpush.bf16.msra.mxu0 %v324
    %575 = vmatpush.bf16.msra.mxu0 %v321
    %576 = vmatmul.bf16.gmra.mxu0 %v548
    %v577 = vpop.f32.mrf.mxu0
    %v578 = vadd.f32 0.0, %v577
    %v579 = vpop.f32.mrf.mxu0
    %580 = vdwg.mxu0
    %581 = vmatpush.bf16.msra.mxu0 %v343
    %582 = vmatpush.bf16.msra.mxu0 %v340
    %583 = vmatpush.bf16.msra.mxu0 %v337
    %584 = vmatpush.bf16.msra.mxu0 %v334
    %585 = vmatpush.bf16.msra.mxu0 %v331
    %586 = vmatpush.bf16.msra.mxu0 %v328
    %587 = vmatpush.bf16.msra.mxu0 %v325
    %588 = vmatpush.bf16.msra.mxu0 %v322
    %589 = vmatmul.bf16.gmra.mxu0 %v548
    %v590 = vpop.f32.mrf.mxu0
    %v591 = vadd.f32 0.0, %v590
    %v592 = vpop.f32.mrf.mxu0
    %593 = vdwg.mxu0
    %v594 = vadd.f32 %v552, %v565
    %v595 = vxor.u32 %v594, 2147483648
    %v596 = vmul.f32 %v595, 1.442695
    %v597 = vpow.pop %v596
    %v598 = vadd.f32 %v597, 1.0
    %v599 = vrcp.pop %v598
    %v600 = vmul.f32 %v598, %v599
    %v601 = vsub.f32 1.0, %v600
    %v602 = vmul.f32 %v599, %v601
    %v603 = vadd.f32 %v599, %v602
    %vm604 = vweird.f32 %v598
    %vm605 = vweird.f32 %v599
    %vm606 = vmor %vm604, %vm605
    %v607 = vsel %vm606, %v599, %v603
    %v608 = vand.u32 2147483647, %v598
    %vm609 = vcmp.eq.f32.partialorder %v608, 8.507059e+37
    %v610 = vand.u32 %v598, 2147483648
    %v611 = vor.u32 1.1754944e-38, %v610
    %v612 = vsel %vm609, %v611, %v607
    %v613 = vmul.f32 1.0, %v612
    %v614 = vadd.f32 %v553, %v578
    %v615 = vxor.u32 %v614, 2147483648
    %v616 = vmul.f32 %v615, 1.442695
    %v617 = vpow.pop %v616
    %v618 = vadd.f32 %v617, 1.0
    %v619 = vrcp.pop %v618
    %v620 = vmul.f32 %v618, %v619
    %v621 = vsub.f32 1.0, %v620
    %v622 = vmul.f32 %v619, %v621
    %v623 = vadd.f32 %v619, %v622
    %vm624 = vweird.f32 %v618
    %vm625 = vweird.f32 %v619
    %vm626 = vmor %vm624, %vm625
    %v627 = vsel %vm626, %v619, %v623
    %v628 = vand.u32 2147483647, %v618
    %vm629 = vcmp.eq.f32.partialorder %v628, 8.507059e+37
    %v630 = vand.u32 %v618, 2147483648
    %v631 = vor.u32 1.1754944e-38, %v630
    %v632 = vsel %vm629, %v631, %v627
    %v633 = vmul.f32 1.0, %v632
    %v634 = vadd.f32 %v591, %v233
    %v635 = vmul.f32 %v613, %v634
    %v636 = vadd.f32 %v554, %v635
    %v637 = vtanh.pop %v636
    %v638 = vsub.f32 1.0, %v633
    %v639 = vmul.f32 %v638, %v637
    %v640 = vmul.f32 %v633, %v547
    %v641 = vadd.f32 %v639, %v640
    %v642 = vpack.c.bf16 %v641, %v641
    %s643 = scalar_lea.vmem %s5, 8
    %644 = vst [vmem:[%s643] sm:$0xf] %v642
    %s645 = scalar_lea.vmem [#allocation3], 72
    %v646 = vld [vmem:[%s645] sm:$0xff]
    %v647 = vld [vmem:[%s645 + $0x8] sm:$0xff]
    %v648 = vld [vmem:[%s645 + $0x10] sm:$0xff]
    %649 = vmatpush.bf16.msra.mxu0 %v341
    %650 = vmatpush.bf16.msra.mxu0 %v338
    %651 = vmatpush.bf16.msra.mxu0 %v335
    %652 = vmatpush.bf16.msra.mxu0 %v332
    %653 = vmatpush.bf16.msra.mxu0 %v329
    %654 = vmatpush.bf16.msra.mxu0 %v326
    %655 = vmatpush.bf16.msra.mxu0 %v323
    %656 = vmatpush.bf16.msra.mxu0 %v320
    %657 = vmatmul.bf16.gmra.mxu0 %v642
    %v658 = vpop.f32.mrf.mxu0
    %v659 = vadd.f32 0.0, %v658
    %v660 = vpop.f32.mrf.mxu0
    %661 = vdwg.mxu0
    %662 = vmatpush.bf16.msra.mxu0 %v342
    %663 = vmatpush.bf16.msra.mxu0 %v339
    %664 = vmatpush.bf16.msra.mxu0 %v336
    %665 = vmatpush.bf16.msra.mxu0 %v333
    %666 = vmatpush.bf16.msra.mxu0 %v330
    %667 = vmatpush.bf16.msra.mxu0 %v327
    %668 = vmatpush.bf16.msra.mxu0 %v324
    %669 = vmatpush.bf16.msra.mxu0 %v321
    %670 = vmatmul.bf16.gmra.mxu0 %v642
    %v671 = vpop.f32.mrf.mxu0
    %v672 = vadd.f32 0.0, %v671
    %v673 = vpop.f32.mrf.mxu0
    %674 = vdwg.mxu0
    %675 = vmatpush.bf16.msra.mxu0 %v343
    %676 = vmatpush.bf16.msra.mxu0 %v340
    %677 = vmatpush.bf16.msra.mxu0 %v337
    %678 = vmatpush.bf16.msra.mxu0 %v334
    %679 = vmatpush.bf16.msra.mxu0 %v331
    %680 = vmatpush.bf16.msra.mxu0 %v328
    %681 = vmatpush.bf16.msra.mxu0 %v325
    %682 = vmatpush.bf16.msra.mxu0 %v322
    %683 = vmatmul.bf16.gmra.mxu0 %v642
    %v684 = vpop.f32.mrf.mxu0
    %v685 = vadd.f32 0.0, %v684
    %v686 = vpop.f32.mrf.mxu0
    %687 = vdwg.mxu0
    %v688 = vadd.f32 %v646, %v659
    %v689 = vxor.u32 %v688, 2147483648
    %v690 = vmul.f32 %v689, 1.442695
    %v691 = vpow.pop %v690
    %v692 = vadd.f32 %v691, 1.0
    %v693 = vrcp.pop %v692
    %v694 = vmul.f32 %v692, %v693
    %v695 = vsub.f32 1.0, %v694
    %v696 = vmul.f32 %v693, %v695
    %v697 = vadd.f32 %v693, %v696
    %vm698 = vweird.f32 %v692
    %vm699 = vweird.f32 %v693
    %vm700 = vmor %vm698, %vm699
    %v701 = vsel %vm700, %v693, %v697
    %v702 = vand.u32 2147483647, %v692
    %vm703 = vcmp.eq.f32.partialorder %v702, 8.507059e+37
    %v704 = vand.u32 %v692, 2147483648
    %v705 = vor.u32 1.1754944e-38, %v704
    %v706 = vsel %vm703, %v705, %v701
    %v707 = vmul.f32 1.0, %v706
    %v708 = vadd.f32 %v647, %v672
    %v709 = vxor.u32 %v708, 2147483648
    %v710 = vmul.f32 %v709, 1.442695
    %v711 = vpow.pop %v710
    %v712 = vadd.f32 %v711, 1.0
    %v713 = vrcp.pop %v712
    %v714 = vmul.f32 %v712, %v713
    %v715 = vsub.f32 1.0, %v714
    %v716 = vmul.f32 %v713, %v715
    %v717 = vadd.f32 %v713, %v716
    %vm718 = vweird.f32 %v712
    %vm719 = vweird.f32 %v713
    %vm720 = vmor %vm718, %vm719
    %v721 = vsel %vm720, %v713, %v717
    %v722 = vand.u32 2147483647, %v712
    %vm723 = vcmp.eq.f32.partialorder %v722, 8.507059e+37
    %v724 = vand.u32 %v712, 2147483648
    %v725 = vor.u32 1.1754944e-38, %v724
    %v726 = vsel %vm723, %v725, %v721
    %v727 = vmul.f32 1.0, %v726
    %v728 = vadd.f32 %v685, %v233
    %v729 = vmul.f32 %v707, %v728
    %v730 = vadd.f32 %v648, %v729
    %v731 = vtanh.pop %v730
    %v732 = vsub.f32 1.0, %v727
    %v733 = vmul.f32 %v732, %v731
    %v734 = vmul.f32 %v727, %v641
    %v735 = vadd.f32 %v733, %v734
    %v736 = vpack.c.bf16 %v735, %v735
    %s737 = scalar_lea.vmem %s5, 12
    %738 = vst [vmem:[%s737] sm:$0xf] %v736
    %s739 = scalar_lea.vmem [#allocation3], 96
    %v740 = vld [vmem:[%s739] sm:$0xff]
    %v741 = vld [vmem:[%s739 + $0x8] sm:$0xff]
    %v742 = vld [vmem:[%s739 + $0x10] sm:$0xff]
    %743 = vmatpush.bf16.msra.mxu0 %v341
    %744 = vmatpush.bf16.msra.mxu0 %v338
    %745 = vmatpush.bf16.msra.mxu0 %v335
    %746 = vmatpush.bf16.msra.mxu0 %v332
    %747 = vmatpush.bf16.msra.mxu0 %v329
    %748 = vmatpush.bf16.msra.mxu0 %v326
    %749 = vmatpush.bf16.msra.mxu0 %v323
    %750 = vmatpush.bf16.msra.mxu0 %v320
    %751 = vmatmul.bf16.gmra.mxu0 %v736
    %v752 = vpop.f32.mrf.mxu0
    %v753 = vadd.f32 0.0, %v752
    %v754 = vpop.f32.mrf.mxu0
    %755 = vdwg.mxu0
    %756 = vmatpush.bf16.msra.mxu0 %v342
    %757 = vmatpush.bf16.msra.mxu0 %v339
    %758 = vmatpush.bf16.msra.mxu0 %v336
    %759 = vmatpush.bf16.msra.mxu0 %v333
    %760 = vmatpush.bf16.msra.mxu0 %v330
    %761 = vmatpush.bf16.msra.mxu0 %v327
    %762 = vmatpush.bf16.msra.mxu0 %v324
    %763 = vmatpush.bf16.msra.mxu0 %v321
    %764 = vmatmul.bf16.gmra.mxu0 %v736
    %v765 = vpop.f32.mrf.mxu0
    %v766 = vadd.f32 0.0, %v765
    %v767 = vpop.f32.mrf.mxu0
    %768 = vdwg.mxu0
    %769 = vmatpush.bf16.msra.mxu0 %v343
    %770 = vmatpush.bf16.msra.mxu0 %v340
    %771 = vmatpush.bf16.msra.mxu0 %v337
    %772 = vmatpush.bf16.msra.mxu0 %v334
    %773 = vmatpush.bf16.msra.mxu0 %v331
    %774 = vmatpush.bf16.msra.mxu0 %v328
    %775 = vmatpush.bf16.msra.mxu0 %v325
    %776 = vmatpush.bf16.msra.mxu0 %v322
    %777 = vmatmul.bf16.gmra.mxu0 %v736
    %v778 = vpop.f32.mrf.mxu0
    %v779 = vadd.f32 0.0, %v778
    %v780 = vpop.f32.mrf.mxu0
    %781 = vdwg.mxu0
    %v782 = vadd.f32 %v740, %v753
    %v783 = vxor.u32 %v782, 2147483648
    %v784 = vmul.f32 %v783, 1.442695
    %v785 = vpow.pop %v784
    %v786 = vadd.f32 %v785, 1.0
    %v787 = vrcp.pop %v786
    %v788 = vmul.f32 %v786, %v787
    %v789 = vsub.f32 1.0, %v788
    %v790 = vmul.f32 %v787, %v789
    %v791 = vadd.f32 %v787, %v790
    %vm792 = vweird.f32 %v786
    %vm793 = vweird.f32 %v787
    %vm794 = vmor %vm792, %vm793
    %v795 = vsel %vm794, %v787, %v791
    %v796 = vand.u32 2147483647, %v786
    %vm797 = vcmp.eq.f32.partialorder %v796, 8.507059e+37
    %v798 = vand.u32 %v786, 2147483648
    %v799 = vor.u32 1.1754944e-38, %v798
    %v800 = vsel %vm797, %v799, %v795
    %v801 = vmul.f32 1.0, %v800
    %v802 = vadd.f32 %v741, %v766
    %v803 = vxor.u32 %v802, 2147483648
    %v804 = vmul.f32 %v803, 1.442695
    %v805 = vpow.pop %v804
    %v806 = vadd.f32 %v805, 1.0
    %v807 = vrcp.pop %v806
    %v808 = vmul.f32 %v806, %v807
    %v809 = vsub.f32 1.0, %v808
    %v810 = vmul.f32 %v807, %v809
    %v811 = vadd.f32 %v807, %v810
    %vm812 = vweird.f32 %v806
    %vm813 = vweird.f32 %v807
    %vm814 = vmor %vm812, %vm813
    %v815 = vsel %vm814, %v807, %v811
    %v816 = vand.u32 2147483647, %v806
    %vm817 = vcmp.eq.f32.partialorder %v816, 8.507059e+37
    %v818 = vand.u32 %v806, 2147483648
    %v819 = vor.u32 1.1754944e-38, %v818
    %v820 = vsel %vm817, %v819, %v815
    %v821 = vmul.f32 1.0, %v820
    %v822 = vadd.f32 %v779, %v233
    %v823 = vmul.f32 %v801, %v822
    %v824 = vadd.f32 %v742, %v823
    %v825 = vtanh.pop %v824
    %v826 = vsub.f32 1.0, %v821
    %v827 = vmul.f32 %v826, %v825
    %v828 = vmul.f32 %v821, %v735
    %v829 = vadd.f32 %v827, %v828
    %v830 = vpack.c.bf16 %v829, %v829
    %s831 = scalar_lea.vmem %s5, 16
    %832 = vst [vmem:[%s831] sm:$0xf] %v830
    %s833 = scalar_lea.vmem [#allocation3], 120
    %v834 = vld [vmem:[%s833] sm:$0xff]
    %v835 = vld [vmem:[%s833 + $0x8] sm:$0xff]
    %v836 = vld [vmem:[%s833 + $0x10] sm:$0xff]
    %837 = vmatpush.bf16.msra.mxu0 %v341
    %838 = vmatpush.bf16.msra.mxu0 %v338
    %839 = vmatpush.bf16.msra.mxu0 %v335
    %840 = vmatpush.bf16.msra.mxu0 %v332
    %841 = vmatpush.bf16.msra.mxu0 %v329
    %842 = vmatpush.bf16.msra.mxu0 %v326
    %843 = vmatpush.bf16.msra.mxu0 %v323
    %844 = vmatpush.bf16.msra.mxu0 %v320
    %845 = vmatmul.bf16.gmra.mxu0 %v830
    %v846 = vpop.f32.mrf.mxu0
    %v847 = vadd.f32 0.0, %v846
    %v848 = vpop.f32.mrf.mxu0
    %849 = vdwg.mxu0
    %850 = vmatpush.bf16.msra.mxu0 %v342
    %851 = vmatpush.bf16.msra.mxu0 %v339
    %852 = vmatpush.bf16.msra.mxu0 %v336
    %853 = vmatpush.bf16.msra.mxu0 %v333
    %854 = vmatpush.bf16.msra.mxu0 %v330
    %855 = vmatpush.bf16.msra.mxu0 %v327
    %856 = vmatpush.bf16.msra.mxu0 %v324
    %857 = vmatpush.bf16.msra.mxu0 %v321
    %858 = vmatmul.bf16.gmra.mxu0 %v830
    %v859 = vpop.f32.mrf.mxu0
    %v860 = vadd.f32 0.0, %v859
    %v861 = vpop.f32.mrf.mxu0
    %862 = vdwg.mxu0
    %863 = vmatpush.bf16.msra.mxu0 %v343
    %864 = vmatpush.bf16.msra.mxu0 %v340
    %865 = vmatpush.bf16.msra.mxu0 %v337
    %866 = vmatpush.bf16.msra.mxu0 %v334
    %867 = vmatpush.bf16.msra.mxu0 %v331
    %868 = vmatpush.bf16.msra.mxu0 %v328
    %869 = vmatpush.bf16.msra.mxu0 %v325
    %870 = vmatpush.bf16.msra.mxu0 %v322
    %871 = vmatmul.bf16.gmra.mxu0 %v830
    %v872 = vpop.f32.mrf.mxu0
    %v873 = vadd.f32 0.0, %v872
    %v874 = vpop.f32.mrf.mxu0
    %875 = vdwg.mxu0
    %v876 = vadd.f32 %v834, %v847
    %v877 = vxor.u32 %v876, 2147483648
    %v878 = vmul.f32 %v877, 1.442695
    %v879 = vpow.pop %v878
    %v880 = vadd.f32 %v879, 1.0
    %v881 = vrcp.pop %v880
    %v882 = vmul.f32 %v880, %v881
    %v883 = vsub.f32 1.0, %v882
    %v884 = vmul.f32 %v881, %v883
    %v885 = vadd.f32 %v881, %v884
    %vm886 = vweird.f32 %v880
    %vm887 = vweird.f32 %v881
    %vm888 = vmor %vm886, %vm887
    %v889 = vsel %vm888, %v881, %v885
    %v890 = vand.u32 2147483647, %v880
    %vm891 = vcmp.eq.f32.partialorder %v890, 8.507059e+37
    %v892 = vand.u32 %v880, 2147483648
    %v893 = vor.u32 1.1754944e-38, %v892
    %v894 = vsel %vm891, %v893, %v889
    %v895 = vmul.f32 1.0, %v894
    %v896 = vadd.f32 %v835, %v860
    %v897 = vxor.u32 %v896, 2147483648
    %v898 = vmul.f32 %v897, 1.442695
    %v899 = vpow.pop %v898
    %v900 = vadd.f32 %v899, 1.0
    %v901 = vrcp.pop %v900
    %v902 = vmul.f32 %v900, %v901
    %v903 = vsub.f32 1.0, %v902
    %v904 = vmul.f32 %v901, %v903
    %v905 = vadd.f32 %v901, %v904
    %vm906 = vweird.f32 %v900
    %vm907 = vweird.f32 %v901
    %vm908 = vmor %vm906, %vm907
    %v909 = vsel %vm908, %v901, %v905
    %v910 = vand.u32 2147483647, %v900
    %vm911 = vcmp.eq.f32.partialorder %v910, 8.507059e+37
    %v912 = vand.u32 %v900, 2147483648
    %v913 = vor.u32 1.1754944e-38, %v912
    %v914 = vsel %vm911, %v913, %v909
    %v915 = vmul.f32 1.0, %v914
    %v916 = vadd.f32 %v873, %v233
    %v917 = vmul.f32 %v895, %v916
    %v918 = vadd.f32 %v836, %v917
    %v919 = vtanh.pop %v918
    %v920 = vsub.f32 1.0, %v915
    %v921 = vmul.f32 %v920, %v919
    %v922 = vmul.f32 %v915, %v829
    %v923 = vadd.f32 %v921, %v922
    %v924 = vpack.c.bf16 %v923, %v923
    %s925 = scalar_lea.vmem %s5, 20
    %926 = vst [vmem:[%s925] sm:$0xf] %v924
    %s927 = scalar_lea.vmem [#allocation3], 144
    %v928 = vld [vmem:[%s927] sm:$0xff]
    %v929 = vld [vmem:[%s927 + $0x8] sm:$0xff]
    %v930 = vld [vmem:[%s927 + $0x10] sm:$0xff]
    %931 = vmatpush.bf16.msra.mxu0 %v341
    %932 = vmatpush.bf16.msra.mxu0 %v338
    %933 = vmatpush.bf16.msra.mxu0 %v335
    %934 = vmatpush.bf16.msra.mxu0 %v332
    %935 = vmatpush.bf16.msra.mxu0 %v329
    %936 = vmatpush.bf16.msra.mxu0 %v326
    %937 = vmatpush.bf16.msra.mxu0 %v323
    %938 = vmatpush.bf16.msra.mxu0 %v320
    %939 = vmatmul.bf16.gmra.mxu0 %v924
    %v940 = vpop.f32.mrf.mxu0
    %v941 = vadd.f32 0.0, %v940
    %v942 = vpop.f32.mrf.mxu0
    %943 = vdwg.mxu0
    %944 = vmatpush.bf16.msra.mxu0 %v342
    %945 = vmatpush.bf16.msra.mxu0 %v339
    %946 = vmatpush.bf16.msra.mxu0 %v336
    %947 = vmatpush.bf16.msra.mxu0 %v333
    %948 = vmatpush.bf16.msra.mxu0 %v330
    %949 = vmatpush.bf16.msra.mxu0 %v327
    %950 = vmatpush.bf16.msra.mxu0 %v324
    %951 = vmatpush.bf16.msra.mxu0 %v321
    %952 = vmatmul.bf16.gmra.mxu0 %v924
    %v953 = vpop.f32.mrf.mxu0
    %v954 = vadd.f32 0.0, %v953
    %v955 = vpop.f32.mrf.mxu0
    %956 = vdwg.mxu0
    %957 = vmatpush.bf16.msra.mxu0 %v343
    %958 = vmatpush.bf16.msra.mxu0 %v340
    %959 = vmatpush.bf16.msra.mxu0 %v337
    %960 = vmatpush.bf16.msra.mxu0 %v334
    %961 = vmatpush.bf16.msra.mxu0 %v331
    %962 = vmatpush.bf16.msra.mxu0 %v328
    %963 = vmatpush.bf16.msra.mxu0 %v325
    %964 = vmatpush.bf16.msra.mxu0 %v322
    %965 = vmatmul.bf16.gmra.mxu0 %v924
    %v966 = vpop.f32.mrf.mxu0
    %v967 = vadd.f32 0.0, %v966
    %v968 = vpop.f32.mrf.mxu0
    %969 = vdwg.mxu0
    %v970 = vadd.f32 %v928, %v941
    %v971 = vxor.u32 %v970, 2147483648
    %v972 = vmul.f32 %v971, 1.442695
    %v973 = vpow.pop %v972
    %v974 = vadd.f32 %v973, 1.0
    %v975 = vrcp.pop %v974
    %v976 = vmul.f32 %v974, %v975
    %v977 = vsub.f32 1.0, %v976
    %v978 = vmul.f32 %v975, %v977
    %v979 = vadd.f32 %v975, %v978
    %vm980 = vweird.f32 %v974
    %vm981 = vweird.f32 %v975
    %vm982 = vmor %vm980, %vm981
    %v983 = vsel %vm982, %v975, %v979
    %v984 = vand.u32 2147483647, %v974
    %vm985 = vcmp.eq.f32.partialorder %v984, 8.507059e+37
    %v986 = vand.u32 %v974, 2147483648
    %v987 = vor.u32 1.1754944e-38, %v986
    %v988 = vsel %vm985, %v987, %v983
    %v989 = vmul.f32 1.0, %v988
    %v990 = vadd.f32 %v929, %v954
    %v991 = vxor.u32 %v990, 2147483648
    %v992 = vmul.f32 %v991, 1.442695
    %v993 = vpow.pop %v992
    %v994 = vadd.f32 %v993, 1.0
    %v995 = vrcp.pop %v994
    %v996 = vmul.f32 %v994, %v995
    %v997 = vsub.f32 1.0, %v996
    %v998 = vmul.f32 %v995, %v997
    %v999 = vadd.f32 %v995, %v998
    %vm1000 = vweird.f32 %v994
    %vm1001 = vweird.f32 %v995
    %vm1002 = vmor %vm1000, %vm1001
    %v1003 = vsel %vm1002, %v995, %v999
    %v1004 = vand.u32 2147483647, %v994
    %vm1005 = vcmp.eq.f32.partialorder %v1004, 8.507059e+37
    %v1006 = vand.u32 %v994, 2147483648
    %v1007 = vor.u32 1.1754944e-38, %v1006
    %v1008 = vsel %vm1005, %v1007, %v1003
    %v1009 = vmul.f32 1.0, %v1008
    %v1010 = vadd.f32 %v967, %v233
    %v1011 = vmul.f32 %v989, %v1010
    %v1012 = vadd.f32 %v930, %v1011
    %v1013 = vtanh.pop %v1012
    %v1014 = vsub.f32 1.0, %v1009
    %v1015 = vmul.f32 %v1014, %v1013
    %v1016 = vmul.f32 %v1009, %v923
    %v1017 = vadd.f32 %v1015, %v1016
    %v1018 = vpack.c.bf16 %v1017, %v1017
    %s1019 = scalar_lea.vmem %s5, 24
    %1020 = vst [vmem:[%s1019] sm:$0xf] %v1018
    %s1021 = scalar_lea.vmem [#allocation3], 168
    %v1022 = vld [vmem:[%s1021] sm:$0xff]
    %v1023 = vld [vmem:[%s1021 + $0x8] sm:$0xff]
    %v1024 = vld [vmem:[%s1021 + $0x10] sm:$0xff]
    %1025 = vmatpush.bf16.msra.mxu0 %v341
    %1026 = vmatpush.bf16.msra.mxu0 %v338
    %1027 = vmatpush.bf16.msra.mxu0 %v335
    %1028 = vmatpush.bf16.msra.mxu0 %v332
    %1029 = vmatpush.bf16.msra.mxu0 %v329
    %1030 = vmatpush.bf16.msra.mxu0 %v326
    %1031 = vmatpush.bf16.msra.mxu0 %v323
    %1032 = vmatpush.bf16.msra.mxu0 %v320
    %1033 = vmatmul.bf16.gmra.mxu0 %v1018
    %v1034 = vpop.f32.mrf.mxu0
    %v1035 = vadd.f32 0.0, %v1034
    %v1036 = vpop.f32.mrf.mxu0
    %1037 = vdwg.mxu0
    %1038 = vmatpush.bf16.msra.mxu0 %v342
    %1039 = vmatpush.bf16.msra.mxu0 %v339
    %1040 = vmatpush.bf16.msra.mxu0 %v336
    %1041 = vmatpush.bf16.msra.mxu0 %v333
    %1042 = vmatpush.bf16.msra.mxu0 %v330
    %1043 = vmatpush.bf16.msra.mxu0 %v327
    %1044 = vmatpush.bf16.msra.mxu0 %v324
    %1045 = vmatpush.bf16.msra.mxu0 %v321
    %1046 = vmatmul.bf16.gmra.mxu0 %v1018
    %v1047 = vpop.f32.mrf.mxu0
    %v1048 = vadd.f32 0.0, %v1047
    %v1049 = vpop.f32.mrf.mxu0
    %1050 = vdwg.mxu0
    %1051 = vmatpush.bf16.msra.mxu0 %v343
    %1052 = vmatpush.bf16.msra.mxu0 %v340
    %1053 = vmatpush.bf16.msra.mxu0 %v337
    %1054 = vmatpush.bf16.msra.mxu0 %v334
    %1055 = vmatpush.bf16.msra.mxu0 %v331
    %1056 = vmatpush.bf16.msra.mxu0 %v328
    %1057 = vmatpush.bf16.msra.mxu0 %v325
    %1058 = vmatpush.bf16.msra.mxu0 %v322
    %1059 = vmatmul.bf16.gmra.mxu0 %v1018
    %v1060 = vpop.f32.mrf.mxu0
    %v1061 = vadd.f32 0.0, %v1060
    %v1062 = vpop.f32.mrf.mxu0
    %1063 = vdwg.mxu0
    %v1064 = vadd.f32 %v1022, %v1035
    %v1065 = vxor.u32 %v1064, 2147483648
    %v1066 = vmul.f32 %v1065, 1.442695
    %v1067 = vpow.pop %v1066
    %v1068 = vadd.f32 %v1067, 1.0
    %v1069 = vrcp.pop %v1068
    %v1070 = vmul.f32 %v1068, %v1069
    %v1071 = vsub.f32 1.0, %v1070
    %v1072 = vmul.f32 %v1069, %v1071
    %v1073 = vadd.f32 %v1069, %v1072
    %vm1074 = vweird.f32 %v1068
    %vm1075 = vweird.f32 %v1069
    %vm1076 = vmor %vm1074, %vm1075
    %v1077 = vsel %vm1076, %v1069, %v1073
    %v1078 = vand.u32 2147483647, %v1068
    %vm1079 = vcmp.eq.f32.partialorder %v1078, 8.507059e+37
    %v1080 = vand.u32 %v1068, 2147483648
    %v1081 = vor.u32 1.1754944e-38, %v1080
    %v1082 = vsel %vm1079, %v1081, %v1077
    %v1083 = vmul.f32 1.0, %v1082
    %v1084 = vadd.f32 %v1023, %v1048
    %v1085 = vxor.u32 %v1084, 2147483648
    %v1086 = vmul.f32 %v1085, 1.442695
    %v1087 = vpow.pop %v1086
    %v1088 = vadd.f32 %v1087, 1.0
    %v1089 = vrcp.pop %v1088
    %v1090 = vmul.f32 %v1088, %v1089
    %v1091 = vsub.f32 1.0, %v1090
    %v1092 = vmul.f32 %v1089, %v1091
    %v1093 = vadd.f32 %v1089, %v1092
    %vm1094 = vweird.f32 %v1088
    %vm1095 = vweird.f32 %v1089
    %vm1096 = vmor %vm1094, %vm1095
    %v1097 = vsel %vm1096, %v1089, %v1093
    %v1098 = vand.u32 2147483647, %v1088
    %vm1099 = vcmp.eq.f32.partialorder %v1098, 8.507059e+37
    %v1100 = vand.u32 %v1088, 2147483648
    %v1101 = vor.u32 1.1754944e-38, %v1100
    %v1102 = vsel %vm1099, %v1101, %v1097
    %v1103 = vmul.f32 1.0, %v1102
    %v1104 = vadd.f32 %v1061, %v233
    %v1105 = vmul.f32 %v1083, %v1104
    %v1106 = vadd.f32 %v1024, %v1105
    %v1107 = vtanh.pop %v1106
    %v1108 = vsub.f32 1.0, %v1103
    %v1109 = vmul.f32 %v1108, %v1107
    %v1110 = vmul.f32 %v1103, %v1017
    %v1111 = vadd.f32 %v1109, %v1110
    %v1112 = vpack.c.bf16 %v1111, %v1111
    %s1113 = scalar_lea.vmem %s5, 28
    %1114 = vst [vmem:[%s1113] sm:$0xf] %v1112
    %1115 = vst [vmem:[#allocation2] sm:$0xff] %v1111
    // Predicated region
    $region30: #{gru_model_forward.2} parent=1 // pred_check
      _
    $region31: #{gru_model_forward.2} parent=1 // pred_check_branch
      %1117 = sbr.rel (0) target = $region33
    $region32: #{gru_model_forward.2} parent=1 // pred_region
      _
    $region33: #{gru_model_forward.2} parent=1 // pred_fallthru
      _
    // Predicated region
    $region34: #{gru_model_forward.2} parent=1 // pred_check
      _
    $region35: #{gru_model_forward.2} parent=1 // pred_check_branch
      %1119 = sbr.rel (0) target = $region37
    $region36: #{gru_model_forward.2} parent=1 // pred_region
      _
    $region37: #{gru_model_forward.2} parent=1 // pred_fallthru
      _
    %1120 = vsyncpa [#allocation5], 1

// kernel: gru_model_forward.3
$region0: #{gru_model_forward.3}
  #allocation0 [shape = 'u32[]', space=smem, size = 0x4, offset = 0x4, fixed_abs, tag = 'smem constant byte address 0x4 - core index']
  #allocation1 [shape = 'u32[72,128]{1,0:T(1,128)}', space=vmem, size = 0x9000, scoped, tag = 'internal scratch']
  #allocation2 [shape = 'f32[8,128]{1,0:T(8,128)}', space=vmem, size = 0x1000, scoped, tag = 'scratch operand']
  #allocation3 [shape = 'f32[8,8,384]{2,1,0:T(8,128)}', space=vmem, size = 0x18000, scoped, tag = 'scratch operand']
  %s0 = inlined_call_operand.vmem [shape: bf16[8,8,128], index: 0, kind: input, shape index: {}]
  %s1 = inlined_call_operand.hbm [shape: bf16[128,384], index: 1, kind: input, shape index: {}]
  %s2 = inlined_call_operand.hbm [shape: bf16[128,384], index: 2, kind: input, shape index: {}]
  %s3 = inlined_call_operand.vmem [shape: f32[1,384], index: 3, kind: input, shape index: {}]
  %s4 = inlined_call_operand.vmem [shape: f32[1,128], index: 4, kind: input, shape index: {}]
  %s5 = inlined_call_operand.vmem [shape: bf16[128,128], index: 5, kind: input, shape index: {}]
  %s6 = inlined_call_operand.vmem [shape: f32[1,128], index: 6, kind: input, shape index: {}]
  %s7 = inlined_call_operand.vmem [shape: f32[8,128], index: 7, kind: output, shape index: {}]
  %s8 = sld [smem:[#allocation0]]
  $region54: #{gru_model_forward.3} parent=0
    _
  %s10 = ssub.s32 1, %s8
  %s11 = scalar_select 0, %s10, %s8
  $region1: #{gru_model_forward.3} parent=0
    #allocation4 [shape = 'u8[98304]{0}', space=vmem, size = 0x18000, scoped, tag = 'input window, operand 1, single buffered']
    #allocation5 [shape = 's32[1]{0}', space=sflag, size = 0x4, scoped, tag = 'scoped memory for gru_model_forward.3']
    #allocation6 [shape = 'u8[98304]{0}', space=vmem, size = 0x18000, scoped, tag = 'input window, operand 2, single buffered']
    #allocation7 [shape = 's32[1]{0}', space=sflag, size = 0x4, scoped, tag = 'scoped memory for gru_model_forward.3']
    %12 = vsyncpa [#allocation5], 0
    %13 = vsyncpa [#allocation7], 0
    // Predicated region
    $region2: #{gru_model_forward.3} parent=1 // pred_check
      _
    $region3: #{gru_model_forward.3} parent=1 // pred_check_branch
      %15 = sbr.rel (0) target = $region5
    $region4: #{gru_model_forward.3} parent=1 // pred_region
      _
    $region5: #{gru_model_forward.3} parent=1 // pred_fallthru
      _
    // Predicated region
    $region6: #{gru_model_forward.3} parent=1 // pred_check
      _
    $region7: #{gru_model_forward.3} parent=1 // pred_check_branch
      %17 = sbr.rel (0) target = $region9
    $region8: #{gru_model_forward.3} parent=1 // pred_region
      %19 = vsyncadd [#allocation5], 0
      %s20 = sshll.u32 %s1, 4
      %s21 = int_to_ptr.hbm [resolvable:$true] %s20
      %s22 = sshll.u32 [#allocation4], 4
      %s23 = int_to_ptr.vmem [resolvable:$true] %s22
      %28 = dma.hbm_to_vmem [thread:$0]  %s21, 3072, %s23, [#allocation5], 192, 192, 12
    $region9: #{gru_model_forward.3} parent=1 // pred_fallthru
      _
    // Predicated region
    $region10: #{gru_model_forward.3} parent=1 // pred_check
      _
    $region11: #{gru_model_forward.3} parent=1 // pred_check_branch
      %30 = sbr.rel (0) target = $region13
    $region12: #{gru_model_forward.3} parent=1 // pred_region
      %32 = vsyncadd [#allocation7], 0
      %s33 = sshll.u32 %s2, 4
      %s34 = int_to_ptr.hbm [resolvable:$true] %s33
      %s35 = sshll.u32 [#allocation6], 4
      %s36 = int_to_ptr.vmem [resolvable:$true] %s35
      %41 = dma.hbm_to_vmem [thread:$0]  %s34, 3072, %s36, [#allocation7], 192, 192, 12
    $region13: #{gru_model_forward.3} parent=1 // pred_fallthru
      _
    // Predicated region
    $region14: #{gru_model_forward.3} parent=1 // pred_check
      _
    $region15: #{gru_model_forward.3} parent=1 // pred_check_branch
      %43 = sbr.rel (0) target = $region17
    $region16: #{gru_model_forward.3} parent=1 // pred_region
      _
    $region17: #{gru_model_forward.3} parent=1 // pred_fallthru
      _
    // Predicated region
    $region18: #{gru_model_forward.3} parent=1 // pred_check
      _
    $region19: #{gru_model_forward.3} parent=1 // pred_check_branch
      %45 = sbr.rel (0) target = $region21
    $region20: #{gru_model_forward.3} parent=1 // pred_region
      _
    $region21: #{gru_model_forward.3} parent=1 // pred_fallthru
      _
    // Predicated region
    $region22: #{gru_model_forward.3} parent=1 // pred_check
      _
    $region23: #{gru_model_forward.3} parent=1 // pred_check_branch
      %47 = sbr.rel (0) target = $region25
    $region24: #{gru_model_forward.3} parent=1 // pred_region
      _
    $region25: #{gru_model_forward.3} parent=1 // pred_fallthru
      _
    // Predicated region
    $region26: #{gru_model_forward.3} parent=1 // pred_check
      _
    $region27: #{gru_model_forward.3} parent=1 // pred_check_branch
      %49 = sbr.rel (0) target = $region29
    $region28: #{gru_model_forward.3} parent=1 // pred_region
      _
    $region29: #{gru_model_forward.3} parent=1 // pred_fallthru
      _
    // Predicated region
    $region30: #{gru_model_forward.3} parent=1 // pred_check
      _
    $region31: #{gru_model_forward.3} parent=1 // pred_check_branch
      %51 = sbr.rel (0) target = $region33
    $region32: #{gru_model_forward.3} parent=1 // pred_region
      %53 = dma.done [#allocation5], 3072
    $region33: #{gru_model_forward.3} parent=1 // pred_fallthru
      _
    // Predicated region
    $region34: #{gru_model_forward.3} parent=1 // pred_check
      _
    $region35: #{gru_model_forward.3} parent=1 // pred_check_branch
      %55 = sbr.rel (0) target = $region37
    $region36: #{gru_model_forward.3} parent=1 // pred_region
      %57 = dma.done [#allocation7], 3072
    $region37: #{gru_model_forward.3} parent=1 // pred_fallthru
      _
    %p58 = scmp.eq.s32.totalorder 0, 0
    // Predicated region
    $region38: #{gru_model_forward.3} parent=1 // pred_check
      %p59 = pneg %p58
    $region39: #{gru_model_forward.3} parent=1 // pred_check_branch
      %61 = sbr.rel (%p59) target = $region41
    $region40: #{gru_model_forward.3} parent=1 // pred_region
      %62 = vst [vmem:[#allocation2] sm:$0xff] 0.0
    $region41: #{gru_model_forward.3} parent=1 // pred_fallthru
      _
    %v63 = vld [vmem:[%s0] sm:$0xf]
    %v64 = vld [vmem:[%s0 + $0x4] sm:$0xf]
    %v65 = vld [vmem:[%s0 + $0x8] sm:$0xf]
    %v66 = vld [vmem:[%s0 + $0xc] sm:$0xf]
    %v67 = vld [vmem:[%s0 + $0x10] sm:$0xf]
    %v68 = vld [vmem:[%s0 + $0x14] sm:$0xf]
    %v69 = vld [vmem:[%s0 + $0x18] sm:$0xf]
    %v70 = vld [vmem:[%s0 + $0x1c] sm:$0xf]
    %v71 = vld [vmem:[#allocation4] sm:$0xff]
    %v72 = vld [vmem:[#allocation4 + $0x8] sm:$0xf]
    %v73 = vld [vmem:[#allocation4 + $0xc] sm:$0xff]
    %v74 = vld [vmem:[#allocation4 + $0x14] sm:$0xf]
    %v75 = vld [vmem:[#allocation4 + $0x18] sm:$0xff]
    %v76 = vld [vmem:[#allocation4 + $0x20] sm:$0xf]
    %v77 = vld [vmem:[#allocation4 + $0x24] sm:$0xff]
    %v78 = vld [vmem:[#allocation4 + $0x2c] sm:$0xf]
    %v79 = vld [vmem:[#allocation4 + $0x30] sm:$0xff]
    %v80 = vld [vmem:[#allocation4 + $0x38] sm:$0xf]
    %v81 = vld [vmem:[#allocation4 + $0x3c] sm:$0xff]
    %v82 = vld [vmem:[#allocation4 + $0x44] sm:$0xf]
    %v83 = vld [vmem:[#allocation4 + $0x48] sm:$0xff]
    %v84 = vld [vmem:[#allocation4 + $0x50] sm:$0xf]
    %v85 = vld [vmem:[#allocation4 + $0x54] sm:$0xff]
    %v86 = vld [vmem:[#allocation4 + $0x5c] sm:$0xf]
    %v87 = vld [vmem:[#allocation4 + $0x60] sm:$0xff]
    %v88 = vld [vmem:[#allocation4 + $0x68] sm:$0xf]
    %v89 = vld [vmem:[#allocation4 + $0x6c] sm:$0xff]
    %v90 = vld [vmem:[#allocation4 + $0x74] sm:$0xf]
    %v91 = vld [vmem:[#allocation4 + $0x78] sm:$0xff]
    %v92 = vld [vmem:[#allocation4 + $0x80] sm:$0xf]
    %v93 = vld [vmem:[#allocation4 + $0x84] sm:$0xff]
    %v94 = vld [vmem:[#allocation4 + $0x8c] sm:$0xf]
    %v95 = vld [vmem:[#allocation4 + $0x90] sm:$0xff]
    %v96 = vld [vmem:[#allocation4 + $0x98] sm:$0xf]
    %v97 = vld [vmem:[#allocation4 + $0x9c] sm:$0xff]
    %v98 = vld [vmem:[#allocation4 + $0xa4] sm:$0xf]
    %v99 = vld [vmem:[#allocation4 + $0xa8] sm:$0xff]
    %v100 = vld [vmem:[#allocation4 + $0xb0] sm:$0xf]
    %v101 = vld [vmem:[#allocation4 + $0xb4] sm:$0xff]
    %v102 = vld [vmem:[#allocation4 + $0xbc] sm:$0xf]
    %v103 = vld [vmem:[%s3] sm:$0x7]
    %v105 = vperm.slane %v103, 0
    %v106 = vperm.slane %v103, 1
    %v107 = vperm.slane %v103, 2
    %v119 = vunpack.c.l.b16 %v63
    %v120 = vunpack.c.l.b16 %v64
    %v121 = vunpack.c.l.b16 %v65
    %v122 = vunpack.c.l.b16 %v66
    %v123 = vunpack.c.l.b16 %v67
    %v124 = vunpack.c.l.b16 %v68
    %v125 = vunpack.c.l.b16 %v69
    %v126 = vunpack.c.l.b16 %v70
    %v127 = vpack.c.b16 %v120, %v119
    %v128 = vpack.c.b16 %v122, %v121
    %v129 = vpack.c.b16 %v124, %v123
    %v130 = vpack.c.b16 %v126, %v125
    %v167 = vunpack.c.l.b16 %v71
    %v168 = vunpack.c.h.b16 %v71
    %v169 = vunpack.c.l.b16 %v72
    %v170 = vunpack.c.l.b16 %v73
    %v171 = vunpack.c.h.b16 %v73
    %v172 = vunpack.c.l.b16 %v74
    %v173 = vunpack.c.l.b16 %v75
    %v174 = vunpack.c.h.b16 %v75
    %v175 = vunpack.c.l.b16 %v76
    %v176 = vunpack.c.l.b16 %v77
    %v177 = vunpack.c.h.b16 %v77
    %v178 = vunpack.c.l.b16 %v78
    %v179 = vunpack.c.l.b16 %v79
    %v180 = vunpack.c.h.b16 %v79
    %v181 = vunpack.c.l.b16 %v80
    %v182 = vunpack.c.l.b16 %v81
    %v183 = vunpack.c.h.b16 %v81
    %v184 = vunpack.c.l.b16 %v82
    %v185 = vunpack.c.l.b16 %v83
    %v186 = vunpack.c.h.b16 %v83
    %v187 = vunpack.c.l.b16 %v84
    %v188 = vunpack.c.l.b16 %v85
    %v189 = vunpack.c.h.b16 %v85
    %v190 = vunpack.c.l.b16 %v86
    %v191 = vunpack.c.l.b16 %v87
    %v192 = vunpack.c.h.b16 %v87
    %v193 = vunpack.c.l.b16 %v88
    %v194 = vunpack.c.l.b16 %v89
    %v195 = vunpack.c.h.b16 %v89
    %v196 = vunpack.c.l.b16 %v90
    %v197 = vunpack.c.l.b16 %v91
    %v198 = vunpack.c.h.b16 %v91
    %v199 = vunpack.c.l.b16 %v92
    %v200 = vunpack.c.l.b16 %v93
    %v201 = vunpack.c.h.b16 %v93
    %v202 = vunpack.c.l.b16 %v94
    %v203 = vunpack.c.l.b16 %v95
    %v204 = vunpack.c.h.b16 %v95
    %v205 = vunpack.c.l.b16 %v96
    %v206 = vunpack.c.l.b16 %v97
    %v207 = vunpack.c.h.b16 %v97
    %v208 = vunpack.c.l.b16 %v98
    %v209 = vunpack.c.l.b16 %v99
    %v210 = vunpack.c.h.b16 %v99
    %v211 = vunpack.c.l.b16 %v100
    %v212 = vunpack.c.l.b16 %v101
    %v213 = vunpack.c.h.b16 %v101
    %v214 = vunpack.c.l.b16 %v102
    %v215 = vpack.c.b16 %v170, %v167
    %v216 = vpack.c.b16 %v171, %v168
    %v217 = vpack.c.b16 %v172, %v169
    %v218 = vpack.c.b16 %v176, %v173
    %v219 = vpack.c.b16 %v177, %v174
    %v220 = vpack.c.b16 %v178, %v175
    %v221 = vpack.c.b16 %v182, %v179
    %v222 = vpack.c.b16 %v183, %v180
    %v223 = vpack.c.b16 %v184, %v181
    %v224 = vpack.c.b16 %v188, %v185
    %v225 = vpack.c.b16 %v189, %v186
    %v226 = vpack.c.b16 %v190, %v187
    %v227 = vpack.c.b16 %v194, %v191
    %v228 = vpack.c.b16 %v195, %v192
    %v229 = vpack.c.b16 %v196, %v193
    %v230 = vpack.c.b16 %v200, %v197
    %v231 = vpack.c.b16 %v201, %v198
    %v232 = vpack.c.b16 %v202, %v199
    %v233 = vpack.c.b16 %v206, %v203
    %v234 = vpack.c.b16 %v207, %v204
    %v235 = vpack.c.b16 %v208, %v205
    %v236 = vpack.c.b16 %v212, %v209
    %v237 = vpack.c.b16 %v213, %v210
    %v238 = vpack.c.b16 %v214, %v211
    %263 = vmatpush.bf16.msra.mxu0 %v236
    %264 = vmatpush.bf16.msra.mxu0 %v233
    %265 = vmatpush.bf16.msra.mxu0 %v230
    %266 = vmatpush.bf16.msra.mxu0 %v227
    %267 = vmatpush.bf16.msra.mxu0 %v224
    %268 = vmatpush.bf16.msra.mxu0 %v221
    %269 = vmatpush.bf16.msra.mxu0 %v218
    %270 = vmatpush.bf16.msra.mxu0 %v215
    %271 = vmatmul.bf16.gmra.mxu0 %v127
    %v272 = vpop.f32.mrf.mxu0
    %v273 = vadd.f32 %v105, %v272
    %v274 = vpop.f32.mrf.mxu0
    %v275 = vadd.f32 %v105, %v274
    %276 = vmatmul.bf16.gmra.mxu0 %v128
    %v277 = vpop.f32.mrf.mxu0
    %v278 = vadd.f32 %v105, %v277
    %v279 = vpop.f32.mrf.mxu0
    %v280 = vadd.f32 %v105, %v279
    %281 = vmatmul.bf16.gmra.mxu0 %v129
    %v282 = vpop.f32.mrf.mxu0
    %v283 = vadd.f32 %v105, %v282
    %v284 = vpop.f32.mrf.mxu0
    %v285 = vadd.f32 %v105, %v284
    %286 = vmatmul.bf16.gmra.mxu0 %v130
    %v287 = vpop.f32.mrf.mxu0
    %v288 = vadd.f32 %v105, %v287
    %v289 = vpop.f32.mrf.mxu0
    %v290 = vadd.f32 %v105, %v289
    %291 = vdwg.mxu0
    %292 = vmatpush.bf16.msra.mxu0 %v237
    %293 = vmatpush.bf16.msra.mxu0 %v234
    %294 = vmatpush.bf16.msra.mxu0 %v231
    %295 = vmatpush.bf16.msra.mxu0 %v228
    %296 = vmatpush.bf16.msra.mxu0 %v225
    %297 = vmatpush.bf16.msra.mxu0 %v222
    %298 = vmatpush.bf16.msra.mxu0 %v219
    %299 = vmatpush.bf16.msra.mxu0 %v216
    %300 = vmatmul.bf16.gmra.mxu0 %v127
    %v301 = vpop.f32.mrf.mxu0
    %v302 = vadd.f32 %v106, %v301
    %v303 = vpop.f32.mrf.mxu0
    %v304 = vadd.f32 %v106, %v303
    %305 = vmatmul.bf16.gmra.mxu0 %v128
    %v306 = vpop.f32.mrf.mxu0
    %v307 = vadd.f32 %v106, %v306
    %v308 = vpop.f32.mrf.mxu0
    %v309 = vadd.f32 %v106, %v308
    %310 = vmatmul.bf16.gmra.mxu0 %v129
    %v311 = vpop.f32.mrf.mxu0
    %v312 = vadd.f32 %v106, %v311
    %v313 = vpop.f32.mrf.mxu0
    %v314 = vadd.f32 %v106, %v313
    %315 = vmatmul.bf16.gmra.mxu0 %v130
    %v316 = vpop.f32.mrf.mxu0
    %v317 = vadd.f32 %v106, %v316
    %v318 = vpop.f32.mrf.mxu0
    %v319 = vadd.f32 %v106, %v318
    %320 = vdwg.mxu0
    %321 = vmatpush.bf16.msra.mxu0 %v238
    %322 = vmatpush.bf16.msra.mxu0 %v235
    %323 = vmatpush.bf16.msra.mxu0 %v232
    %324 = vmatpush.bf16.msra.mxu0 %v229
    %325 = vmatpush.bf16.msra.mxu0 %v226
    %326 = vmatpush.bf16.msra.mxu0 %v223
    %327 = vmatpush.bf16.msra.mxu0 %v220
    %328 = vmatpush.bf16.msra.mxu0 %v217
    %329 = vmatmul.bf16.gmra.mxu0 %v127
    %v330 = vpop.f32.mrf.mxu0
    %v331 = vadd.f32 %v107, %v330
    %v332 = vpop.f32.mrf.mxu0
    %v333 = vadd.f32 %v107, %v332
    %334 = vmatmul.bf16.gmra.mxu0 %v128
    %v335 = vpop.f32.mrf.mxu0
    %v336 = vadd.f32 %v107, %v335
    %v337 = vpop.f32.mrf.mxu0
    %v338 = vadd.f32 %v107, %v337
    %339 = vmatmul.bf16.gmra.mxu0 %v129
    %v340 = vpop.f32.mrf.mxu0
    %v341 = vadd.f32 %v107, %v340
    %v342 = vpop.f32.mrf.mxu0
    %v343 = vadd.f32 %v107, %v342
    %344 = vmatmul.bf16.gmra.mxu0 %v130
    %v345 = vpop.f32.mrf.mxu0
    %v346 = vadd.f32 %v107, %v345
    %v347 = vpop.f32.mrf.mxu0
    %v348 = vadd.f32 %v107, %v347
    %349 = vdwg.mxu0
    %350 = vst [vmem:[#allocation3] sm:$0xff] %v273
    %351 = vst [vmem:[#allocation3 + $0x8] sm:$0xff] %v302
    %352 = vst [vmem:[#allocation3 + $0x10] sm:$0xff] %v331
    %353 = vst [vmem:[#allocation3 + $0x18] sm:$0xff] %v275
    %354 = vst [vmem:[#allocation3 + $0x20] sm:$0xff] %v304
    %355 = vst [vmem:[#allocation3 + $0x28] sm:$0xff] %v333
    %356 = vst [vmem:[#allocation3 + $0x30] sm:$0xff] %v278
    %357 = vst [vmem:[#allocation3 + $0x38] sm:$0xff] %v307
    %358 = vst [vmem:[#allocation3 + $0x40] sm:$0xff] %v336
    %359 = vst [vmem:[#allocation3 + $0x48] sm:$0xff] %v280
    %360 = vst [vmem:[#allocation3 + $0x50] sm:$0xff] %v309
    %361 = vst [vmem:[#allocation3 + $0x58] sm:$0xff] %v338
    %362 = vst [vmem:[#allocation3 + $0x60] sm:$0xff] %v283
    %363 = vst [vmem:[#allocation3 + $0x68] sm:$0xff] %v312
    %364 = vst [vmem:[#allocation3 + $0x70] sm:$0xff] %v341
    %365 = vst [vmem:[#allocation3 + $0x78] sm:$0xff] %v285
    %366 = vst [vmem:[#allocation3 + $0x80] sm:$0xff] %v314
    %367 = vst [vmem:[#allocation3 + $0x88] sm:$0xff] %v343
    %368 = vst [vmem:[#allocation3 + $0x90] sm:$0xff] %v288
    %369 = vst [vmem:[#allocation3 + $0x98] sm:$0xff] %v317
    %370 = vst [vmem:[#allocation3 + $0xa0] sm:$0xff] %v346
    %371 = vst [vmem:[#allocation3 + $0xa8] sm:$0xff] %v290
    %372 = vst [vmem:[#allocation3 + $0xb0] sm:$0xff] %v319
    %373 = vst [vmem:[#allocation3 + $0xb8] sm:$0xff] %v348
    %v374 = vld [vmem:[#allocation6] sm:$0xff]
    %v375 = vld [vmem:[#allocation6 + $0x8] sm:$0xf]
    %v376 = vld [vmem:[#allocation6 + $0xc] sm:$0xff]
    %v377 = vld [vmem:[#allocation6 + $0x14] sm:$0xf]
    %v378 = vld [vmem:[#allocation6 + $0x18] sm:$0xff]
    %v379 = vld [vmem:[#allocation6 + $0x20] sm:$0xf]
    %v380 = vld [vmem:[#allocation6 + $0x24] sm:$0xff]
    %v381 = vld [vmem:[#allocation6 + $0x2c] sm:$0xf]
    %v382 = vld [vmem:[#allocation6 + $0x30] sm:$0xff]
    %v383 = vld [vmem:[#allocation6 + $0x38] sm:$0xf]
    %v384 = vld [vmem:[#allocation6 + $0x3c] sm:$0xff]
    %v385 = vld [vmem:[#allocation6 + $0x44] sm:$0xf]
    %v386 = vld [vmem:[#allocation6 + $0x48] sm:$0xff]
    %v387 = vld [vmem:[#allocation6 + $0x50] sm:$0xf]
    %v388 = vld [vmem:[#allocation6 + $0x54] sm:$0xff]
    %v389 = vld [vmem:[#allocation6 + $0x5c] sm:$0xf]
    %v390 = vld [vmem:[#allocation6 + $0x60] sm:$0xff]
    %v391 = vld [vmem:[#allocation6 + $0x68] sm:$0xf]
    %v392 = vld [vmem:[#allocation6 + $0x6c] sm:$0xff]
    %v393 = vld [vmem:[#allocation6 + $0x74] sm:$0xf]
    %v394 = vld [vmem:[#allocation6 + $0x78] sm:$0xff]
    %v395 = vld [vmem:[#allocation6 + $0x80] sm:$0xf]
    %v396 = vld [vmem:[#allocation6 + $0x84] sm:$0xff]
    %v397 = vld [vmem:[#allocation6 + $0x8c] sm:$0xf]
    %v398 = vld [vmem:[#allocation6 + $0x90] sm:$0xff]
    %v399 = vld [vmem:[#allocation6 + $0x98] sm:$0xf]
    %v400 = vld [vmem:[#allocation6 + $0x9c] sm:$0xff]
    %v401 = vld [vmem:[#allocation6 + $0xa4] sm:$0xf]
    %v402 = vld [vmem:[#allocation6 + $0xa8] sm:$0xff]
    %v403 = vld [vmem:[#allocation6 + $0xb0] sm:$0xf]
    %v404 = vld [vmem:[#allocation6 + $0xb4] sm:$0xff]
    %v405 = vld [vmem:[#allocation6 + $0xbc] sm:$0xf]
    %v406 = vld [vmem:[%s4] sm:$0x1]
    %v408 = vperm.slane %v406, 0
    %v410 = vld [vmem:[#allocation2] sm:$0xff]
    %v411 = vld [vmem:[#allocation3] sm:$0xff]
    %v412 = vld [vmem:[#allocation3 + $0x8] sm:$0xff]
    %v413 = vld [vmem:[#allocation3 + $0x10] sm:$0xff]
    %v414 = vpack.c.bf16 %v410, %v410
    %v447 = vunpack.c.l.b16 %v374
    %v448 = vunpack.c.h.b16 %v374
    %v449 = vunpack.c.l.b16 %v375
    %v450 = vunpack.c.l.b16 %v376
    %v451 = vunpack.c.h.b16 %v376
    %v452 = vunpack.c.l.b16 %v377
    %v453 = vunpack.c.l.b16 %v378
    %v454 = vunpack.c.h.b16 %v378
    %v455 = vunpack.c.l.b16 %v379
    %v456 = vunpack.c.l.b16 %v380
    %v457 = vunpack.c.h.b16 %v380
    %v458 = vunpack.c.l.b16 %v381
    %v459 = vunpack.c.l.b16 %v382
    %v460 = vunpack.c.h.b16 %v382
    %v461 = vunpack.c.l.b16 %v383
    %v462 = vunpack.c.l.b16 %v384
    %v463 = vunpack.c.h.b16 %v384
    %v464 = vunpack.c.l.b16 %v385
    %v465 = vunpack.c.l.b16 %v386
    %v466 = vunpack.c.h.b16 %v386
    %v467 = vunpack.c.l.b16 %v387
    %v468 = vunpack.c.l.b16 %v388
    %v469 = vunpack.c.h.b16 %v388
    %v470 = vunpack.c.l.b16 %v389
    %v471 = vunpack.c.l.b16 %v390
    %v472 = vunpack.c.h.b16 %v390
    %v473 = vunpack.c.l.b16 %v391
    %v474 = vunpack.c.l.b16 %v392
    %v475 = vunpack.c.h.b16 %v392
    %v476 = vunpack.c.l.b16 %v393
    %v477 = vunpack.c.l.b16 %v394
    %v478 = vunpack.c.h.b16 %v394
    %v479 = vunpack.c.l.b16 %v395
    %v480 = vunpack.c.l.b16 %v396
    %v481 = vunpack.c.h.b16 %v396
    %v482 = vunpack.c.l.b16 %v397
    %v483 = vunpack.c.l.b16 %v398
    %v484 = vunpack.c.h.b16 %v398
    %v485 = vunpack.c.l.b16 %v399
    %v486 = vunpack.c.l.b16 %v400
    %v487 = vunpack.c.h.b16 %v400
    %v488 = vunpack.c.l.b16 %v401
    %v489 = vunpack.c.l.b16 %v402
    %v490 = vunpack.c.h.b16 %v402
    %v491 = vunpack.c.l.b16 %v403
    %v492 = vunpack.c.l.b16 %v404
    %v493 = vunpack.c.h.b16 %v404
    %v494 = vunpack.c.l.b16 %v405
    %v495 = vpack.c.b16 %v450, %v447
    %v496 = vpack.c.b16 %v451, %v448
    %v497 = vpack.c.b16 %v452, %v449
    %v498 = vpack.c.b16 %v456, %v453
    %v499 = vpack.c.b16 %v457, %v454
    %v500 = vpack.c.b16 %v458, %v455
    %v501 = vpack.c.b16 %v462, %v459
    %v502 = vpack.c.b16 %v463, %v460
    %v503 = vpack.c.b16 %v464, %v461
    %v504 = vpack.c.b16 %v468, %v465
    %v505 = vpack.c.b16 %v469, %v466
    %v506 = vpack.c.b16 %v470, %v467
    %v507 = vpack.c.b16 %v474, %v471
    %v508 = vpack.c.b16 %v475, %v472
    %v509 = vpack.c.b16 %v476, %v473
    %v510 = vpack.c.b16 %v480, %v477
    %v511 = vpack.c.b16 %v481, %v478
    %v512 = vpack.c.b16 %v482, %v479
    %v513 = vpack.c.b16 %v486, %v483
    %v514 = vpack.c.b16 %v487, %v484
    %v515 = vpack.c.b16 %v488, %v485
    %v516 = vpack.c.b16 %v492, %v489
    %v517 = vpack.c.b16 %v493, %v490
    %v518 = vpack.c.b16 %v494, %v491
    %543 = vmatpush.bf16.msra.mxu0 %v516
    %544 = vmatpush.bf16.msra.mxu0 %v513
    %545 = vmatpush.bf16.msra.mxu0 %v510
    %546 = vmatpush.bf16.msra.mxu0 %v507
    %547 = vmatpush.bf16.msra.mxu0 %v504
    %548 = vmatpush.bf16.msra.mxu0 %v501
    %549 = vmatpush.bf16.msra.mxu0 %v498
    %550 = vmatpush.bf16.msra.mxu0 %v495
    %551 = vmatmul.bf16.gmra.mxu0 %v414
    %v552 = vpop.f32.mrf.mxu0
    %v553 = vadd.f32 0.0, %v552
    %v554 = vpop.f32.mrf.mxu0
    %555 = vdwg.mxu0
    %556 = vmatpush.bf16.msra.mxu0 %v517
    %557 = vmatpush.bf16.msra.mxu0 %v514
    %558 = vmatpush.bf16.msra.mxu0 %v511
    %559 = vmatpush.bf16.msra.mxu0 %v508
    %560 = vmatpush.bf16.msra.mxu0 %v505
    %561 = vmatpush.bf16.msra.mxu0 %v502
    %562 = vmatpush.bf16.msra.mxu0 %v499
    %563 = vmatpush.bf16.msra.mxu0 %v496
    %564 = vmatmul.bf16.gmra.mxu0 %v414
    %v565 = vpop.f32.mrf.mxu0
    %v566 = vadd.f32 0.0, %v565
    %v567 = vpop.f32.mrf.mxu0
    %568 = vdwg.mxu0
    %569 = vmatpush.bf16.msra.mxu0 %v518
    %570 = vmatpush.bf16.msra.mxu0 %v515
    %571 = vmatpush.bf16.msra.mxu0 %v512
    %572 = vmatpush.bf16.msra.mxu0 %v509
    %573 = vmatpush.bf16.msra.mxu0 %v506
    %574 = vmatpush.bf16.msra.mxu0 %v503
    %575 = vmatpush.bf16.msra.mxu0 %v500
    %576 = vmatpush.bf16.msra.mxu0 %v497
    %577 = vmatmul.bf16.gmra.mxu0 %v414
    %v578 = vpop.f32.mrf.mxu0
    %v579 = vadd.f32 0.0, %v578
    %v580 = vpop.f32.mrf.mxu0
    %581 = vdwg.mxu0
    %v582 = vadd.f32 %v411, %v553
    %v583 = vxor.u32 %v582, 2147483648
    %v584 = vmul.f32 %v583, 1.442695
    %v585 = vpow.pop %v584
    %v586 = vadd.f32 %v585, 1.0
    %v587 = vrcp.pop %v586
    %v588 = vmul.f32 %v586, %v587
    %v589 = vsub.f32 1.0, %v588
    %v590 = vmul.f32 %v587, %v589
    %v591 = vadd.f32 %v587, %v590
    %vm592 = vweird.f32 %v586
    %vm593 = vweird.f32 %v587
    %vm594 = vmor %vm592, %vm593
    %v595 = vsel %vm594, %v587, %v591
    %v596 = vand.u32 2147483647, %v586
    %vm597 = vcmp.eq.f32.partialorder %v596, 8.507059e+37
    %v598 = vand.u32 %v586, 2147483648
    %v599 = vor.u32 1.1754944e-38, %v598
    %v600 = vsel %vm597, %v599, %v595
    %v601 = vmul.f32 1.0, %v600
    %v602 = vadd.f32 %v412, %v566
    %v603 = vxor.u32 %v602, 2147483648
    %v604 = vmul.f32 %v603, 1.442695
    %v605 = vpow.pop %v604
    %v606 = vadd.f32 %v605, 1.0
    %v607 = vrcp.pop %v606
    %v608 = vmul.f32 %v606, %v607
    %v609 = vsub.f32 1.0, %v608
    %v610 = vmul.f32 %v607, %v609
    %v611 = vadd.f32 %v607, %v610
    %vm612 = vweird.f32 %v606
    %vm613 = vweird.f32 %v607
    %vm614 = vmor %vm612, %vm613
    %v615 = vsel %vm614, %v607, %v611
    %v616 = vand.u32 2147483647, %v606
    %vm617 = vcmp.eq.f32.partialorder %v616, 8.507059e+37
    %v618 = vand.u32 %v606, 2147483648
    %v619 = vor.u32 1.1754944e-38, %v618
    %v620 = vsel %vm617, %v619, %v615
    %v621 = vmul.f32 1.0, %v620
    %v622 = vadd.f32 %v579, %v408
    %v623 = vmul.f32 %v601, %v622
    %v624 = vadd.f32 %v413, %v623
    %v625 = vtanh.pop %v624
    %v626 = vsub.f32 1.0, %v621
    %v627 = vmul.f32 %v626, %v625
    %v628 = vmul.f32 %v621, %v410
    %v629 = vadd.f32 %v627, %v628
    %s630 = scalar_lea.vmem [#allocation3], 24
    %v631 = vld [vmem:[%s630] sm:$0xff]
    %v632 = vld [vmem:[%s630 + $0x8] sm:$0xff]
    %v633 = vld [vmem:[%s630 + $0x10] sm:$0xff]
    %v634 = vpack.c.bf16 %v629, %v629
    %635 = vmatpush.bf16.msra.mxu0 %v516
    %636 = vmatpush.bf16.msra.mxu0 %v513
    %637 = vmatpush.bf16.msra.mxu0 %v510
    %638 = vmatpush.bf16.msra.mxu0 %v507
    %639 = vmatpush.bf16.msra.mxu0 %v504
    %640 = vmatpush.bf16.msra.mxu0 %v501
    %641 = vmatpush.bf16.msra.mxu0 %v498
    %642 = vmatpush.bf16.msra.mxu0 %v495
    %643 = vmatmul.bf16.gmra.mxu0 %v634
    %v644 = vpop.f32.mrf.mxu0
    %v645 = vadd.f32 0.0, %v644
    %v646 = vpop.f32.mrf.mxu0
    %647 = vdwg.mxu0
    %648 = vmatpush.bf16.msra.mxu0 %v517
    %649 = vmatpush.bf16.msra.mxu0 %v514
    %650 = vmatpush.bf16.msra.mxu0 %v511
    %651 = vmatpush.bf16.msra.mxu0 %v508
    %652 = vmatpush.bf16.msra.mxu0 %v505
    %653 = vmatpush.bf16.msra.mxu0 %v502
    %654 = vmatpush.bf16.msra.mxu0 %v499
    %655 = vmatpush.bf16.msra.mxu0 %v496
    %656 = vmatmul.bf16.gmra.mxu0 %v634
    %v657 = vpop.f32.mrf.mxu0
    %v658 = vadd.f32 0.0, %v657
    %v659 = vpop.f32.mrf.mxu0
    %660 = vdwg.mxu0
    %661 = vmatpush.bf16.msra.mxu0 %v518
    %662 = vmatpush.bf16.msra.mxu0 %v515
    %663 = vmatpush.bf16.msra.mxu0 %v512
    %664 = vmatpush.bf16.msra.mxu0 %v509
    %665 = vmatpush.bf16.msra.mxu0 %v506
    %666 = vmatpush.bf16.msra.mxu0 %v503
    %667 = vmatpush.bf16.msra.mxu0 %v500
    %668 = vmatpush.bf16.msra.mxu0 %v497
    %669 = vmatmul.bf16.gmra.mxu0 %v634
    %v670 = vpop.f32.mrf.mxu0
    %v671 = vadd.f32 0.0, %v670
    %v672 = vpop.f32.mrf.mxu0
    %673 = vdwg.mxu0
    %v674 = vadd.f32 %v631, %v645
    %v675 = vxor.u32 %v674, 2147483648
    %v676 = vmul.f32 %v675, 1.442695
    %v677 = vpow.pop %v676
    %v678 = vadd.f32 %v677, 1.0
    %v679 = vrcp.pop %v678
    %v680 = vmul.f32 %v678, %v679
    %v681 = vsub.f32 1.0, %v680
    %v682 = vmul.f32 %v679, %v681
    %v683 = vadd.f32 %v679, %v682
    %vm684 = vweird.f32 %v678
    %vm685 = vweird.f32 %v679
    %vm686 = vmor %vm684, %vm685
    %v687 = vsel %vm686, %v679, %v683
    %v688 = vand.u32 2147483647, %v678
    %vm689 = vcmp.eq.f32.partialorder %v688, 8.507059e+37
    %v690 = vand.u32 %v678, 2147483648
    %v691 = vor.u32 1.1754944e-38, %v690
    %v692 = vsel %vm689, %v691, %v687
    %v693 = vmul.f32 1.0, %v692
    %v694 = vadd.f32 %v632, %v658
    %v695 = vxor.u32 %v694, 2147483648
    %v696 = vmul.f32 %v695, 1.442695
    %v697 = vpow.pop %v696
    %v698 = vadd.f32 %v697, 1.0
    %v699 = vrcp.pop %v698
    %v700 = vmul.f32 %v698, %v699
    %v701 = vsub.f32 1.0, %v700
    %v702 = vmul.f32 %v699, %v701
    %v703 = vadd.f32 %v699, %v702
    %vm704 = vweird.f32 %v698
    %vm705 = vweird.f32 %v699
    %vm706 = vmor %vm704, %vm705
    %v707 = vsel %vm706, %v699, %v703
    %v708 = vand.u32 2147483647, %v698
    %vm709 = vcmp.eq.f32.partialorder %v708, 8.507059e+37
    %v710 = vand.u32 %v698, 2147483648
    %v711 = vor.u32 1.1754944e-38, %v710
    %v712 = vsel %vm709, %v711, %v707
    %v713 = vmul.f32 1.0, %v712
    %v714 = vadd.f32 %v671, %v408
    %v715 = vmul.f32 %v693, %v714
    %v716 = vadd.f32 %v633, %v715
    %v717 = vtanh.pop %v716
    %v718 = vsub.f32 1.0, %v713
    %v719 = vmul.f32 %v718, %v717
    %v720 = vmul.f32 %v713, %v629
    %v721 = vadd.f32 %v719, %v720
    %s722 = scalar_lea.vmem [#allocation3], 48
    %v723 = vld [vmem:[%s722] sm:$0xff]
    %v724 = vld [vmem:[%s722 + $0x8] sm:$0xff]
    %v725 = vld [vmem:[%s722 + $0x10] sm:$0xff]
    %v726 = vpack.c.bf16 %v721, %v721
    %727 = vmatpush.bf16.msra.mxu0 %v516
    %728 = vmatpush.bf16.msra.mxu0 %v513
    %729 = vmatpush.bf16.msra.mxu0 %v510
    %730 = vmatpush.bf16.msra.mxu0 %v507
    %731 = vmatpush.bf16.msra.mxu0 %v504
    %732 = vmatpush.bf16.msra.mxu0 %v501
    %733 = vmatpush.bf16.msra.mxu0 %v498
    %734 = vmatpush.bf16.msra.mxu0 %v495
    %735 = vmatmul.bf16.gmra.mxu0 %v726
    %v736 = vpop.f32.mrf.mxu0
    %v737 = vadd.f32 0.0, %v736
    %v738 = vpop.f32.mrf.mxu0
    %739 = vdwg.mxu0
    %740 = vmatpush.bf16.msra.mxu0 %v517
    %741 = vmatpush.bf16.msra.mxu0 %v514
    %742 = vmatpush.bf16.msra.mxu0 %v511
    %743 = vmatpush.bf16.msra.mxu0 %v508
    %744 = vmatpush.bf16.msra.mxu0 %v505
    %745 = vmatpush.bf16.msra.mxu0 %v502
    %746 = vmatpush.bf16.msra.mxu0 %v499
    %747 = vmatpush.bf16.msra.mxu0 %v496
    %748 = vmatmul.bf16.gmra.mxu0 %v726
    %v749 = vpop.f32.mrf.mxu0
    %v750 = vadd.f32 0.0, %v749
    %v751 = vpop.f32.mrf.mxu0
    %752 = vdwg.mxu0
    %753 = vmatpush.bf16.msra.mxu0 %v518
    %754 = vmatpush.bf16.msra.mxu0 %v515
    %755 = vmatpush.bf16.msra.mxu0 %v512
    %756 = vmatpush.bf16.msra.mxu0 %v509
    %757 = vmatpush.bf16.msra.mxu0 %v506
    %758 = vmatpush.bf16.msra.mxu0 %v503
    %759 = vmatpush.bf16.msra.mxu0 %v500
    %760 = vmatpush.bf16.msra.mxu0 %v497
    %761 = vmatmul.bf16.gmra.mxu0 %v726
    %v762 = vpop.f32.mrf.mxu0
    %v763 = vadd.f32 0.0, %v762
    %v764 = vpop.f32.mrf.mxu0
    %765 = vdwg.mxu0
    %v766 = vadd.f32 %v723, %v737
    %v767 = vxor.u32 %v766, 2147483648
    %v768 = vmul.f32 %v767, 1.442695
    %v769 = vpow.pop %v768
    %v770 = vadd.f32 %v769, 1.0
    %v771 = vrcp.pop %v770
    %v772 = vmul.f32 %v770, %v771
    %v773 = vsub.f32 1.0, %v772
    %v774 = vmul.f32 %v771, %v773
    %v775 = vadd.f32 %v771, %v774
    %vm776 = vweird.f32 %v770
    %vm777 = vweird.f32 %v771
    %vm778 = vmor %vm776, %vm777
    %v779 = vsel %vm778, %v771, %v775
    %v780 = vand.u32 2147483647, %v770
    %vm781 = vcmp.eq.f32.partialorder %v780, 8.507059e+37
    %v782 = vand.u32 %v770, 2147483648
    %v783 = vor.u32 1.1754944e-38, %v782
    %v784 = vsel %vm781, %v783, %v779
    %v785 = vmul.f32 1.0, %v784
    %v786 = vadd.f32 %v724, %v750
    %v787 = vxor.u32 %v786, 2147483648
    %v788 = vmul.f32 %v787, 1.442695
    %v789 = vpow.pop %v788
    %v790 = vadd.f32 %v789, 1.0
    %v791 = vrcp.pop %v790
    %v792 = vmul.f32 %v790, %v791
    %v793 = vsub.f32 1.0, %v792
    %v794 = vmul.f32 %v791, %v793
    %v795 = vadd.f32 %v791, %v794
    %vm796 = vweird.f32 %v790
    %vm797 = vweird.f32 %v791
    %vm798 = vmor %vm796, %vm797
    %v799 = vsel %vm798, %v791, %v795
    %v800 = vand.u32 2147483647, %v790
    %vm801 = vcmp.eq.f32.partialorder %v800, 8.507059e+37
    %v802 = vand.u32 %v790, 2147483648
    %v803 = vor.u32 1.1754944e-38, %v802
    %v804 = vsel %vm801, %v803, %v799
    %v805 = vmul.f32 1.0, %v804
    %v806 = vadd.f32 %v763, %v408
    %v807 = vmul.f32 %v785, %v806
    %v808 = vadd.f32 %v725, %v807
    %v809 = vtanh.pop %v808
    %v810 = vsub.f32 1.0, %v805
    %v811 = vmul.f32 %v810, %v809
    %v812 = vmul.f32 %v805, %v721
    %v813 = vadd.f32 %v811, %v812
    %s814 = scalar_lea.vmem [#allocation3], 72
    %v815 = vld [vmem:[%s814] sm:$0xff]
    %v816 = vld [vmem:[%s814 + $0x8] sm:$0xff]
    %v817 = vld [vmem:[%s814 + $0x10] sm:$0xff]
    %v818 = vpack.c.bf16 %v813, %v813
    %819 = vmatpush.bf16.msra.mxu0 %v516
    %820 = vmatpush.bf16.msra.mxu0 %v513
    %821 = vmatpush.bf16.msra.mxu0 %v510
    %822 = vmatpush.bf16.msra.mxu0 %v507
    %823 = vmatpush.bf16.msra.mxu0 %v504
    %824 = vmatpush.bf16.msra.mxu0 %v501
    %825 = vmatpush.bf16.msra.mxu0 %v498
    %826 = vmatpush.bf16.msra.mxu0 %v495
    %827 = vmatmul.bf16.gmra.mxu0 %v818
    %v828 = vpop.f32.mrf.mxu0
    %v829 = vadd.f32 0.0, %v828
    %v830 = vpop.f32.mrf.mxu0
    %831 = vdwg.mxu0
    %832 = vmatpush.bf16.msra.mxu0 %v517
    %833 = vmatpush.bf16.msra.mxu0 %v514
    %834 = vmatpush.bf16.msra.mxu0 %v511
    %835 = vmatpush.bf16.msra.mxu0 %v508
    %836 = vmatpush.bf16.msra.mxu0 %v505
    %837 = vmatpush.bf16.msra.mxu0 %v502
    %838 = vmatpush.bf16.msra.mxu0 %v499
    %839 = vmatpush.bf16.msra.mxu0 %v496
    %840 = vmatmul.bf16.gmra.mxu0 %v818
    %v841 = vpop.f32.mrf.mxu0
    %v842 = vadd.f32 0.0, %v841
    %v843 = vpop.f32.mrf.mxu0
    %844 = vdwg.mxu0
    %845 = vmatpush.bf16.msra.mxu0 %v518
    %846 = vmatpush.bf16.msra.mxu0 %v515
    %847 = vmatpush.bf16.msra.mxu0 %v512
    %848 = vmatpush.bf16.msra.mxu0 %v509
    %849 = vmatpush.bf16.msra.mxu0 %v506
    %850 = vmatpush.bf16.msra.mxu0 %v503
    %851 = vmatpush.bf16.msra.mxu0 %v500
    %852 = vmatpush.bf16.msra.mxu0 %v497
    %853 = vmatmul.bf16.gmra.mxu0 %v818
    %v854 = vpop.f32.mrf.mxu0
    %v855 = vadd.f32 0.0, %v854
    %v856 = vpop.f32.mrf.mxu0
    %857 = vdwg.mxu0
    %v858 = vadd.f32 %v815, %v829
    %v859 = vxor.u32 %v858, 2147483648
    %v860 = vmul.f32 %v859, 1.442695
    %v861 = vpow.pop %v860
    %v862 = vadd.f32 %v861, 1.0
    %v863 = vrcp.pop %v862
    %v864 = vmul.f32 %v862, %v863
    %v865 = vsub.f32 1.0, %v864
    %v866 = vmul.f32 %v863, %v865
    %v867 = vadd.f32 %v863, %v866
    %vm868 = vweird.f32 %v862
    %vm869 = vweird.f32 %v863
    %vm870 = vmor %vm868, %vm869
    %v871 = vsel %vm870, %v863, %v867
    %v872 = vand.u32 2147483647, %v862
    %vm873 = vcmp.eq.f32.partialorder %v872, 8.507059e+37
    %v874 = vand.u32 %v862, 2147483648
    %v875 = vor.u32 1.1754944e-38, %v874
    %v876 = vsel %vm873, %v875, %v871
    %v877 = vmul.f32 1.0, %v876
    %v878 = vadd.f32 %v816, %v842
    %v879 = vxor.u32 %v878, 2147483648
    %v880 = vmul.f32 %v879, 1.442695
    %v881 = vpow.pop %v880
    %v882 = vadd.f32 %v881, 1.0
    %v883 = vrcp.pop %v882
    %v884 = vmul.f32 %v882, %v883
    %v885 = vsub.f32 1.0, %v884
    %v886 = vmul.f32 %v883, %v885
    %v887 = vadd.f32 %v883, %v886
    %vm888 = vweird.f32 %v882
    %vm889 = vweird.f32 %v883
    %vm890 = vmor %vm888, %vm889
    %v891 = vsel %vm890, %v883, %v887
    %v892 = vand.u32 2147483647, %v882
    %vm893 = vcmp.eq.f32.partialorder %v892, 8.507059e+37
    %v894 = vand.u32 %v882, 2147483648
    %v895 = vor.u32 1.1754944e-38, %v894
    %v896 = vsel %vm893, %v895, %v891
    %v897 = vmul.f32 1.0, %v896
    %v898 = vadd.f32 %v855, %v408
    %v899 = vmul.f32 %v877, %v898
    %v900 = vadd.f32 %v817, %v899
    %v901 = vtanh.pop %v900
    %v902 = vsub.f32 1.0, %v897
    %v903 = vmul.f32 %v902, %v901
    %v904 = vmul.f32 %v897, %v813
    %v905 = vadd.f32 %v903, %v904
    %s906 = scalar_lea.vmem [#allocation3], 96
    %v907 = vld [vmem:[%s906] sm:$0xff]
    %v908 = vld [vmem:[%s906 + $0x8] sm:$0xff]
    %v909 = vld [vmem:[%s906 + $0x10] sm:$0xff]
    %v910 = vpack.c.bf16 %v905, %v905
    %911 = vmatpush.bf16.msra.mxu0 %v516
    %912 = vmatpush.bf16.msra.mxu0 %v513
    %913 = vmatpush.bf16.msra.mxu0 %v510
    %914 = vmatpush.bf16.msra.mxu0 %v507
    %915 = vmatpush.bf16.msra.mxu0 %v504
    %916 = vmatpush.bf16.msra.mxu0 %v501
    %917 = vmatpush.bf16.msra.mxu0 %v498
    %918 = vmatpush.bf16.msra.mxu0 %v495
    %919 = vmatmul.bf16.gmra.mxu0 %v910
    %v920 = vpop.f32.mrf.mxu0
    %v921 = vadd.f32 0.0, %v920
    %v922 = vpop.f32.mrf.mxu0
    %923 = vdwg.mxu0
    %924 = vmatpush.bf16.msra.mxu0 %v517
    %925 = vmatpush.bf16.msra.mxu0 %v514
    %926 = vmatpush.bf16.msra.mxu0 %v511
    %927 = vmatpush.bf16.msra.mxu0 %v508
    %928 = vmatpush.bf16.msra.mxu0 %v505
    %929 = vmatpush.bf16.msra.mxu0 %v502
    %930 = vmatpush.bf16.msra.mxu0 %v499
    %931 = vmatpush.bf16.msra.mxu0 %v496
    %932 = vmatmul.bf16.gmra.mxu0 %v910
    %v933 = vpop.f32.mrf.mxu0
    %v934 = vadd.f32 0.0, %v933
    %v935 = vpop.f32.mrf.mxu0
    %936 = vdwg.mxu0
    %937 = vmatpush.bf16.msra.mxu0 %v518
    %938 = vmatpush.bf16.msra.mxu0 %v515
    %939 = vmatpush.bf16.msra.mxu0 %v512
    %940 = vmatpush.bf16.msra.mxu0 %v509
    %941 = vmatpush.bf16.msra.mxu0 %v506
    %942 = vmatpush.bf16.msra.mxu0 %v503
    %943 = vmatpush.bf16.msra.mxu0 %v500
    %944 = vmatpush.bf16.msra.mxu0 %v497
    %945 = vmatmul.bf16.gmra.mxu0 %v910
    %v946 = vpop.f32.mrf.mxu0
    %v947 = vadd.f32 0.0, %v946
    %v948 = vpop.f32.mrf.mxu0
    %949 = vdwg.mxu0
    %v950 = vadd.f32 %v907, %v921
    %v951 = vxor.u32 %v950, 2147483648
    %v952 = vmul.f32 %v951, 1.442695
    %v953 = vpow.pop %v952
    %v954 = vadd.f32 %v953, 1.0
    %v955 = vrcp.pop %v954
    %v956 = vmul.f32 %v954, %v955
    %v957 = vsub.f32 1.0, %v956
    %v958 = vmul.f32 %v955, %v957
    %v959 = vadd.f32 %v955, %v958
    %vm960 = vweird.f32 %v954
    %vm961 = vweird.f32 %v955
    %vm962 = vmor %vm960, %vm961
    %v963 = vsel %vm962, %v955, %v959
    %v964 = vand.u32 2147483647, %v954
    %vm965 = vcmp.eq.f32.partialorder %v964, 8.507059e+37
    %v966 = vand.u32 %v954, 2147483648
    %v967 = vor.u32 1.1754944e-38, %v966
    %v968 = vsel %vm965, %v967, %v963
    %v969 = vmul.f32 1.0, %v968
    %v970 = vadd.f32 %v908, %v934
    %v971 = vxor.u32 %v970, 2147483648
    %v972 = vmul.f32 %v971, 1.442695
    %v973 = vpow.pop %v972
    %v974 = vadd.f32 %v973, 1.0
    %v975 = vrcp.pop %v974
    %v976 = vmul.f32 %v974, %v975
    %v977 = vsub.f32 1.0, %v976
    %v978 = vmul.f32 %v975, %v977
    %v979 = vadd.f32 %v975, %v978
    %vm980 = vweird.f32 %v974
    %vm981 = vweird.f32 %v975
    %vm982 = vmor %vm980, %vm981
    %v983 = vsel %vm982, %v975, %v979
    %v984 = vand.u32 2147483647, %v974
    %vm985 = vcmp.eq.f32.partialorder %v984, 8.507059e+37
    %v986 = vand.u32 %v974, 2147483648
    %v987 = vor.u32 1.1754944e-38, %v986
    %v988 = vsel %vm985, %v987, %v983
    %v989 = vmul.f32 1.0, %v988
    %v990 = vadd.f32 %v947, %v408
    %v991 = vmul.f32 %v969, %v990
    %v992 = vadd.f32 %v909, %v991
    %v993 = vtanh.pop %v992
    %v994 = vsub.f32 1.0, %v989
    %v995 = vmul.f32 %v994, %v993
    %v996 = vmul.f32 %v989, %v905
    %v997 = vadd.f32 %v995, %v996
    %s998 = scalar_lea.vmem [#allocation3], 120
    %v999 = vld [vmem:[%s998] sm:$0xff]
    %v1000 = vld [vmem:[%s998 + $0x8] sm:$0xff]
    %v1001 = vld [vmem:[%s998 + $0x10] sm:$0xff]
    %v1002 = vpack.c.bf16 %v997, %v997
    %1003 = vmatpush.bf16.msra.mxu0 %v516
    %1004 = vmatpush.bf16.msra.mxu0 %v513
    %1005 = vmatpush.bf16.msra.mxu0 %v510
    %1006 = vmatpush.bf16.msra.mxu0 %v507
    %1007 = vmatpush.bf16.msra.mxu0 %v504
    %1008 = vmatpush.bf16.msra.mxu0 %v501
    %1009 = vmatpush.bf16.msra.mxu0 %v498
    %1010 = vmatpush.bf16.msra.mxu0 %v495
    %1011 = vmatmul.bf16.gmra.mxu0 %v1002
    %v1012 = vpop.f32.mrf.mxu0
    %v1013 = vadd.f32 0.0, %v1012
    %v1014 = vpop.f32.mrf.mxu0
    %1015 = vdwg.mxu0
    %1016 = vmatpush.bf16.msra.mxu0 %v517
    %1017 = vmatpush.bf16.msra.mxu0 %v514
    %1018 = vmatpush.bf16.msra.mxu0 %v511
    %1019 = vmatpush.bf16.msra.mxu0 %v508
    %1020 = vmatpush.bf16.msra.mxu0 %v505
    %1021 = vmatpush.bf16.msra.mxu0 %v502
    %1022 = vmatpush.bf16.msra.mxu0 %v499
    %1023 = vmatpush.bf16.msra.mxu0 %v496
    %1024 = vmatmul.bf16.gmra.mxu0 %v1002
    %v1025 = vpop.f32.mrf.mxu0
    %v1026 = vadd.f32 0.0, %v1025
    %v1027 = vpop.f32.mrf.mxu0
    %1028 = vdwg.mxu0
    %1029 = vmatpush.bf16.msra.mxu0 %v518
    %1030 = vmatpush.bf16.msra.mxu0 %v515
    %1031 = vmatpush.bf16.msra.mxu0 %v512
    %1032 = vmatpush.bf16.msra.mxu0 %v509
    %1033 = vmatpush.bf16.msra.mxu0 %v506
    %1034 = vmatpush.bf16.msra.mxu0 %v503
    %1035 = vmatpush.bf16.msra.mxu0 %v500
    %1036 = vmatpush.bf16.msra.mxu0 %v497
    %1037 = vmatmul.bf16.gmra.mxu0 %v1002
    %v1038 = vpop.f32.mrf.mxu0
    %v1039 = vadd.f32 0.0, %v1038
    %v1040 = vpop.f32.mrf.mxu0
    %1041 = vdwg.mxu0
    %v1042 = vadd.f32 %v999, %v1013
    %v1043 = vxor.u32 %v1042, 2147483648
    %v1044 = vmul.f32 %v1043, 1.442695
    %v1045 = vpow.pop %v1044
    %v1046 = vadd.f32 %v1045, 1.0
    %v1047 = vrcp.pop %v1046
    %v1048 = vmul.f32 %v1046, %v1047
    %v1049 = vsub.f32 1.0, %v1048
    %v1050 = vmul.f32 %v1047, %v1049
    %v1051 = vadd.f32 %v1047, %v1050
    %vm1052 = vweird.f32 %v1046
    %vm1053 = vweird.f32 %v1047
    %vm1054 = vmor %vm1052, %vm1053
    %v1055 = vsel %vm1054, %v1047, %v1051
    %v1056 = vand.u32 2147483647, %v1046
    %vm1057 = vcmp.eq.f32.partialorder %v1056, 8.507059e+37
    %v1058 = vand.u32 %v1046, 2147483648
    %v1059 = vor.u32 1.1754944e-38, %v1058
    %v1060 = vsel %vm1057, %v1059, %v1055
    %v1061 = vmul.f32 1.0, %v1060
    %v1062 = vadd.f32 %v1000, %v1026
    %v1063 = vxor.u32 %v1062, 2147483648
    %v1064 = vmul.f32 %v1063, 1.442695
    %v1065 = vpow.pop %v1064
    %v1066 = vadd.f32 %v1065, 1.0
    %v1067 = vrcp.pop %v1066
    %v1068 = vmul.f32 %v1066, %v1067
    %v1069 = vsub.f32 1.0, %v1068
    %v1070 = vmul.f32 %v1067, %v1069
    %v1071 = vadd.f32 %v1067, %v1070
    %vm1072 = vweird.f32 %v1066
    %vm1073 = vweird.f32 %v1067
    %vm1074 = vmor %vm1072, %vm1073
    %v1075 = vsel %vm1074, %v1067, %v1071
    %v1076 = vand.u32 2147483647, %v1066
    %vm1077 = vcmp.eq.f32.partialorder %v1076, 8.507059e+37
    %v1078 = vand.u32 %v1066, 2147483648
    %v1079 = vor.u32 1.1754944e-38, %v1078
    %v1080 = vsel %vm1077, %v1079, %v1075
    %v1081 = vmul.f32 1.0, %v1080
    %v1082 = vadd.f32 %v1039, %v408
    %v1083 = vmul.f32 %v1061, %v1082
    %v1084 = vadd.f32 %v1001, %v1083
    %v1085 = vtanh.pop %v1084
    %v1086 = vsub.f32 1.0, %v1081
    %v1087 = vmul.f32 %v1086, %v1085
    %v1088 = vmul.f32 %v1081, %v997
    %v1089 = vadd.f32 %v1087, %v1088
    %s1090 = scalar_lea.vmem [#allocation3], 144
    %v1091 = vld [vmem:[%s1090] sm:$0xff]
    %v1092 = vld [vmem:[%s1090 + $0x8] sm:$0xff]
    %v1093 = vld [vmem:[%s1090 + $0x10] sm:$0xff]
    %v1094 = vpack.c.bf16 %v1089, %v1089
    %1095 = vmatpush.bf16.msra.mxu0 %v516
    %1096 = vmatpush.bf16.msra.mxu0 %v513
    %1097 = vmatpush.bf16.msra.mxu0 %v510
    %1098 = vmatpush.bf16.msra.mxu0 %v507
    %1099 = vmatpush.bf16.msra.mxu0 %v504
    %1100 = vmatpush.bf16.msra.mxu0 %v501
    %1101 = vmatpush.bf16.msra.mxu0 %v498
    %1102 = vmatpush.bf16.msra.mxu0 %v495
    %1103 = vmatmul.bf16.gmra.mxu0 %v1094
    %v1104 = vpop.f32.mrf.mxu0
    %v1105 = vadd.f32 0.0, %v1104
    %v1106 = vpop.f32.mrf.mxu0
    %1107 = vdwg.mxu0
    %1108 = vmatpush.bf16.msra.mxu0 %v517
    %1109 = vmatpush.bf16.msra.mxu0 %v514
    %1110 = vmatpush.bf16.msra.mxu0 %v511
    %1111 = vmatpush.bf16.msra.mxu0 %v508
    %1112 = vmatpush.bf16.msra.mxu0 %v505
    %1113 = vmatpush.bf16.msra.mxu0 %v502
    %1114 = vmatpush.bf16.msra.mxu0 %v499
    %1115 = vmatpush.bf16.msra.mxu0 %v496
    %1116 = vmatmul.bf16.gmra.mxu0 %v1094
    %v1117 = vpop.f32.mrf.mxu0
    %v1118 = vadd.f32 0.0, %v1117
    %v1119 = vpop.f32.mrf.mxu0
    %1120 = vdwg.mxu0
    %1121 = vmatpush.bf16.msra.mxu0 %v518
    %1122 = vmatpush.bf16.msra.mxu0 %v515
    %1123 = vmatpush.bf16.msra.mxu0 %v512
    %1124 = vmatpush.bf16.msra.mxu0 %v509
    %1125 = vmatpush.bf16.msra.mxu0 %v506
    %1126 = vmatpush.bf16.msra.mxu0 %v503
    %1127 = vmatpush.bf16.msra.mxu0 %v500
    %1128 = vmatpush.bf16.msra.mxu0 %v497
    %1129 = vmatmul.bf16.gmra.mxu0 %v1094
    %v1130 = vpop.f32.mrf.mxu0
    %v1131 = vadd.f32 0.0, %v1130
    %v1132 = vpop.f32.mrf.mxu0
    %1133 = vdwg.mxu0
    %v1134 = vadd.f32 %v1091, %v1105
    %v1135 = vxor.u32 %v1134, 2147483648
    %v1136 = vmul.f32 %v1135, 1.442695
    %v1137 = vpow.pop %v1136
    %v1138 = vadd.f32 %v1137, 1.0
    %v1139 = vrcp.pop %v1138
    %v1140 = vmul.f32 %v1138, %v1139
    %v1141 = vsub.f32 1.0, %v1140
    %v1142 = vmul.f32 %v1139, %v1141
    %v1143 = vadd.f32 %v1139, %v1142
    %vm1144 = vweird.f32 %v1138
    %vm1145 = vweird.f32 %v1139
    %vm1146 = vmor %vm1144, %vm1145
    %v1147 = vsel %vm1146, %v1139, %v1143
    %v1148 = vand.u32 2147483647, %v1138
    %vm1149 = vcmp.eq.f32.partialorder %v1148, 8.507059e+37
    %v1150 = vand.u32 %v1138, 2147483648
    %v1151 = vor.u32 1.1754944e-38, %v1150
    %v1152 = vsel %vm1149, %v1151, %v1147
    %v1153 = vmul.f32 1.0, %v1152
    %v1154 = vadd.f32 %v1092, %v1118
    %v1155 = vxor.u32 %v1154, 2147483648
    %v1156 = vmul.f32 %v1155, 1.442695
    %v1157 = vpow.pop %v1156
    %v1158 = vadd.f32 %v1157, 1.0
    %v1159 = vrcp.pop %v1158
    %v1160 = vmul.f32 %v1158, %v1159
    %v1161 = vsub.f32 1.0, %v1160
    %v1162 = vmul.f32 %v1159, %v1161
    %v1163 = vadd.f32 %v1159, %v1162
    %vm1164 = vweird.f32 %v1158
    %vm1165 = vweird.f32 %v1159
    %vm1166 = vmor %vm1164, %vm1165
    %v1167 = vsel %vm1166, %v1159, %v1163
    %v1168 = vand.u32 2147483647, %v1158
    %vm1169 = vcmp.eq.f32.partialorder %v1168, 8.507059e+37
    %v1170 = vand.u32 %v1158, 2147483648
    %v1171 = vor.u32 1.1754944e-38, %v1170
    %v1172 = vsel %vm1169, %v1171, %v1167
    %v1173 = vmul.f32 1.0, %v1172
    %v1174 = vadd.f32 %v1131, %v408
    %v1175 = vmul.f32 %v1153, %v1174
    %v1176 = vadd.f32 %v1093, %v1175
    %v1177 = vtanh.pop %v1176
    %v1178 = vsub.f32 1.0, %v1173
    %v1179 = vmul.f32 %v1178, %v1177
    %v1180 = vmul.f32 %v1173, %v1089
    %v1181 = vadd.f32 %v1179, %v1180
    %s1182 = scalar_lea.vmem [#allocation3], 168
    %v1183 = vld [vmem:[%s1182] sm:$0xff]
    %v1184 = vld [vmem:[%s1182 + $0x8] sm:$0xff]
    %v1185 = vld [vmem:[%s1182 + $0x10] sm:$0xff]
    %v1186 = vpack.c.bf16 %v1181, %v1181
    %1187 = vmatpush.bf16.msra.mxu0 %v516
    %1188 = vmatpush.bf16.msra.mxu0 %v513
    %1189 = vmatpush.bf16.msra.mxu0 %v510
    %1190 = vmatpush.bf16.msra.mxu0 %v507
    %1191 = vmatpush.bf16.msra.mxu0 %v504
    %1192 = vmatpush.bf16.msra.mxu0 %v501
    %1193 = vmatpush.bf16.msra.mxu0 %v498
    %1194 = vmatpush.bf16.msra.mxu0 %v495
    %1195 = vmatmul.bf16.gmra.mxu0 %v1186
    %v1196 = vpop.f32.mrf.mxu0
    %v1197 = vadd.f32 0.0, %v1196
    %v1198 = vpop.f32.mrf.mxu0
    %1199 = vdwg.mxu0
    %1200 = vmatpush.bf16.msra.mxu0 %v517
    %1201 = vmatpush.bf16.msra.mxu0 %v514
    %1202 = vmatpush.bf16.msra.mxu0 %v511
    %1203 = vmatpush.bf16.msra.mxu0 %v508
    %1204 = vmatpush.bf16.msra.mxu0 %v505
    %1205 = vmatpush.bf16.msra.mxu0 %v502
    %1206 = vmatpush.bf16.msra.mxu0 %v499
    %1207 = vmatpush.bf16.msra.mxu0 %v496
    %1208 = vmatmul.bf16.gmra.mxu0 %v1186
    %v1209 = vpop.f32.mrf.mxu0
    %v1210 = vadd.f32 0.0, %v1209
    %v1211 = vpop.f32.mrf.mxu0
    %1212 = vdwg.mxu0
    %1213 = vmatpush.bf16.msra.mxu0 %v518
    %1214 = vmatpush.bf16.msra.mxu0 %v515
    %1215 = vmatpush.bf16.msra.mxu0 %v512
    %1216 = vmatpush.bf16.msra.mxu0 %v509
    %1217 = vmatpush.bf16.msra.mxu0 %v506
    %1218 = vmatpush.bf16.msra.mxu0 %v503
    %1219 = vmatpush.bf16.msra.mxu0 %v500
    %1220 = vmatpush.bf16.msra.mxu0 %v497
    %1221 = vmatmul.bf16.gmra.mxu0 %v1186
    %v1222 = vpop.f32.mrf.mxu0
    %v1223 = vadd.f32 0.0, %v1222
    %v1224 = vpop.f32.mrf.mxu0
    %1225 = vdwg.mxu0
    %v1226 = vadd.f32 %v1183, %v1197
    %v1227 = vxor.u32 %v1226, 2147483648
    %v1228 = vmul.f32 %v1227, 1.442695
    %v1229 = vpow.pop %v1228
    %v1230 = vadd.f32 %v1229, 1.0
    %v1231 = vrcp.pop %v1230
    %v1232 = vmul.f32 %v1230, %v1231
    %v1233 = vsub.f32 1.0, %v1232
    %v1234 = vmul.f32 %v1231, %v1233
    %v1235 = vadd.f32 %v1231, %v1234
    %vm1236 = vweird.f32 %v1230
    %vm1237 = vweird.f32 %v1231
    %vm1238 = vmor %vm1236, %vm1237
    %v1239 = vsel %vm1238, %v1231, %v1235
    %v1240 = vand.u32 2147483647, %v1230
    %vm1241 = vcmp.eq.f32.partialorder %v1240, 8.507059e+37
    %v1242 = vand.u32 %v1230, 2147483648
    %v1243 = vor.u32 1.1754944e-38, %v1242
    %v1244 = vsel %vm1241, %v1243, %v1239
    %v1245 = vmul.f32 1.0, %v1244
    %v1246 = vadd.f32 %v1184, %v1210
    %v1247 = vxor.u32 %v1246, 2147483648
    %v1248 = vmul.f32 %v1247, 1.442695
    %v1249 = vpow.pop %v1248
    %v1250 = vadd.f32 %v1249, 1.0
    %v1251 = vrcp.pop %v1250
    %v1252 = vmul.f32 %v1250, %v1251
    %v1253 = vsub.f32 1.0, %v1252
    %v1254 = vmul.f32 %v1251, %v1253
    %v1255 = vadd.f32 %v1251, %v1254
    %vm1256 = vweird.f32 %v1250
    %vm1257 = vweird.f32 %v1251
    %vm1258 = vmor %vm1256, %vm1257
    %v1259 = vsel %vm1258, %v1251, %v1255
    %v1260 = vand.u32 2147483647, %v1250
    %vm1261 = vcmp.eq.f32.partialorder %v1260, 8.507059e+37
    %v1262 = vand.u32 %v1250, 2147483648
    %v1263 = vor.u32 1.1754944e-38, %v1262
    %v1264 = vsel %vm1261, %v1263, %v1259
    %v1265 = vmul.f32 1.0, %v1264
    %v1266 = vadd.f32 %v1223, %v408
    %v1267 = vmul.f32 %v1245, %v1266
    %v1268 = vadd.f32 %v1185, %v1267
    %v1269 = vtanh.pop %v1268
    %v1270 = vsub.f32 1.0, %v1265
    %v1271 = vmul.f32 %v1270, %v1269
    %v1272 = vmul.f32 %v1265, %v1181
    %v1273 = vadd.f32 %v1271, %v1272
    %1274 = vst [vmem:[#allocation2] sm:$0xff] %v1273
    // Predicated region
    $region42: #{gru_model_forward.3} parent=1 // pred_check
      %p1275 = pneg %p58
    $region43: #{gru_model_forward.3} parent=1 // pred_check_branch
      %1277 = sbr.rel (%p1275) target = $region45
    $region44: #{gru_model_forward.3} parent=1 // pred_region
      %v1278 = vld [vmem:[#allocation2] sm:$0xff]
      %v1279 = vpack.c.bf16 %v1278, %v1278
      %v1280 = vld [vmem:[%s5] sm:$0xf]
      %v1281 = vld [vmem:[%s5 + $0x4] sm:$0xf]
      %v1282 = vld [vmem:[%s5 + $0x8] sm:$0xf]
      %v1283 = vld [vmem:[%s5 + $0xc] sm:$0xf]
      %v1284 = vld [vmem:[%s5 + $0x10] sm:$0xf]
      %v1285 = vld [vmem:[%s5 + $0x14] sm:$0xf]
      %v1286 = vld [vmem:[%s5 + $0x18] sm:$0xf]
      %v1287 = vld [vmem:[%s5 + $0x1c] sm:$0xf]
      %v1288 = vld [vmem:[%s5 + $0x20] sm:$0xf]
      %v1289 = vld [vmem:[%s5 + $0x24] sm:$0xf]
      %v1290 = vld [vmem:[%s5 + $0x28] sm:$0xf]
      %v1291 = vld [vmem:[%s5 + $0x2c] sm:$0xf]
      %v1292 = vld [vmem:[%s5 + $0x30] sm:$0xf]
      %v1293 = vld [vmem:[%s5 + $0x34] sm:$0xf]
      %v1294 = vld [vmem:[%s5 + $0x38] sm:$0xf]
      %v1295 = vld [vmem:[%s5 + $0x3c] sm:$0xf]
      %v1296 = vld [vmem:[%s6] sm:$0x1]
      %v1298 = vperm.slane %v1296, 0
      %v1316 = vunpack.c.l.b16 %v1280
      %v1317 = vunpack.c.l.b16 %v1281
      %v1318 = vunpack.c.l.b16 %v1282
      %v1319 = vunpack.c.l.b16 %v1283
      %v1320 = vunpack.c.l.b16 %v1284
      %v1321 = vunpack.c.l.b16 %v1285
      %v1322 = vunpack.c.l.b16 %v1286
      %v1323 = vunpack.c.l.b16 %v1287
      %v1324 = vunpack.c.l.b16 %v1288
      %v1325 = vunpack.c.l.b16 %v1289
      %v1326 = vunpack.c.l.b16 %v1290
      %v1327 = vunpack.c.l.b16 %v1291
      %v1328 = vunpack.c.l.b16 %v1292
      %v1329 = vunpack.c.l.b16 %v1293
      %v1330 = vunpack.c.l.b16 %v1294
      %v1331 = vunpack.c.l.b16 %v1295
      %v1332 = vpack.c.b16 %v1317, %v1316
      %v1333 = vpack.c.b16 %v1319, %v1318
      %v1334 = vpack.c.b16 %v1321, %v1320
      %v1335 = vpack.c.b16 %v1323, %v1322
      %v1336 = vpack.c.b16 %v1325, %v1324
      %v1337 = vpack.c.b16 %v1327, %v1326
      %v1338 = vpack.c.b16 %v1329, %v1328
      %v1339 = vpack.c.b16 %v1331, %v1330
      %1348 = vmatpush.bf16.msra.mxu0 %v1339
      %1349 = vmatpush.bf16.msra.mxu0 %v1338
      %1350 = vmatpush.bf16.msra.mxu0 %v1337
      %1351 = vmatpush.bf16.msra.mxu0 %v1336
      %1352 = vmatpush.bf16.msra.mxu0 %v1335
      %1353 = vmatpush.bf16.msra.mxu0 %v1334
      %1354 = vmatpush.bf16.msra.mxu0 %v1333
      %1355 = vmatpush.bf16.msra.mxu0 %v1332
      %1356 = vmatmul.bf16.gmra.mxu0 %v1279
      %v1357 = vpop.f32.mrf.mxu0
      %v1358 = vadd.f32 %v1298, %v1357
      %v1359 = vpop.f32.mrf.mxu0
      %1360 = vdwg.mxu0
      %1361 = vst [vmem:[%s7] sm:$0xff] %v1358
    $region45: #{gru_model_forward.3} parent=1 // pred_fallthru
      _
    // Predicated region
    $region46: #{gru_model_forward.3} parent=1 // pred_check
      _
    $region47: #{gru_model_forward.3} parent=1 // pred_check_branch
      %1363 = sbr.rel (0) target = $region49
    $region48: #{gru_model_forward.3} parent=1 // pred_region
      _
    $region49: #{gru_model_forward.3} parent=1 // pred_fallthru
      _
    // Predicated region
    $region50: #{gru_model_forward.3} parent=1 // pred_check
      _
    $region51: #{gru_model_forward.3} parent=1 // pred_check_branch
      %1365 = sbr.rel (0) target = $region53
    $region52: #{gru_model_forward.3} parent=1 // pred_region
      _
    $region53: #{gru_model_forward.3} parent=1 // pred_fallthru
      _
    %1366 = vsyncpa [#allocation5], 1
    %1367 = vsyncpa [#allocation7], 1

</llo_original>
